<compile_context>
chip_gen: v7x
topology: tpu7x:2x2x1
jax: 0.10.0
libtpu: 0.0.40
codegen_flags: <defaults>
</compile_context>

<pallas_src>
import functools

import jax
import jax.numpy as jnp
from jax import lax
from jax.experimental import pallas as pl
from jax.experimental.pallas import tpu as pltpu


# --------------------------------------------------------------------------
# Fused kernel: per-pixel kernel prediction (3x3 conv) + per-pixel filtering.
# --------------------------------------------------------------------------
def _pixelconv_kernel(ks_pred, pad_pred, ks_dyn, pad_dyn, Ht, n_row_tiles,
                      xf_ref, xi_ref, wk_ref, bk_ref, o_ref):
    # xf_ref: (Cin,  H + 2*pad_pred, W + 2*pad_pred)  padded feature map (one batch)
    # xi_ref: (Cout, H + 2*pad_dyn,  W + 2*pad_dyn)   padded image to filter (one batch)
    # wk_ref: (OUTK, ks_pred*ks_pred*Cin)             prediction-conv weight, cols = (ky, kx, c)
    # bk_ref: (OUTK, 1)                               prediction-conv bias
    # o_ref : (Cout, Ht*W)                            output row tile, spatial flattened on lanes
    Cin = xf_ref.shape[0]
    Cout = xi_ref.shape[0]
    W = xf_ref.shape[2] - 2 * pad_pred
    HW = Ht * W

    if n_row_tiles == 1:
        row0 = 0                                             # fully static path
    else:
        # Ht % 8 == 0 is guaranteed by the wrapper -> sublane-aligned dynamic start.
        row0 = pl.multiple_of(pl.program_id(1) * Ht, 8)

    # Halo'd row windows for this output row tile.  The padded inputs stay
    # resident per batch (their block index only depends on the batch axis),
    # so row tiles add no extra HBM traffic.
    xf_win = xf_ref[:, pl.ds(row0, Ht + 2 * pad_pred), :]    # (Cin,  Ht+2pp, W+2pp)
    xi_win = xi_ref[:, pl.ds(row0, Ht + 2 * pad_dyn), :]     # (Cout, Ht+2pd, W+2pd)

    # ---- stage 1: per-pixel kernel prediction (3x3 conv) as ONE MXU dot ----
    cols = [xf_win[:, ky:ky + Ht, kx:kx + W].reshape(Cin, HW)
            for ky in range(ks_pred) for kx in range(ks_pred)]
    xf_cols = jnp.concatenate(cols, axis=0)                  # (ks_pred^2*Cin, Ht*W)
    kset = jnp.dot(wk_ref[...], xf_cols,
                   preferred_element_type=jnp.float32) + bk_ref[...]   # (OUTK, Ht*W)

    # ---- stage 2: per-pixel dynamic filtering of the image -----------------
    # kernel_set channel layout (matches the PyTorch reshape): ch = n*Cout + o.
    acc = jnp.zeros((Cout, HW), jnp.float32)
    for n in range(ks_dyn * ks_dyn):
        ky, kx = n // ks_dyn, n % ks_dyn
        xpatch = xi_win[:, ky:ky + Ht, kx:kx + W].reshape(Cout, HW).astype(jnp.float32)
        acc = acc + xpatch * kset[n * Cout:(n + 1) * Cout, :]
    o_ref[...] = acc.astype(o_ref.dtype)


def _pick_row_tile(H, W, max_lanes=4096):
    """Row tile Ht with Ht | H, Ht % 8 == 0 and lane-dense (Ht*W) % 128 == 0."""
    cands = [ht for ht in range(8, H + 1, 8)
             if H % ht == 0 and (ht == H or (ht * W) % 128 == 0)]
    if not cands:
        return H
    small = [ht for ht in cands if ht * W <= max_lanes]
    return max(small) if small else min(cands)


# --------------------------------------------------------------------------
# Wrapper (pads, weight re-layout, pallas_call setup)
# --------------------------------------------------------------------------
def pixel_conv(x_feature, x, params, *, ksize=3, out_feats=None, row_tile=None,
               compute_dtype=jnp.float32):
    B, Cin, H, W = x_feature.shape
    wk = params["kernel_conv_w"]               # (out_feats*ksize**2, Cin, 3, 3)
    bk = params["kernel_conv_b"]               # (out_feats*ksize**2,)
    ks_pred, pad_pred = 3, 1                   # kernel_conv is a fixed 3x3 / padding=1 conv
    if out_feats is None:
        out_feats = wk.shape[0] // (ksize * ksize)
    OUTK = out_feats * ksize * ksize
    assert wk.shape == (OUTK, Cin, ks_pred, ks_pred), wk.shape
    pad_dyn = (ksize - 1) // 2

    assert x.shape[0] == B and x.shape[2] == H and x.shape[3] == W, x.shape
    if x.shape[1] == 1 and out_feats > 1:      # PyTorch channel broadcast case
        x = jnp.broadcast_to(x, (B, out_feats, H, W))
    Cout = x.shape[1]
    assert Cout == out_feats, (Cout, out_feats)

    # Row tiling: lane-dense multiples of 128 when tiled, else whole image.
    Ht = row_tile if row_tile is not None else _pick_row_tile(H, W)
    if Ht >= H or H % Ht or Ht % 8 or (Ht * W) % 128:
        Ht = H
    n_row_tiles = H // Ht

    f32 = jnp.float32
    xf_pad = jnp.pad(x_feature,
                     ((0, 0), (0, 0), (pad_pred,) * 2, (pad_pred,) * 2)).astype(compute_dtype)
    xi_pad = jnp.pad(x, ((0, 0), (0, 0), (pad_dyn,) * 2, (pad_dyn,) * 2)).astype(f32)
    # Weight columns ordered (ky, kx, c) to match the in-kernel shifted-window order.
    wk2d = jnp.transpose(wk, (0, 2, 3, 1)).reshape(OUTK, ks_pred * ks_pred * Cin)
    wk2d = wk2d.astype(compute_dtype)
    bk2d = bk.reshape(OUTK, 1).astype(f32)

    Hpf, Wpf = H + 2 * pad_pred, W + 2 * pad_pred
    Hpd, Wpd = H + 2 * pad_dyn, W + 2 * pad_dyn

    flops = 2 * B * H * W * (OUTK * ks_pred * ks_pred * Cin + Cout * ksize * ksize)
    bytes_accessed = int(xf_pad.size * xf_pad.dtype.itemsize
                         + xi_pad.size * 4
                         + wk2d.size * wk2d.dtype.itemsize
                         + bk2d.size * 4
                         + B * Cout * H * W * 4)
    cost = pl.CostEstimate(flops=flops, transcendentals=0, bytes_accessed=bytes_accessed)

    kernel = functools.partial(_pixelconv_kernel, ks_pred, pad_pred, ksize, pad_dyn,
                               Ht, n_row_tiles)
    out = pl.pallas_call(
        kernel,
        out_shape=jax.ShapeDtypeStruct((B, Cout, H * W), f32),
        grid=(B, n_row_tiles),
        in_specs=[
            pl.BlockSpec((None, Cin, Hpf, Wpf), lambda b, r: (b, 0, 0, 0)),
            pl.BlockSpec((None, Cout, Hpd, Wpd), lambda b, r: (b, 0, 0, 0)),
            pl.BlockSpec((OUTK, ks_pred * ks_pred * Cin), lambda b, r: (0, 0)),
            pl.BlockSpec((OUTK, 1), lambda b, r: (0, 0)),
        ],
        out_specs=pl.BlockSpec((None, Cout, Ht * W), lambda b, r: (b, 0, r)),
        compiler_params=pltpu.CompilerParams(
            dimension_semantics=("parallel", "parallel"),
            # Plenty for the demo; raise for production-size images / larger row
            # tiles (note: v5e's scoped default is only 16 MiB).
            vmem_limit_bytes=32 * 1024 * 1024,
        ),
        cost_estimate=cost,
    )(xf_pad, xi_pad, wk2d, bk2d)
    return out.reshape(B, Cout, H, W)


# --------------------------------------------------------------------------
# Pure-JAX reference (mirrors the PyTorch forward exactly)
# --------------------------------------------------------------------------
def reference(x_feature, x, params, *, ksize, out_feats):
    B, Cin, H, W = x_feature.shape
    pad = (ksize - 1) // 2
    N = ksize * ksize
    wk, bk = params["kernel_conv_w"], params["kernel_conv_b"]
    # kernel_conv: Conv2d(in_feats, out_feats*ksize^2, 3, padding=1)
    kernel_set = lax.conv_general_dilated(
        x_feature, wk, window_strides=(1, 1), padding=[(1, 1), (1, 1)],
        dimension_numbers=("NCHW", "OIHW", "NCHW"),
        precision=lax.Precision.HIGHEST) + bk.reshape(1, -1, 1, 1)
    # _get_index / _get_x_q gather == shifted windows of the zero-padded image.
    xp = jnp.pad(x, ((0, 0), (0, 0), (pad, pad), (pad, pad)))
    taps = [xp[:, :, ky:ky + H, kx:kx + W]
            for ky in range(ksize) for kx in range(ksize)]
    x_pixel = jnp.stack(taps, axis=-1)                                   # (B, C, H, W, N)
    kr = kernel_set.reshape(B, N, out_feats, H, W).transpose(0, 2, 3, 4, 1)  # (B, O, H, W, N)
    return (x_pixel * kr).sum(axis=-1)


if __name__ == "__main__":
    # Small shapes consistent with the module: x_feature (B, in_feats, H, W),
    # x (B, out_feats, H, W) so the channel broadcast in the module is exact.
    B, in_feats, H, W = 2, 4, 16, 16
    out_feats, ksize = 3, 3
    OUTK = out_feats * ksize * ksize

    key = jax.random.PRNGKey(0)
    k1, k2, k3, k4 = jax.random.split(key, 4)
    params = {
        "kernel_conv_w": 0.1 * jax.random.normal(k1, (OUTK, in_feats, 3, 3), jnp.float32),
        "kernel_conv_b": 0.05 * jax.random.normal(k2, (OUTK,), jnp.float32),
    }
    x_feature = jax.random.normal(k3, (B, in_feats, H, W), jnp.float32)
    x = jax.random.normal(k4, (B, out_feats, H, W), jnp.float32)

    y_ref = reference(x_feature, x, params, ksize=ksize, out_feats=out_feats)

    # Whole-image-per-batch path and row-tiled path (lane-dense 128-wide tiles).
    y_full = jax.block_until_ready(
        pixel_conv(x_feature, x, params, ksize=ksize, out_feats=out_feats))
    y_tiled = jax.block_until_ready(
        pixel_conv(x_feature, x, params, ksize=ksize, out_feats=out_feats, row_tile=8))

    assert y_full.shape == (B, out_feats, H, W), y_full.shape
    assert y_tiled.shape == (B, out_feats, H, W), y_tiled.shape
    for y in (y_full, y_tiled):
        max_err = float(jnp.max(jnp.abs(y - y_ref)))
        assert jnp.allclose(y, y_ref, atol=2e-3, rtol=2e-3), max_err
    print("KERNEL_OK")
</pallas_src>

<mosaic_0001>
module attributes {stable_mosaic.version = 11 : i64} {
  func.func @_pixelconv_kernel(%arg0: i32, %arg1: i32, %arg2: memref<1x4x18x18xf32, #tpu.memory_space<vmem>>, %arg3: memref<1x3x18x18xf32, #tpu.memory_space<vmem>>, %arg4: memref<27x36xf32, #tpu.memory_space<vmem>>, %arg5: memref<27x1xf32, #tpu.memory_space<vmem>>, %arg6: memref<1x3x256xf32, #tpu.memory_space<vmem>>) attributes {dimension_semantics = [#tpu.dimension_semantics<parallel>, #tpu.dimension_semantics<parallel>], iteration_bounds = array<i64: 2, 1>, scalar_prefetch = 0 : i64, scratch_operands = 0 : i64, tpu.core_type = #tpu.core_type<tc>, window_params = [{transform_indices = @transform_0, window_bounds = array<i64: 1, 4, 18, 18>}, {transform_indices = @transform_1, window_bounds = array<i64: 1, 3, 18, 18>}, {pipeline_mode = #tpu.pipeline_mode<synchronous>, transform_indices = @transform_2, window_bounds = array<i64: 27, 36>}, {pipeline_mode = #tpu.pipeline_mode<synchronous>, transform_indices = @transform_3, window_bounds = array<i64: 27, 1>}, {transform_indices = @transform_4, window_bounds = array<i64: 1, 3, 256>}]} {
    %c0 = arith.constant 0 : index
    %c0_0 = arith.constant 0 : index
    %c0_1 = arith.constant 0 : index
    %c0_2 = arith.constant 0 : index
    %0 = vector.load %arg2[%c0, %c0_0, %c0_1, %c0_2] : memref<1x4x18x18xf32, #tpu.memory_space<vmem>>, vector<1x4x18x18xf32>
    %1 = vector.shape_cast %0 : vector<1x4x18x18xf32> to vector<4x18x18xf32>
    %c0_3 = arith.constant 0 : index
    %c0_4 = arith.constant 0 : index
    %c0_5 = arith.constant 0 : index
    %c0_6 = arith.constant 0 : index
    %2 = vector.load %arg3[%c0_3, %c0_4, %c0_5, %c0_6] : memref<1x3x18x18xf32, #tpu.memory_space<vmem>>, vector<1x3x18x18xf32>
    %3 = vector.shape_cast %2 : vector<1x3x18x18xf32> to vector<3x18x18xf32>
    %4 = vector.extract_strided_slice %1 {offsets = [0, 0, 0], sizes = [4, 16, 16], strides = [1, 1, 1]} : vector<4x18x18xf32> to vector<4x16x16xf32>
    %5 = vector.shape_cast %4 : vector<4x16x16xf32> to vector<4x256xf32>
    %6 = vector.extract_strided_slice %1 {offsets = [0, 0, 1], sizes = [4, 16, 16], strides = [1, 1, 1]} : vector<4x18x18xf32> to vector<4x16x16xf32>
    %7 = vector.shape_cast %6 : vector<4x16x16xf32> to vector<4x256xf32>
    %8 = vector.extract_strided_slice %1 {offsets = [0, 0, 2], sizes = [4, 16, 16], strides = [1, 1, 1]} : vector<4x18x18xf32> to vector<4x16x16xf32>
    %9 = vector.shape_cast %8 : vector<4x16x16xf32> to vector<4x256xf32>
    %10 = vector.extract_strided_slice %1 {offsets = [0, 1, 0], sizes = [4, 16, 16], strides = [1, 1, 1]} : vector<4x18x18xf32> to vector<4x16x16xf32>
    %11 = vector.shape_cast %10 : vector<4x16x16xf32> to vector<4x256xf32>
    %12 = vector.extract_strided_slice %1 {offsets = [0, 1, 1], sizes = [4, 16, 16], strides = [1, 1, 1]} : vector<4x18x18xf32> to vector<4x16x16xf32>
    %13 = vector.shape_cast %12 : vector<4x16x16xf32> to vector<4x256xf32>
    %14 = vector.extract_strided_slice %1 {offsets = [0, 1, 2], sizes = [4, 16, 16], strides = [1, 1, 1]} : vector<4x18x18xf32> to vector<4x16x16xf32>
    %15 = vector.shape_cast %14 : vector<4x16x16xf32> to vector<4x256xf32>
    %16 = vector.extract_strided_slice %1 {offsets = [0, 2, 0], sizes = [4, 16, 16], strides = [1, 1, 1]} : vector<4x18x18xf32> to vector<4x16x16xf32>
    %17 = vector.shape_cast %16 : vector<4x16x16xf32> to vector<4x256xf32>
    %18 = vector.extract_strided_slice %1 {offsets = [0, 2, 1], sizes = [4, 16, 16], strides = [1, 1, 1]} : vector<4x18x18xf32> to vector<4x16x16xf32>
    %19 = vector.shape_cast %18 : vector<4x16x16xf32> to vector<4x256xf32>
    %20 = vector.extract_strided_slice %1 {offsets = [0, 2, 2], sizes = [4, 16, 16], strides = [1, 1, 1]} : vector<4x18x18xf32> to vector<4x16x16xf32>
    %21 = vector.shape_cast %20 : vector<4x16x16xf32> to vector<4x256xf32>
    %22 = tpu.concatenate %5, %7, %9, %11, %13, %15, %17, %19, %21 in 0 : vector<4x256xf32>, vector<4x256xf32>, vector<4x256xf32>, vector<4x256xf32>, vector<4x256xf32>, vector<4x256xf32>, vector<4x256xf32>, vector<4x256xf32>, vector<4x256xf32> -> vector<36x256xf32>
    %c0_7 = arith.constant 0 : index
    %c0_8 = arith.constant 0 : index
    %23 = vector.load %arg4[%c0_7, %c0_8] : memref<27x36xf32, #tpu.memory_space<vmem>>, vector<27x36xf32>
    %cst = arith.constant dense<0.000000e+00> : vector<27x256xf32>
    %24 = tpu.matmul %23, %22, %cst {dimension_numbers = #tpu.dot_dimension_numbers<[1], [0], [0], [1], [0, 0, 1, 1], [], []>} : vector<27x36xf32>, vector<36x256xf32>, vector<27x256xf32> -> vector<27x256xf32>
    %c0_9 = arith.constant 0 : index
    %c0_10 = arith.constant 0 : index
    %25 = vector.load %arg5[%c0_9, %c0_10] : memref<27x1xf32, #tpu.memory_space<vmem>>, vector<27x1xf32>
    %26 = vector.broadcast %25 : vector<27x1xf32> to vector<27x256xf32>
    %27 = arith.addf %24, %26 : vector<27x256xf32>
    %cst_11 = arith.constant 0.000000e+00 : f32
    %28 = vector.broadcast %cst_11 : f32 to vector<3x256xf32>
    %29 = vector.extract_strided_slice %3 {offsets = [0, 0, 0], sizes = [3, 16, 16], strides = [1, 1, 1]} : vector<3x18x18xf32> to vector<3x16x16xf32>
    %30 = vector.shape_cast %29 : vector<3x16x16xf32> to vector<3x256xf32>
    %31 = vector.extract_strided_slice %27 {offsets = [0, 0], sizes = [3, 256], strides = [1, 1]} : vector<27x256xf32> to vector<3x256xf32>
    %32 = arith.mulf %30, %31 : vector<3x256xf32>
    %33 = arith.addf %28, %32 : vector<3x256xf32>
    %34 = vector.extract_strided_slice %3 {offsets = [0, 0, 1], sizes = [3, 16, 16], strides = [1, 1, 1]} : vector<3x18x18xf32> to vector<3x16x16xf32>
    %35 = vector.shape_cast %34 : vector<3x16x16xf32> to vector<3x256xf32>
    %36 = vector.extract_strided_slice %27 {offsets = [3, 0], sizes = [3, 256], strides = [1, 1]} : vector<27x256xf32> to vector<3x256xf32>
    %37 = arith.mulf %35, %36 : vector<3x256xf32>
    %38 = arith.addf %33, %37 : vector<3x256xf32>
    %39 = vector.extract_strided_slice %3 {offsets = [0, 0, 2], sizes = [3, 16, 16], strides = [1, 1, 1]} : vector<3x18x18xf32> to vector<3x16x16xf32>
    %40 = vector.shape_cast %39 : vector<3x16x16xf32> to vector<3x256xf32>
    %41 = vector.extract_strided_slice %27 {offsets = [6, 0], sizes = [3, 256], strides = [1, 1]} : vector<27x256xf32> to vector<3x256xf32>
    %42 = arith.mulf %40, %41 : vector<3x256xf32>
    %43 = arith.addf %38, %42 : vector<3x256xf32>
    %44 = vector.extract_strided_slice %3 {offsets = [0, 1, 0], sizes = [3, 16, 16], strides = [1, 1, 1]} : vector<3x18x18xf32> to vector<3x16x16xf32>
    %45 = vector.shape_cast %44 : vector<3x16x16xf32> to vector<3x256xf32>
    %46 = vector.extract_strided_slice %27 {offsets = [9, 0], sizes = [3, 256], strides = [1, 1]} : vector<27x256xf32> to vector<3x256xf32>
    %47 = arith.mulf %45, %46 : vector<3x256xf32>
    %48 = arith.addf %43, %47 : vector<3x256xf32>
    %49 = vector.extract_strided_slice %3 {offsets = [0, 1, 1], sizes = [3, 16, 16], strides = [1, 1, 1]} : vector<3x18x18xf32> to vector<3x16x16xf32>
    %50 = vector.shape_cast %49 : vector<3x16x16xf32> to vector<3x256xf32>
    %51 = vector.extract_strided_slice %27 {offsets = [12, 0], sizes = [3, 256], strides = [1, 1]} : vector<27x256xf32> to vector<3x256xf32>
    %52 = arith.mulf %50, %51 : vector<3x256xf32>
    %53 = arith.addf %48, %52 : vector<3x256xf32>
    %54 = vector.extract_strided_slice %3 {offsets = [0, 1, 2], sizes = [3, 16, 16], strides = [1, 1, 1]} : vector<3x18x18xf32> to vector<3x16x16xf32>
    %55 = vector.shape_cast %54 : vector<3x16x16xf32> to vector<3x256xf32>
    %56 = vector.extract_strided_slice %27 {offsets = [15, 0], sizes = [3, 256], strides = [1, 1]} : vector<27x256xf32> to vector<3x256xf32>
    %57 = arith.mulf %55, %56 : vector<3x256xf32>
    %58 = arith.addf %53, %57 : vector<3x256xf32>
    %59 = vector.extract_strided_slice %3 {offsets = [0, 2, 0], sizes = [3, 16, 16], strides = [1, 1, 1]} : vector<3x18x18xf32> to vector<3x16x16xf32>
    %60 = vector.shape_cast %59 : vector<3x16x16xf32> to vector<3x256xf32>
    %61 = vector.extract_strided_slice %27 {offsets = [18, 0], sizes = [3, 256], strides = [1, 1]} : vector<27x256xf32> to vector<3x256xf32>
    %62 = arith.mulf %60, %61 : vector<3x256xf32>
    %63 = arith.addf %58, %62 : vector<3x256xf32>
    %64 = vector.extract_strided_slice %3 {offsets = [0, 2, 1], sizes = [3, 16, 16], strides = [1, 1, 1]} : vector<3x18x18xf32> to vector<3x16x16xf32>
    %65 = vector.shape_cast %64 : vector<3x16x16xf32> to vector<3x256xf32>
    %66 = vector.extract_strided_slice %27 {offsets = [21, 0], sizes = [3, 256], strides = [1, 1]} : vector<27x256xf32> to vector<3x256xf32>
    %67 = arith.mulf %65, %66 : vector<3x256xf32>
    %68 = arith.addf %63, %67 : vector<3x256xf32>
    %69 = vector.extract_strided_slice %3 {offsets = [0, 2, 2], sizes = [3, 16, 16], strides = [1, 1, 1]} : vector<3x18x18xf32> to vector<3x16x16xf32>
    %70 = vector.shape_cast %69 : vector<3x16x16xf32> to vector<3x256xf32>
    %71 = vector.extract_strided_slice %27 {offsets = [24, 0], sizes = [3, 256], strides = [1, 1]} : vector<27x256xf32> to vector<3x256xf32>
    %72 = arith.mulf %70, %71 : vector<3x256xf32>
    %73 = arith.addf %68, %72 : vector<3x256xf32>
    %c0_12 = arith.constant 0 : index
    %c0_13 = arith.constant 0 : index
    %c0_14 = arith.constant 0 : index
    %74 = vector.load %arg6[%c0_12, %c0_13, %c0_14] : memref<1x3x256xf32, #tpu.memory_space<vmem>>, vector<1x3x256xf32>
    %75 = vector.shape_cast %74 : vector<1x3x256xf32> to vector<3x256xf32>
    %76 = vector.shape_cast %73 : vector<3x256xf32> to vector<1x3x256xf32>
    tpu.vector_store %arg6[%c0_12, %c0_13, %c0_14], %76 {strides = array<i32>} : memref<1x3x256xf32, #tpu.memory_space<vmem>>, vector<1x3x256xf32>,
    return
  }
  func.func @transform_0(%arg0: i32, %arg1: i32) -> (i32, i32, i32, i32) {
    %c0_i32 = arith.constant 0 : i32
    %c0_i32_0 = arith.constant 0 : i32
    %c0_i32_1 = arith.constant 0 : i32
    %c0_i32_2 = arith.constant 0 : i32
    return %arg0, %c0_i32, %c0_i32_0, %c0_i32_1 : i32, i32, i32, i32
  }
  func.func @transform_1(%arg0: i32, %arg1: i32) -> (i32, i32, i32, i32) {
    %c0_i32 = arith.constant 0 : i32
    %c0_i32_0 = arith.constant 0 : i32
    %c0_i32_1 = arith.constant 0 : i32
    %c0_i32_2 = arith.constant 0 : i32
    return %arg0, %c0_i32, %c0_i32_0, %c0_i32_1 : i32, i32, i32, i32
  }
  func.func @transform_2(%arg0: i32, %arg1: i32) -> (i32, i32) {
    %c0_i32 = arith.constant 0 : i32
    %c0_i32_0 = arith.constant 0 : i32
    %c0_i32_1 = arith.constant 0 : i32
    return %c0_i32, %c0_i32_0 : i32, i32
  }
  func.func @transform_3(%arg0: i32, %arg1: i32) -> (i32, i32) {
    %c0_i32 = arith.constant 0 : i32
    %c0_i32_0 = arith.constant 0 : i32
    %c0_i32_1 = arith.constant 0 : i32
    return %c0_i32, %c0_i32_0 : i32, i32
  }
  func.func @transform_4(%arg0: i32, %arg1: i32) -> (i32, i32, i32) {
    %c0_i32 = arith.constant 0 : i32
    %c0_i32_0 = arith.constant 0 : i32
    return %arg0, %c0_i32, %arg1 : i32, i32, i32
  }
}

</mosaic_0001>

<llo_original>
// kernel: tpu_custom_call.1
$region0: #{tpu_custom_call.1}
  #allocation0 [shape = 'u32[]', space=smem, size = 0x4, offset = 0x4, fixed_abs, tag = 'smem constant byte address 0x4 - core index']
  #allocation1 [shape = 'u32[144,128]{1,0:T(1,128)}', space=vmem, size = 0x12000, scoped, tag = 'internal scratch']
  %s0 = inlined_call_operand.vmem [shape: f32[2,4,18,18], index: 0, kind: input, shape index: {}]
  %s1 = inlined_call_operand.vmem [shape: f32[2,3,18,18], index: 1, kind: input, shape index: {}]
  %s2 = inlined_call_operand.vmem [shape: f32[27,36], index: 2, kind: input, shape index: {}]
  %s3 = inlined_call_operand.vmem [shape: f32[27,1], index: 3, kind: input, shape index: {}]
  %s4 = inlined_call_operand.vmem [shape: f32[2,3,256], index: 4, kind: output, shape index: {}]
  %s5 = sld [smem:[#allocation0]]
  $region49: #{tpu_custom_call.1} parent=0
    _
  %s7 = ssub.s32 1, %s5
  %s8 = scalar_select 0, %s7, %s5
  loop: start=0, step=1, limit=4
  $region2: #{tpu_custom_call.1} parent=0 // loop_pre_header
    _
  $region3: #{tpu_custom_call.1} parent=0 // loop_header
    %s10 = sphi 0, %s14
    %p11 = scmp.ge.s32.totalorder %s10, 4
    %s17 = sphi 0, %s29
    %s18 = sphi 0, %s25
    %s19 = sphi 0, %s17
    %s20 = sphi 0, %s18
    %s21 = sphi 0, %s19
    %s22 = sphi 0, %s20
    %s32 = sphi 0, %s34
    %s35 = sphi 0, %s32
    %s36 = sphi 0, %s35
    %s52 = sphi 0, %s36
    %s58 = sphi 0, %s60
    %s61 = sphi 0, %s58
    %s62 = sphi 0, %s61
    %s78 = sphi 0, %s62
    %s82 = sphi 0, %s82
    %s84 = sphi 0, %s82
    %s85 = sphi 0, %s84
    %s99 = sphi 0, %s85
    %s103 = sphi 0, %s103
    %s105 = sphi 0, %s103
    %s106 = sphi 0, %s105
    %s120 = sphi 0, %s106
    %s128 = sphi 0, %s130
    %s131 = sphi 0, %s128
    %s132 = sphi 0, %s131
    %s148 = sphi 0, %s132
  $region4: #{tpu_custom_call.1} parent=0 // loop_header_branch
    %13 = sbr.rel (%p11) target = $region8
  $region5: #{tpu_custom_call.1} parent=0 // loop_body
    %s15 = ssub.s32 %s10, 1
    %s16 = ssub.s32 %s10, 2
    %s23 = sadd.s32 1, %s18
    %p24 = scmp.ge.s32.totalorder %s23, 1
    %s25 = scalar_select %p24, 0, %s23
    %s26 = sadd.s32 1, %s17
    %s27 = scalar_select %p24, %s26, %s17
    %p28 = scmp.ge.s32.totalorder %s27, 2
    %s29 = scalar_select %p28, 0, %s27
    %s30 = ssub.s32 %s17, %s29
    %p31 = scmp.eq.s32.totalorder %s30, 0
    %s33 = sadd.s32 %s32, 1
    %s34 = scalar_select %p31, %s32, %s33
    %p37 = pneg %p31
    %p38 = scmp.eq.s32.totalorder %s10, 1
    %p39 = por %p37, %p38
    %p40 = scmp.ne.s32.totalorder %s32, %s35
    %p41 = scmp.eq.s32.totalorder %s10, 0
    %p42 = por %p40, %p41
    %p43 = scmp.ne.s32.totalorder %s32, %s35
    %p44 = scmp.eq.s32.totalorder %s15, 1
    %p45 = por %p43, %p44
    %p46 = scmp.ne.s32.totalorder %s35, %s36
    %p47 = scmp.eq.s32.totalorder %s15, 0
    %p48 = por %p46, %p47
    %p49 = scmp.ne.s32.totalorder %s35, %s36
    %p50 = scmp.eq.s32.totalorder %s16, 1
    %p51 = por %p49, %p50
    %p53 = scmp.ne.s32.totalorder %s36, %s52
    %p54 = scmp.eq.s32.totalorder %s16, 0
    %p55 = por %p53, %p54
    %s56 = ssub.s32 %s17, %s29
    %p57 = scmp.eq.s32.totalorder %s56, 0
    %s59 = sadd.s32 %s58, 1
    %s60 = scalar_select %p57, %s58, %s59
    %p63 = pneg %p57
    %p64 = scmp.eq.s32.totalorder %s10, 1
    %p65 = por %p63, %p64
    %p66 = scmp.ne.s32.totalorder %s58, %s61
    %p67 = scmp.eq.s32.totalorder %s10, 0
    %p68 = por %p66, %p67
    %p69 = scmp.ne.s32.totalorder %s58, %s61
    %p70 = scmp.eq.s32.totalorder %s15, 1
    %p71 = por %p69, %p70
    %p72 = scmp.ne.s32.totalorder %s61, %s62
    %p73 = scmp.eq.s32.totalorder %s15, 0
    %p74 = por %p72, %p73
    %p75 = scmp.ne.s32.totalorder %s61, %s62
    %p76 = scmp.eq.s32.totalorder %s16, 1
    %p77 = por %p75, %p76
    %p79 = scmp.ne.s32.totalorder %s62, %s78
    %p80 = scmp.eq.s32.totalorder %s16, 0
    %p81 = por %p79, %p80
    %s83 = sadd.s32 %s82, 1
    %p86 = scmp.eq.s32.totalorder %s10, 1
    %p87 = scmp.ne.s32.totalorder %s82, %s84
    %p88 = scmp.eq.s32.totalorder %s10, 0
    %p89 = por %p87, %p88
    %p90 = scmp.ne.s32.totalorder %s82, %s84
    %p91 = scmp.eq.s32.totalorder %s15, 1
    %p92 = por %p90, %p91
    %p93 = scmp.ne.s32.totalorder %s84, %s85
    %p94 = scmp.eq.s32.totalorder %s15, 0
    %p95 = por %p93, %p94
    %p96 = scmp.ne.s32.totalorder %s84, %s85
    %p97 = scmp.eq.s32.totalorder %s16, 1
    %p98 = por %p96, %p97
    %p100 = scmp.ne.s32.totalorder %s85, %s99
    %p101 = scmp.eq.s32.totalorder %s16, 0
    %p102 = por %p100, %p101
    %s104 = sadd.s32 %s103, 1
    %p107 = scmp.eq.s32.totalorder %s10, 1
    %p108 = scmp.ne.s32.totalorder %s103, %s105
    %p109 = scmp.eq.s32.totalorder %s10, 0
    %p110 = por %p108, %p109
    %p111 = scmp.ne.s32.totalorder %s103, %s105
    %p112 = scmp.eq.s32.totalorder %s15, 1
    %p113 = por %p111, %p112
    %p114 = scmp.ne.s32.totalorder %s105, %s106
    %p115 = scmp.eq.s32.totalorder %s15, 0
    %p116 = por %p114, %p115
    %p117 = scmp.ne.s32.totalorder %s105, %s106
    %p118 = scmp.eq.s32.totalorder %s16, 1
    %p119 = por %p117, %p118
    %p121 = scmp.ne.s32.totalorder %s106, %s120
    %p122 = scmp.eq.s32.totalorder %s16, 0
    %p123 = por %p121, %p122
    %s124 = ssub.s32 %s17, %s29
    %s125 = ssub.s32 %s18, %s25
    %s126 = sor.u32 %s124, %s125
    %p127 = scmp.eq.s32.totalorder %s126, 0
    %s129 = sadd.s32 %s128, 1
    %s130 = scalar_select %p127, %s128, %s129
    %p133 = pneg %p127
    %p134 = scmp.eq.s32.totalorder %s10, 1
    %p135 = por %p133, %p134
    %p136 = scmp.ne.s32.totalorder %s128, %s131
    %p137 = scmp.eq.s32.totalorder %s10, 0
    %p138 = por %p136, %p137
    %p139 = scmp.ne.s32.totalorder %s128, %s131
    %p140 = scmp.eq.s32.totalorder %s15, 1
    %p141 = por %p139, %p140
    %p142 = scmp.ne.s32.totalorder %s131, %s132
    %p143 = scmp.eq.s32.totalorder %s15, 0
    %p144 = por %p142, %p143
    %p145 = scmp.ne.s32.totalorder %s131, %s132
    %p146 = scmp.eq.s32.totalorder %s16, 1
    %p147 = por %p145, %p146
    %p149 = scmp.ne.s32.totalorder %s132, %s148
    %p150 = scmp.eq.s32.totalorder %s16, 0
    %p151 = por %p149, %p150
    %p152 = scmp.le.s32.totalorder 1, %s10
    %p153 = scmp.lt.s32.totalorder %s10, 3
    %p154 = pnand %p152, %p153
    %p155 = pneg %p154
    // Predicated region
    $region9: #{tpu_custom_call.1} parent=5 // pred_check
      _
    $region10: #{tpu_custom_call.1} parent=5 // pred_check_branch
      %157 = sbr.rel (%p154) target = $region12
    $region11: #{tpu_custom_call.1} parent=5 // pred_region
      %s158 = ssub.s32 %s10, 1
      // Predicated region
      $region13: #{tpu_custom_call.1} parent=11 // pred_check
        %p159 = pneg %p95
      $region14: #{tpu_custom_call.1} parent=11 // pred_check_branch
        %161 = sbr.rel (%p159) target = $region16
      $region15: #{tpu_custom_call.1} parent=11 // pred_region
        _
      $region16: #{tpu_custom_call.1} parent=11 // pred_fallthru
        _
      // Predicated region
      $region17: #{tpu_custom_call.1} parent=11 // pred_check
        %p162 = pneg %p116
      $region18: #{tpu_custom_call.1} parent=11 // pred_check_branch
        %164 = sbr.rel (%p162) target = $region20
      $region19: #{tpu_custom_call.1} parent=11 // pred_region
        _
      $region20: #{tpu_custom_call.1} parent=11 // pred_fallthru
        _
    $region12: #{tpu_custom_call.1} parent=5 // pred_fallthru
      _
    %p165 = scmp.lt.s32.totalorder %s10, 2
    // Predicated region
    $region21: #{tpu_custom_call.1} parent=5 // pred_check
      %p166 = pneg %p165
    $region22: #{tpu_custom_call.1} parent=5 // pred_check_branch
      %168 = sbr.rel (%p166) target = $region24
    $region23: #{tpu_custom_call.1} parent=5 // pred_region
      // Predicated region
      $region25: #{tpu_custom_call.1} parent=23 // pred_check
        %p169 = pneg %p42
      $region26: #{tpu_custom_call.1} parent=23 // pred_check_branch
        %171 = sbr.rel (%p169) target = $region28
      $region27: #{tpu_custom_call.1} parent=23 // pred_region
        %p172 = scmp.lt.s32.totalorder %s17, 1
        %s173 = scalar_select %p172, %s17, 1
        %s174 = smul.addr %s173, 12
        %s175 = smul.addr %s174, 8
        %s176 = scalar_lea.vmem %s0, %s175
      $region28: #{tpu_custom_call.1} parent=23 // pred_fallthru
        _
      // Predicated region
      $region29: #{tpu_custom_call.1} parent=23 // pred_check
        %p177 = pneg %p68
      $region30: #{tpu_custom_call.1} parent=23 // pred_check_branch
        %179 = sbr.rel (%p177) target = $region32
      $region31: #{tpu_custom_call.1} parent=23 // pred_region
        %p180 = scmp.lt.s32.totalorder %s17, 1
        %s181 = scalar_select %p180, %s17, 1
        %s182 = smul.addr %s181, 9
        %s183 = smul.addr %s182, 8
        %s184 = scalar_lea.vmem %s1, %s183
      $region32: #{tpu_custom_call.1} parent=23 // pred_fallthru
        _
    $region24: #{tpu_custom_call.1} parent=5 // pred_fallthru
      _
    %p185 = scmp.le.s32.totalorder 1, %s10
    %p186 = scmp.lt.s32.totalorder %s10, 3
    %p187 = pnand %p185, %p186
    %p188 = pneg %p187
    // Predicated region
    $region33: #{tpu_custom_call.1} parent=5 // pred_check
      _
    $region34: #{tpu_custom_call.1} parent=5 // pred_check_branch
      %190 = sbr.rel (%p187) target = $region36
    $region35: #{tpu_custom_call.1} parent=5 // pred_region
      %s191 = ssub.s32 %s10, 1
      %p192 = scmp.lt.s32.totalorder %s19, 1
      %s193 = scalar_select %p192, %s19, 1
      %s194 = smul.addr %s193, 12
      %s195 = smul.addr %s194, 8
      %s196 = scalar_lea.vmem %s0, %s195
      %p197 = pneg %p48
      %p198 = pneg %p45
      %p199 = scmp.lt.s32.totalorder %s19, 1
      %s200 = scalar_select %p199, %s19, 1
      %s201 = smul.addr %s200, 9
      %s202 = smul.addr %s201, 8
      %s203 = scalar_lea.vmem %s1, %s202
      %p204 = pneg %p74
      %p205 = pneg %p71
      %p206 = pneg %p95
      %p207 = pneg %p92
      %p208 = pneg %p116
      %p209 = pneg %p113
      %p210 = pneg %p144
      %p211 = pneg %p141
      %s212 = smul.u32 2, %s20
      %p213 = scmp.lt.s32.totalorder %s19, 1
      %s214 = scalar_select %p213, %s19, 1
      %p215 = scmp.lt.s32.totalorder %s212, 1
      %s216 = scalar_select %p215, %s212, 1
      %s217 = smul.addr %s214, 2
      %s218 = sadd.s32 %s216, %s217
      %s219 = smul.addr %s218, 4
      %s220 = scalar_lea.vmem %s4, %s219
      %p221 = scmp.lt.s32.totalorder %s19, 1
      %s222 = scalar_select %p221, %s19, 1
      %s223 = smul.addr %s222, 12
      %s224 = smul.addr %s223, 8
      %s225 = scalar_lea.vmem %s0, %s224
      %p226 = scmp.lt.s32.totalorder %s19, 1
      %s227 = scalar_select %p226, %s19, 1
      %s228 = smul.addr %s227, 9
      %s229 = smul.addr %s228, 8
      %s230 = scalar_lea.vmem %s1, %s229
      %s231 = smul.u32 2, %s20
      %p232 = scmp.lt.s32.totalorder %s19, 1
      %s233 = scalar_select %p232, %s19, 1
      %p234 = scmp.lt.s32.totalorder %s231, 1
      %s235 = scalar_select %p234, %s231, 1
      %s236 = smul.addr %s233, 2
      %s237 = sadd.s32 %s235, %s236
      %s238 = smul.addr %s237, 4
      %s239 = scalar_lea.vmem %s4, %s238
      %s240 = smul.u32 2, %s20
      %v241 = vld [vmem:[%s225] sm:$0xff]
      %v242 = vld [vmem:[%s225 + $0x8] sm:$0xff]
      %v243 = vld [vmem:[%s225 + $0x10] sm:$0x3]
      %v244 = vld [vmem:[%s225 + $0x18] sm:$0xff]
      %v245 = vld [vmem:[%s225 + $0x20] sm:$0xff]
      %v246 = vld [vmem:[%s225 + $0x28] sm:$0x3]
      %v247 = vld [vmem:[%s225 + $0x30] sm:$0xff]
      %v248 = vld [vmem:[%s225 + $0x38] sm:$0xff]
      %v249 = vld [vmem:[%s225 + $0x40] sm:$0x3]
      %v250 = vld [vmem:[%s225 + $0x48] sm:$0xff]
      %v251 = vld [vmem:[%s225 + $0x50] sm:$0xff]
      %v252 = vld [vmem:[%s225 + $0x58] sm:$0x3]
      %v253 = vld [vmem:[%s230] sm:$0xff]
      %v254 = vld [vmem:[%s230 + $0x8] sm:$0xff]
      %v255 = vld [vmem:[%s230 + $0x10] sm:$0x3]
      %v256 = vld [vmem:[%s230 + $0x18] sm:$0xff]
      %v257 = vld [vmem:[%s230 + $0x20] sm:$0xff]
      %v258 = vld [vmem:[%s230 + $0x28] sm:$0x3]
      %v259 = vld [vmem:[%s230 + $0x30] sm:$0xff]
      %v260 = vld [vmem:[%s230 + $0x38] sm:$0xff]
      %v261 = vld [vmem:[%s230 + $0x40] sm:$0x3]
      %v262 = vcombine.low %v241, %v247
      %v263 = vcombine.high %v241, %v247
      %v265 = vunpack.c.l.s4 1983009808
      %v266 = vunpack.c.0.s8 %v265
      %v267 = vlaneseq
      %v268 = vshrl.u32 %v267, 7
      %v269 = vsub.s32 %v266, %v268
      %v270 = vrot.slane %v262, %v269
      %v272 = vunpack.c.l.s4 1983009808
      %v273 = vunpack.c.0.s8 %v272
      %v274 = vlaneseq
      %v275 = vshrl.u32 %v274, 7
      %v276 = vsub.s32 %v273, %v275
      %v277 = vrot.slane %v263, %v276
      %v278 = vcombine.low %v244, %v250
      %v279 = vcombine.high %v244, %v250
      %v281 = vunpack.c.l.s4 1983009808
      %v282 = vunpack.c.0.s8 %v281
      %v283 = vlaneseq
      %v284 = vshrl.u32 %v283, 7
      %v285 = vsub.s32 %v282, %v284
      %v286 = vrot.slane %v278, %v285
      %v288 = vunpack.c.l.s4 1983009808
      %v289 = vunpack.c.0.s8 %v288
      %v290 = vlaneseq
      %v291 = vshrl.u32 %v290, 7
      %v292 = vsub.s32 %v289, %v291
      %v293 = vrot.slane %v279, %v292
      %v294 = vcombine.low %v270, %v286
      %v295 = vcombine.high %v270, %v286
      %v297 = vunpack.c.l.s4 1934713408
      %v298 = vunpack.c.0.s8 %v297
      %v299 = vlaneseq
      %v300 = vshrl.u32 %v299, 7
      %v301 = vsub.s32 %v298, %v300
      %v302 = vrot.slane %v294, %v301
      %v304 = vunpack.c.l.s4 1934713408
      %v305 = vunpack.c.0.s8 %v304
      %v306 = vlaneseq
      %v307 = vshrl.u32 %v306, 7
      %v308 = vsub.s32 %v305, %v307
      %v309 = vrot.slane %v295, %v308
      %v310 = vcombine.low %v277, %v293
      %v311 = vcombine.high %v277, %v293
      %v313 = vunpack.c.l.s4 1934713408
      %v314 = vunpack.c.0.s8 %v313
      %v315 = vlaneseq
      %v316 = vshrl.u32 %v315, 7
      %v317 = vsub.s32 %v314, %v316
      %v318 = vrot.slane %v310, %v317
      %v320 = vunpack.c.l.s4 1934713408
      %v321 = vunpack.c.0.s8 %v320
      %v322 = vlaneseq
      %v323 = vshrl.u32 %v322, 7
      %v324 = vsub.s32 %v321, %v323
      %v325 = vrot.slane %v311, %v324
      %v326 = vcombine.high %v302, 0.0
      %v327 = vcombine.high %v309, 0.0
      %v328 = vcombine.high %v318, 0.0
      %v329 = vcombine.high %v325, 0.0
      %v330 = vcombine.low %v242, %v248
      %v331 = vcombine.high %v242, %v248
      %v333 = vunpack.c.l.s4 1983009808
      %v334 = vunpack.c.0.s8 %v333
      %v335 = vlaneseq
      %v336 = vshrl.u32 %v335, 7
      %v337 = vsub.s32 %v334, %v336
      %v338 = vrot.slane %v330, %v337
      %v340 = vunpack.c.l.s4 1983009808
      %v341 = vunpack.c.0.s8 %v340
      %v342 = vlaneseq
      %v343 = vshrl.u32 %v342, 7
      %v344 = vsub.s32 %v341, %v343
      %v345 = vrot.slane %v331, %v344
      %v346 = vcombine.low %v245, %v251
      %v347 = vcombine.high %v245, %v251
      %v349 = vunpack.c.l.s4 1983009808
      %v350 = vunpack.c.0.s8 %v349
      %v351 = vlaneseq
      %v352 = vshrl.u32 %v351, 7
      %v353 = vsub.s32 %v350, %v352
      %v354 = vrot.slane %v346, %v353
      %v356 = vunpack.c.l.s4 1983009808
      %v357 = vunpack.c.0.s8 %v356
      %v358 = vlaneseq
      %v359 = vshrl.u32 %v358, 7
      %v360 = vsub.s32 %v357, %v359
      %v361 = vrot.slane %v347, %v360
      %v362 = vcombine.low %v338, %v354
      %v363 = vcombine.high %v338, %v354
      %v365 = vunpack.c.l.s4 1934713408
      %v366 = vunpack.c.0.s8 %v365
      %v367 = vlaneseq
      %v368 = vshrl.u32 %v367, 7
      %v369 = vsub.s32 %v366, %v368
      %v370 = vrot.slane %v362, %v369
      %v372 = vunpack.c.l.s4 1934713408
      %v373 = vunpack.c.0.s8 %v372
      %v374 = vlaneseq
      %v375 = vshrl.u32 %v374, 7
      %v376 = vsub.s32 %v373, %v375
      %v377 = vrot.slane %v363, %v376
      %v378 = vcombine.low %v345, %v361
      %v379 = vcombine.high %v345, %v361
      %v381 = vunpack.c.l.s4 1934713408
      %v382 = vunpack.c.0.s8 %v381
      %v383 = vlaneseq
      %v384 = vshrl.u32 %v383, 7
      %v385 = vsub.s32 %v382, %v384
      %v386 = vrot.slane %v378, %v385
      %v388 = vunpack.c.l.s4 1934713408
      %v389 = vunpack.c.0.s8 %v388
      %v390 = vlaneseq
      %v391 = vshrl.u32 %v390, 7
      %v392 = vsub.s32 %v389, %v391
      %v393 = vrot.slane %v379, %v392
      %v394 = vcombine.high %v370, 0.0
      %v395 = vcombine.high %v377, 0.0
      %v396 = vcombine.high %v386, 0.0
      %v397 = vcombine.high %v393, 0.0
      %399 = vrot.lane.b32.xlu0 %v326, 16
      %v400 = vpop.permute.xlu0 %399
      %403 = vrot.lane.b32.xlu0 %v309, 32
      %v404 = vpop.permute.xlu0 %403
      %407 = vrot.lane.b32.xlu0 %v327, 48
      %v408 = vpop.permute.xlu0 %407
      %411 = vrot.lane.b32.xlu0 %v318, 64
      %v412 = vpop.permute.xlu0 %411
      %415 = vrot.lane.b32.xlu0 %v328, 80
      %v416 = vpop.permute.xlu0 %415
      %419 = vrot.lane.b32.xlu0 %v325, 96
      %v420 = vpop.permute.xlu0 %419
      %423 = vrot.lane.b32.xlu0 %v329, 112
      %v424 = vpop.permute.xlu0 %423
      %427 = vrot.lane.b32.xlu0 %v394, 16
      %v428 = vpop.permute.xlu0 %427
      %431 = vrot.lane.b32.xlu0 %v377, 32
      %v432 = vpop.permute.xlu0 %431
      %435 = vrot.lane.b32.xlu0 %v395, 48
      %v436 = vpop.permute.xlu0 %435
      %439 = vrot.lane.b32.xlu0 %v386, 64
      %v440 = vpop.permute.xlu0 %439
      %443 = vrot.lane.b32.xlu0 %v396, 80
      %v444 = vpop.permute.xlu0 %443
      %447 = vrot.lane.b32.xlu0 %v393, 96
      %v448 = vpop.permute.xlu0 %447
      %451 = vrot.lane.b32.xlu0 %v397, 112
      %v452 = vpop.permute.xlu0 %451
      %vm454 = vcmask 130048
      %v455 = vsel %vm454, %v302, %v400
      %vm456 = vcmask 261120
      %v457 = vsel %vm456, %v455, %v404
      %vm458 = vcmask 392192
      %v459 = vsel %vm458, %v457, %v408
      %vm460 = vcmask 523264
      %v461 = vsel %vm460, %v459, %v412
      %vm462 = vcmask 654336
      %v463 = vsel %vm462, %v461, %v416
      %vm464 = vcmask 785408
      %v465 = vsel %vm464, %v463, %v420
      %vm466 = vcmask 916480
      %v467 = vsel %vm466, %v465, %v424
      %v468 = vsel %vm454, %v370, %v428
      %v469 = vsel %vm456, %v468, %v432
      %v470 = vsel %vm458, %v469, %v436
      %v471 = vsel %vm460, %v470, %v440
      %v472 = vsel %vm462, %v471, %v444
      %v473 = vsel %vm464, %v472, %v448
      %v474 = vsel %vm466, %v473, %v452
      %483 = vrot.lane.b32.xlu0 %v241, 127
      %v484 = vpop.permute.xlu0 %483
      %485 = vrot.lane.b32.xlu0 %v242, 127
      %v486 = vpop.permute.xlu0 %485
      %487 = vrot.lane.b32.xlu0 %v244, 127
      %v488 = vpop.permute.xlu0 %487
      %489 = vrot.lane.b32.xlu0 %v245, 127
      %v490 = vpop.permute.xlu0 %489
      %491 = vrot.lane.b32.xlu0 %v247, 127
      %v492 = vpop.permute.xlu0 %491
      %493 = vrot.lane.b32.xlu0 %v248, 127
      %v494 = vpop.permute.xlu0 %493
      %495 = vrot.lane.b32.xlu0 %v250, 127
      %v496 = vpop.permute.xlu0 %495
      %497 = vrot.lane.b32.xlu0 %v251, 127
      %v498 = vpop.permute.xlu0 %497
      %v507 = vcombine.low %v484, %v492
      %v508 = vcombine.high %v484, %v492
      %v510 = vunpack.c.l.s4 1983009808
      %v511 = vunpack.c.0.s8 %v510
      %v512 = vlaneseq
      %v513 = vshrl.u32 %v512, 7
      %v514 = vsub.s32 %v511, %v513
      %v515 = vrot.slane %v507, %v514
      %v517 = vunpack.c.l.s4 1983009808
      %v518 = vunpack.c.0.s8 %v517
      %v519 = vlaneseq
      %v520 = vshrl.u32 %v519, 7
      %v521 = vsub.s32 %v518, %v520
      %v522 = vrot.slane %v508, %v521
      %v523 = vcombine.low %v488, %v496
      %v524 = vcombine.high %v488, %v496
      %v526 = vunpack.c.l.s4 1983009808
      %v527 = vunpack.c.0.s8 %v526
      %v528 = vlaneseq
      %v529 = vshrl.u32 %v528, 7
      %v530 = vsub.s32 %v527, %v529
      %v531 = vrot.slane %v523, %v530
      %v533 = vunpack.c.l.s4 1983009808
      %v534 = vunpack.c.0.s8 %v533
      %v535 = vlaneseq
      %v536 = vshrl.u32 %v535, 7
      %v537 = vsub.s32 %v534, %v536
      %v538 = vrot.slane %v524, %v537
      %v539 = vcombine.low %v515, %v531
      %v540 = vcombine.high %v515, %v531
      %v542 = vunpack.c.l.s4 1934713408
      %v543 = vunpack.c.0.s8 %v542
      %v544 = vlaneseq
      %v545 = vshrl.u32 %v544, 7
      %v546 = vsub.s32 %v543, %v545
      %v547 = vrot.slane %v539, %v546
      %v549 = vunpack.c.l.s4 1934713408
      %v550 = vunpack.c.0.s8 %v549
      %v551 = vlaneseq
      %v552 = vshrl.u32 %v551, 7
      %v553 = vsub.s32 %v550, %v552
      %v554 = vrot.slane %v540, %v553
      %v555 = vcombine.low %v522, %v538
      %v556 = vcombine.high %v522, %v538
      %v558 = vunpack.c.l.s4 1934713408
      %v559 = vunpack.c.0.s8 %v558
      %v560 = vlaneseq
      %v561 = vshrl.u32 %v560, 7
      %v562 = vsub.s32 %v559, %v561
      %v563 = vrot.slane %v555, %v562
      %v565 = vunpack.c.l.s4 1934713408
      %v566 = vunpack.c.0.s8 %v565
      %v567 = vlaneseq
      %v568 = vshrl.u32 %v567, 7
      %v569 = vsub.s32 %v566, %v568
      %v570 = vrot.slane %v556, %v569
      %v571 = vcombine.high %v547, 0.0
      %v572 = vcombine.high %v554, 0.0
      %v573 = vcombine.high %v563, 0.0
      %v574 = vcombine.high %v570, 0.0
      %v575 = vcombine.low %v486, %v494
      %v576 = vcombine.high %v486, %v494
      %v578 = vunpack.c.l.s4 1983009808
      %v579 = vunpack.c.0.s8 %v578
      %v580 = vlaneseq
      %v581 = vshrl.u32 %v580, 7
      %v582 = vsub.s32 %v579, %v581
      %v583 = vrot.slane %v575, %v582
      %v585 = vunpack.c.l.s4 1983009808
      %v586 = vunpack.c.0.s8 %v585
      %v587 = vlaneseq
      %v588 = vshrl.u32 %v587, 7
      %v589 = vsub.s32 %v586, %v588
      %v590 = vrot.slane %v576, %v589
      %v591 = vcombine.low %v490, %v498
      %v592 = vcombine.high %v490, %v498
      %v594 = vunpack.c.l.s4 1983009808
      %v595 = vunpack.c.0.s8 %v594
      %v596 = vlaneseq
      %v597 = vshrl.u32 %v596, 7
      %v598 = vsub.s32 %v595, %v597
      %v599 = vrot.slane %v591, %v598
      %v601 = vunpack.c.l.s4 1983009808
      %v602 = vunpack.c.0.s8 %v601
      %v603 = vlaneseq
      %v604 = vshrl.u32 %v603, 7
      %v605 = vsub.s32 %v602, %v604
      %v606 = vrot.slane %v592, %v605
      %v607 = vcombine.low %v583, %v599
      %v608 = vcombine.high %v583, %v599
      %v610 = vunpack.c.l.s4 1934713408
      %v611 = vunpack.c.0.s8 %v610
      %v612 = vlaneseq
      %v613 = vshrl.u32 %v612, 7
      %v614 = vsub.s32 %v611, %v613
      %v615 = vrot.slane %v607, %v614
      %v617 = vunpack.c.l.s4 1934713408
      %v618 = vunpack.c.0.s8 %v617
      %v619 = vlaneseq
      %v620 = vshrl.u32 %v619, 7
      %v621 = vsub.s32 %v618, %v620
      %v622 = vrot.slane %v608, %v621
      %v623 = vcombine.low %v590, %v606
      %v624 = vcombine.high %v590, %v606
      %v626 = vunpack.c.l.s4 1934713408
      %v627 = vunpack.c.0.s8 %v626
      %v628 = vlaneseq
      %v629 = vshrl.u32 %v628, 7
      %v630 = vsub.s32 %v627, %v629
      %v631 = vrot.slane %v623, %v630
      %v633 = vunpack.c.l.s4 1934713408
      %v634 = vunpack.c.0.s8 %v633
      %v635 = vlaneseq
      %v636 = vshrl.u32 %v635, 7
      %v637 = vsub.s32 %v634, %v636
      %v638 = vrot.slane %v624, %v637
      %v639 = vcombine.high %v615, 0.0
      %v640 = vcombine.high %v622, 0.0
      %v641 = vcombine.high %v631, 0.0
      %v642 = vcombine.high %v638, 0.0
      %644 = vrot.lane.b32.xlu0 %v571, 16
      %v645 = vpop.permute.xlu0 %644
      %648 = vrot.lane.b32.xlu0 %v554, 32
      %v649 = vpop.permute.xlu0 %648
      %652 = vrot.lane.b32.xlu0 %v572, 48
      %v653 = vpop.permute.xlu0 %652
      %656 = vrot.lane.b32.xlu0 %v563, 64
      %v657 = vpop.permute.xlu0 %656
      %660 = vrot.lane.b32.xlu0 %v573, 80
      %v661 = vpop.permute.xlu0 %660
      %664 = vrot.lane.b32.xlu0 %v570, 96
      %v665 = vpop.permute.xlu0 %664
      %668 = vrot.lane.b32.xlu0 %v574, 112
      %v669 = vpop.permute.xlu0 %668
      %672 = vrot.lane.b32.xlu0 %v639, 16
      %v673 = vpop.permute.xlu0 %672
      %676 = vrot.lane.b32.xlu0 %v622, 32
      %v677 = vpop.permute.xlu0 %676
      %680 = vrot.lane.b32.xlu0 %v640, 48
      %v681 = vpop.permute.xlu0 %680
      %684 = vrot.lane.b32.xlu0 %v631, 64
      %v685 = vpop.permute.xlu0 %684
      %688 = vrot.lane.b32.xlu0 %v641, 80
      %v689 = vpop.permute.xlu0 %688
      %692 = vrot.lane.b32.xlu0 %v638, 96
      %v693 = vpop.permute.xlu0 %692
      %696 = vrot.lane.b32.xlu0 %v642, 112
      %v697 = vpop.permute.xlu0 %696
      %v699 = vsel %vm454, %v547, %v645
      %v700 = vsel %vm456, %v699, %v649
      %v701 = vsel %vm458, %v700, %v653
      %v702 = vsel %vm460, %v701, %v657
      %v703 = vsel %vm462, %v702, %v661
      %v704 = vsel %vm464, %v703, %v665
      %v705 = vsel %vm466, %v704, %v669
      %v706 = vsel %vm454, %v615, %v673
      %v707 = vsel %vm456, %v706, %v677
      %v708 = vsel %vm458, %v707, %v681
      %v709 = vsel %vm460, %v708, %v685
      %v710 = vsel %vm462, %v709, %v689
      %v711 = vsel %vm464, %v710, %v693
      %v712 = vsel %vm466, %v711, %v697
      %713 = vrot.lane.b32.xlu0 %v241, 126
      %v714 = vpop.permute.xlu0 %713
      %715 = vrot.lane.b32.xlu0 %v242, 126
      %v716 = vpop.permute.xlu0 %715
      %717 = vrot.lane.b32.xlu0 %v244, 126
      %v718 = vpop.permute.xlu0 %717
      %719 = vrot.lane.b32.xlu0 %v245, 126
      %v720 = vpop.permute.xlu0 %719
      %721 = vrot.lane.b32.xlu0 %v247, 126
      %v722 = vpop.permute.xlu0 %721
      %723 = vrot.lane.b32.xlu0 %v248, 126
      %v724 = vpop.permute.xlu0 %723
      %725 = vrot.lane.b32.xlu0 %v250, 126
      %v726 = vpop.permute.xlu0 %725
      %727 = vrot.lane.b32.xlu0 %v251, 126
      %v728 = vpop.permute.xlu0 %727
      %v737 = vcombine.low %v714, %v722
      %v738 = vcombine.high %v714, %v722
      %v740 = vunpack.c.l.s4 1983009808
      %v741 = vunpack.c.0.s8 %v740
      %v742 = vlaneseq
      %v743 = vshrl.u32 %v742, 7
      %v744 = vsub.s32 %v741, %v743
      %v745 = vrot.slane %v737, %v744
      %v747 = vunpack.c.l.s4 1983009808
      %v748 = vunpack.c.0.s8 %v747
      %v749 = vlaneseq
      %v750 = vshrl.u32 %v749, 7
      %v751 = vsub.s32 %v748, %v750
      %v752 = vrot.slane %v738, %v751
      %v753 = vcombine.low %v718, %v726
      %v754 = vcombine.high %v718, %v726
      %v756 = vunpack.c.l.s4 1983009808
      %v757 = vunpack.c.0.s8 %v756
      %v758 = vlaneseq
      %v759 = vshrl.u32 %v758, 7
      %v760 = vsub.s32 %v757, %v759
      %v761 = vrot.slane %v753, %v760
      %v763 = vunpack.c.l.s4 1983009808
      %v764 = vunpack.c.0.s8 %v763
      %v765 = vlaneseq
      %v766 = vshrl.u32 %v765, 7
      %v767 = vsub.s32 %v764, %v766
      %v768 = vrot.slane %v754, %v767
      %v769 = vcombine.low %v745, %v761
      %v770 = vcombine.high %v745, %v761
      %v772 = vunpack.c.l.s4 1934713408
      %v773 = vunpack.c.0.s8 %v772
      %v774 = vlaneseq
      %v775 = vshrl.u32 %v774, 7
      %v776 = vsub.s32 %v773, %v775
      %v777 = vrot.slane %v769, %v776
      %v779 = vunpack.c.l.s4 1934713408
      %v780 = vunpack.c.0.s8 %v779
      %v781 = vlaneseq
      %v782 = vshrl.u32 %v781, 7
      %v783 = vsub.s32 %v780, %v782
      %v784 = vrot.slane %v770, %v783
      %v785 = vcombine.low %v752, %v768
      %v786 = vcombine.high %v752, %v768
      %v788 = vunpack.c.l.s4 1934713408
      %v789 = vunpack.c.0.s8 %v788
      %v790 = vlaneseq
      %v791 = vshrl.u32 %v790, 7
      %v792 = vsub.s32 %v789, %v791
      %v793 = vrot.slane %v785, %v792
      %v795 = vunpack.c.l.s4 1934713408
      %v796 = vunpack.c.0.s8 %v795
      %v797 = vlaneseq
      %v798 = vshrl.u32 %v797, 7
      %v799 = vsub.s32 %v796, %v798
      %v800 = vrot.slane %v786, %v799
      %v801 = vcombine.high %v777, 0.0
      %v802 = vcombine.high %v784, 0.0
      %v803 = vcombine.high %v793, 0.0
      %v804 = vcombine.high %v800, 0.0
      %v805 = vcombine.low %v716, %v724
      %v806 = vcombine.high %v716, %v724
      %v808 = vunpack.c.l.s4 1983009808
      %v809 = vunpack.c.0.s8 %v808
      %v810 = vlaneseq
      %v811 = vshrl.u32 %v810, 7
      %v812 = vsub.s32 %v809, %v811
      %v813 = vrot.slane %v805, %v812
      %v815 = vunpack.c.l.s4 1983009808
      %v816 = vunpack.c.0.s8 %v815
      %v817 = vlaneseq
      %v818 = vshrl.u32 %v817, 7
      %v819 = vsub.s32 %v816, %v818
      %v820 = vrot.slane %v806, %v819
      %v821 = vcombine.low %v720, %v728
      %v822 = vcombine.high %v720, %v728
      %v824 = vunpack.c.l.s4 1983009808
      %v825 = vunpack.c.0.s8 %v824
      %v826 = vlaneseq
      %v827 = vshrl.u32 %v826, 7
      %v828 = vsub.s32 %v825, %v827
      %v829 = vrot.slane %v821, %v828
      %v831 = vunpack.c.l.s4 1983009808
      %v832 = vunpack.c.0.s8 %v831
      %v833 = vlaneseq
      %v834 = vshrl.u32 %v833, 7
      %v835 = vsub.s32 %v832, %v834
      %v836 = vrot.slane %v822, %v835
      %v837 = vcombine.low %v813, %v829
      %v838 = vcombine.high %v813, %v829
      %v840 = vunpack.c.l.s4 1934713408
      %v841 = vunpack.c.0.s8 %v840
      %v842 = vlaneseq
      %v843 = vshrl.u32 %v842, 7
      %v844 = vsub.s32 %v841, %v843
      %v845 = vrot.slane %v837, %v844
      %v847 = vunpack.c.l.s4 1934713408
      %v848 = vunpack.c.0.s8 %v847
      %v849 = vlaneseq
      %v850 = vshrl.u32 %v849, 7
      %v851 = vsub.s32 %v848, %v850
      %v852 = vrot.slane %v838, %v851
      %v853 = vcombine.low %v820, %v836
      %v854 = vcombine.high %v820, %v836
      %v856 = vunpack.c.l.s4 1934713408
      %v857 = vunpack.c.0.s8 %v856
      %v858 = vlaneseq
      %v859 = vshrl.u32 %v858, 7
      %v860 = vsub.s32 %v857, %v859
      %v861 = vrot.slane %v853, %v860
      %v863 = vunpack.c.l.s4 1934713408
      %v864 = vunpack.c.0.s8 %v863
      %v865 = vlaneseq
      %v866 = vshrl.u32 %v865, 7
      %v867 = vsub.s32 %v864, %v866
      %v868 = vrot.slane %v854, %v867
      %v869 = vcombine.high %v845, 0.0
      %v870 = vcombine.high %v852, 0.0
      %v871 = vcombine.high %v861, 0.0
      %v872 = vcombine.high %v868, 0.0
      %874 = vrot.lane.b32.xlu0 %v801, 16
      %v875 = vpop.permute.xlu0 %874
      %878 = vrot.lane.b32.xlu0 %v784, 32
      %v879 = vpop.permute.xlu0 %878
      %882 = vrot.lane.b32.xlu0 %v802, 48
      %v883 = vpop.permute.xlu0 %882
      %886 = vrot.lane.b32.xlu0 %v793, 64
      %v887 = vpop.permute.xlu0 %886
      %890 = vrot.lane.b32.xlu0 %v803, 80
      %v891 = vpop.permute.xlu0 %890
      %894 = vrot.lane.b32.xlu0 %v800, 96
      %v895 = vpop.permute.xlu0 %894
      %898 = vrot.lane.b32.xlu0 %v804, 112
      %v899 = vpop.permute.xlu0 %898
      %902 = vrot.lane.b32.xlu0 %v869, 16
      %v903 = vpop.permute.xlu0 %902
      %906 = vrot.lane.b32.xlu0 %v852, 32
      %v907 = vpop.permute.xlu0 %906
      %910 = vrot.lane.b32.xlu0 %v870, 48
      %v911 = vpop.permute.xlu0 %910
      %914 = vrot.lane.b32.xlu0 %v861, 64
      %v915 = vpop.permute.xlu0 %914
      %918 = vrot.lane.b32.xlu0 %v871, 80
      %v919 = vpop.permute.xlu0 %918
      %922 = vrot.lane.b32.xlu0 %v868, 96
      %v923 = vpop.permute.xlu0 %922
      %926 = vrot.lane.b32.xlu0 %v872, 112
      %v927 = vpop.permute.xlu0 %926
      %v929 = vsel %vm454, %v777, %v875
      %v930 = vsel %vm456, %v929, %v879
      %v931 = vsel %vm458, %v930, %v883
      %v932 = vsel %vm460, %v931, %v887
      %v933 = vsel %vm462, %v932, %v891
      %v934 = vsel %vm464, %v933, %v895
      %v935 = vsel %vm466, %v934, %v899
      %v936 = vsel %vm454, %v845, %v903
      %v937 = vsel %vm456, %v936, %v907
      %v938 = vsel %vm458, %v937, %v911
      %v939 = vsel %vm460, %v938, %v915
      %v940 = vsel %vm462, %v939, %v919
      %v941 = vsel %vm464, %v940, %v923
      %v942 = vsel %vm466, %v941, %v927
      %vm947 = vcmask 1046528
      %v948 = vrot.slane %v241, 1
      %v949 = vrot.slane %v242, 1
      %v950 = vsel %vm947, %v948, %v949
      %v951 = vrot.slane %v243, 1
      %v952 = vsel %vm947, %v949, %v951
      %v953 = vrot.slane %v244, 1
      %v954 = vrot.slane %v245, 1
      %v955 = vsel %vm947, %v953, %v954
      %v956 = vrot.slane %v246, 1
      %v957 = vsel %vm947, %v954, %v956
      %v958 = vrot.slane %v247, 1
      %v959 = vrot.slane %v248, 1
      %v960 = vsel %vm947, %v958, %v959
      %v961 = vrot.slane %v249, 1
      %v962 = vsel %vm947, %v959, %v961
      %v963 = vrot.slane %v250, 1
      %v964 = vrot.slane %v251, 1
      %v965 = vsel %vm947, %v963, %v964
      %v966 = vrot.slane %v252, 1
      %v967 = vsel %vm947, %v964, %v966
      %v976 = vcombine.low %v950, %v960
      %v977 = vcombine.high %v950, %v960
      %v979 = vunpack.c.l.s4 1983009808
      %v980 = vunpack.c.0.s8 %v979
      %v981 = vlaneseq
      %v982 = vshrl.u32 %v981, 7
      %v983 = vsub.s32 %v980, %v982
      %v984 = vrot.slane %v976, %v983
      %v986 = vunpack.c.l.s4 1983009808
      %v987 = vunpack.c.0.s8 %v986
      %v988 = vlaneseq
      %v989 = vshrl.u32 %v988, 7
      %v990 = vsub.s32 %v987, %v989
      %v991 = vrot.slane %v977, %v990
      %v992 = vcombine.low %v955, %v965
      %v993 = vcombine.high %v955, %v965
      %v995 = vunpack.c.l.s4 1983009808
      %v996 = vunpack.c.0.s8 %v995
      %v997 = vlaneseq
      %v998 = vshrl.u32 %v997, 7
      %v999 = vsub.s32 %v996, %v998
      %v1000 = vrot.slane %v992, %v999
      %v1002 = vunpack.c.l.s4 1983009808
      %v1003 = vunpack.c.0.s8 %v1002
      %v1004 = vlaneseq
      %v1005 = vshrl.u32 %v1004, 7
      %v1006 = vsub.s32 %v1003, %v1005
      %v1007 = vrot.slane %v993, %v1006
      %v1008 = vcombine.low %v984, %v1000
      %v1009 = vcombine.high %v984, %v1000
      %v1011 = vunpack.c.l.s4 1934713408
      %v1012 = vunpack.c.0.s8 %v1011
      %v1013 = vlaneseq
      %v1014 = vshrl.u32 %v1013, 7
      %v1015 = vsub.s32 %v1012, %v1014
      %v1016 = vrot.slane %v1008, %v1015
      %v1018 = vunpack.c.l.s4 1934713408
      %v1019 = vunpack.c.0.s8 %v1018
      %v1020 = vlaneseq
      %v1021 = vshrl.u32 %v1020, 7
      %v1022 = vsub.s32 %v1019, %v1021
      %v1023 = vrot.slane %v1009, %v1022
      %v1024 = vcombine.low %v991, %v1007
      %v1025 = vcombine.high %v991, %v1007
      %v1027 = vunpack.c.l.s4 1934713408
      %v1028 = vunpack.c.0.s8 %v1027
      %v1029 = vlaneseq
      %v1030 = vshrl.u32 %v1029, 7
      %v1031 = vsub.s32 %v1028, %v1030
      %v1032 = vrot.slane %v1024, %v1031
      %v1034 = vunpack.c.l.s4 1934713408
      %v1035 = vunpack.c.0.s8 %v1034
      %v1036 = vlaneseq
      %v1037 = vshrl.u32 %v1036, 7
      %v1038 = vsub.s32 %v1035, %v1037
      %v1039 = vrot.slane %v1025, %v1038
      %v1040 = vcombine.high %v1016, 0.0
      %v1041 = vcombine.high %v1023, 0.0
      %v1042 = vcombine.high %v1032, 0.0
      %v1043 = vcombine.high %v1039, 0.0
      %v1044 = vcombine.low %v952, %v962
      %v1045 = vcombine.high %v952, %v962
      %v1047 = vunpack.c.l.s4 1983009808
      %v1048 = vunpack.c.0.s8 %v1047
      %v1049 = vlaneseq
      %v1050 = vshrl.u32 %v1049, 7
      %v1051 = vsub.s32 %v1048, %v1050
      %v1052 = vrot.slane %v1044, %v1051
      %v1054 = vunpack.c.l.s4 1983009808
      %v1055 = vunpack.c.0.s8 %v1054
      %v1056 = vlaneseq
      %v1057 = vshrl.u32 %v1056, 7
      %v1058 = vsub.s32 %v1055, %v1057
      %v1059 = vrot.slane %v1045, %v1058
      %v1060 = vcombine.low %v957, %v967
      %v1061 = vcombine.high %v957, %v967
      %v1063 = vunpack.c.l.s4 1983009808
      %v1064 = vunpack.c.0.s8 %v1063
      %v1065 = vlaneseq
      %v1066 = vshrl.u32 %v1065, 7
      %v1067 = vsub.s32 %v1064, %v1066
      %v1068 = vrot.slane %v1060, %v1067
      %v1070 = vunpack.c.l.s4 1983009808
      %v1071 = vunpack.c.0.s8 %v1070
      %v1072 = vlaneseq
      %v1073 = vshrl.u32 %v1072, 7
      %v1074 = vsub.s32 %v1071, %v1073
      %v1075 = vrot.slane %v1061, %v1074
      %v1076 = vcombine.low %v1052, %v1068
      %v1077 = vcombine.high %v1052, %v1068
      %v1079 = vunpack.c.l.s4 1934713408
      %v1080 = vunpack.c.0.s8 %v1079
      %v1081 = vlaneseq
      %v1082 = vshrl.u32 %v1081, 7
      %v1083 = vsub.s32 %v1080, %v1082
      %v1084 = vrot.slane %v1076, %v1083
      %v1086 = vunpack.c.l.s4 1934713408
      %v1087 = vunpack.c.0.s8 %v1086
      %v1088 = vlaneseq
      %v1089 = vshrl.u32 %v1088, 7
      %v1090 = vsub.s32 %v1087, %v1089
      %v1091 = vrot.slane %v1077, %v1090
      %v1092 = vcombine.low %v1059, %v1075
      %v1093 = vcombine.high %v1059, %v1075
      %v1095 = vunpack.c.l.s4 1934713408
      %v1096 = vunpack.c.0.s8 %v1095
      %v1097 = vlaneseq
      %v1098 = vshrl.u32 %v1097, 7
      %v1099 = vsub.s32 %v1096, %v1098
      %v1100 = vrot.slane %v1092, %v1099
      %v1102 = vunpack.c.l.s4 1934713408
      %v1103 = vunpack.c.0.s8 %v1102
      %v1104 = vlaneseq
      %v1105 = vshrl.u32 %v1104, 7
      %v1106 = vsub.s32 %v1103, %v1105
      %v1107 = vrot.slane %v1093, %v1106
      %v1108 = vcombine.high %v1084, 0.0
      %v1109 = vcombine.high %v1091, 0.0
      %v1110 = vcombine.high %v1100, 0.0
      %v1111 = vcombine.high %v1107, 0.0
      %1113 = vrot.lane.b32.xlu0 %v1040, 16
      %v1114 = vpop.permute.xlu0 %1113
      %1117 = vrot.lane.b32.xlu0 %v1023, 32
      %v1118 = vpop.permute.xlu0 %1117
      %1121 = vrot.lane.b32.xlu0 %v1041, 48
      %v1122 = vpop.permute.xlu0 %1121
      %1125 = vrot.lane.b32.xlu0 %v1032, 64
      %v1126 = vpop.permute.xlu0 %1125
      %1129 = vrot.lane.b32.xlu0 %v1042, 80
      %v1130 = vpop.permute.xlu0 %1129
      %1133 = vrot.lane.b32.xlu0 %v1039, 96
      %v1134 = vpop.permute.xlu0 %1133
      %1137 = vrot.lane.b32.xlu0 %v1043, 112
      %v1138 = vpop.permute.xlu0 %1137
      %1141 = vrot.lane.b32.xlu0 %v1108, 16
      %v1142 = vpop.permute.xlu0 %1141
      %1145 = vrot.lane.b32.xlu0 %v1091, 32
      %v1146 = vpop.permute.xlu0 %1145
      %1149 = vrot.lane.b32.xlu0 %v1109, 48
      %v1150 = vpop.permute.xlu0 %1149
      %1153 = vrot.lane.b32.xlu0 %v1100, 64
      %v1154 = vpop.permute.xlu0 %1153
      %1157 = vrot.lane.b32.xlu0 %v1110, 80
      %v1158 = vpop.permute.xlu0 %1157
      %1161 = vrot.lane.b32.xlu0 %v1107, 96
      %v1162 = vpop.permute.xlu0 %1161
      %1165 = vrot.lane.b32.xlu0 %v1111, 112
      %v1166 = vpop.permute.xlu0 %1165
      %v1168 = vsel %vm454, %v1016, %v1114
      %v1169 = vsel %vm456, %v1168, %v1118
      %v1170 = vsel %vm458, %v1169, %v1122
      %v1171 = vsel %vm460, %v1170, %v1126
      %v1172 = vsel %vm462, %v1171, %v1130
      %v1173 = vsel %vm464, %v1172, %v1134
      %v1174 = vsel %vm466, %v1173, %v1138
      %v1175 = vsel %vm454, %v1084, %v1142
      %v1176 = vsel %vm456, %v1175, %v1146
      %v1177 = vsel %vm458, %v1176, %v1150
      %v1178 = vsel %vm460, %v1177, %v1154
      %v1179 = vsel %vm462, %v1178, %v1158
      %v1180 = vsel %vm464, %v1179, %v1162
      %v1181 = vsel %vm466, %v1180, %v1166
      %1182 = vrot.lane.b32.xlu0 %v950, 127
      %v1183 = vpop.permute.xlu0 %1182
      %1184 = vrot.lane.b32.xlu0 %v952, 127
      %v1185 = vpop.permute.xlu0 %1184
      %1186 = vrot.lane.b32.xlu0 %v955, 127
      %v1187 = vpop.permute.xlu0 %1186
      %1188 = vrot.lane.b32.xlu0 %v957, 127
      %v1189 = vpop.permute.xlu0 %1188
      %1190 = vrot.lane.b32.xlu0 %v960, 127
      %v1191 = vpop.permute.xlu0 %1190
      %1192 = vrot.lane.b32.xlu0 %v962, 127
      %v1193 = vpop.permute.xlu0 %1192
      %1194 = vrot.lane.b32.xlu0 %v965, 127
      %v1195 = vpop.permute.xlu0 %1194
      %1196 = vrot.lane.b32.xlu0 %v967, 127
      %v1197 = vpop.permute.xlu0 %1196
      %v1206 = vcombine.low %v1183, %v1191
      %v1207 = vcombine.high %v1183, %v1191
      %v1209 = vunpack.c.l.s4 1983009808
      %v1210 = vunpack.c.0.s8 %v1209
      %v1211 = vlaneseq
      %v1212 = vshrl.u32 %v1211, 7
      %v1213 = vsub.s32 %v1210, %v1212
      %v1214 = vrot.slane %v1206, %v1213
      %v1216 = vunpack.c.l.s4 1983009808
      %v1217 = vunpack.c.0.s8 %v1216
      %v1218 = vlaneseq
      %v1219 = vshrl.u32 %v1218, 7
      %v1220 = vsub.s32 %v1217, %v1219
      %v1221 = vrot.slane %v1207, %v1220
      %v1222 = vcombine.low %v1187, %v1195
      %v1223 = vcombine.high %v1187, %v1195
      %v1225 = vunpack.c.l.s4 1983009808
      %v1226 = vunpack.c.0.s8 %v1225
      %v1227 = vlaneseq
      %v1228 = vshrl.u32 %v1227, 7
      %v1229 = vsub.s32 %v1226, %v1228
      %v1230 = vrot.slane %v1222, %v1229
      %v1232 = vunpack.c.l.s4 1983009808
      %v1233 = vunpack.c.0.s8 %v1232
      %v1234 = vlaneseq
      %v1235 = vshrl.u32 %v1234, 7
      %v1236 = vsub.s32 %v1233, %v1235
      %v1237 = vrot.slane %v1223, %v1236
      %v1238 = vcombine.low %v1214, %v1230
      %v1239 = vcombine.high %v1214, %v1230
      %v1241 = vunpack.c.l.s4 1934713408
      %v1242 = vunpack.c.0.s8 %v1241
      %v1243 = vlaneseq
      %v1244 = vshrl.u32 %v1243, 7
      %v1245 = vsub.s32 %v1242, %v1244
      %v1246 = vrot.slane %v1238, %v1245
      %v1248 = vunpack.c.l.s4 1934713408
      %v1249 = vunpack.c.0.s8 %v1248
      %v1250 = vlaneseq
      %v1251 = vshrl.u32 %v1250, 7
      %v1252 = vsub.s32 %v1249, %v1251
      %v1253 = vrot.slane %v1239, %v1252
      %v1254 = vcombine.low %v1221, %v1237
      %v1255 = vcombine.high %v1221, %v1237
      %v1257 = vunpack.c.l.s4 1934713408
      %v1258 = vunpack.c.0.s8 %v1257
      %v1259 = vlaneseq
      %v1260 = vshrl.u32 %v1259, 7
      %v1261 = vsub.s32 %v1258, %v1260
      %v1262 = vrot.slane %v1254, %v1261
      %v1264 = vunpack.c.l.s4 1934713408
      %v1265 = vunpack.c.0.s8 %v1264
      %v1266 = vlaneseq
      %v1267 = vshrl.u32 %v1266, 7
      %v1268 = vsub.s32 %v1265, %v1267
      %v1269 = vrot.slane %v1255, %v1268
      %v1270 = vcombine.high %v1246, 0.0
      %v1271 = vcombine.high %v1253, 0.0
      %v1272 = vcombine.high %v1262, 0.0
      %v1273 = vcombine.high %v1269, 0.0
      %v1274 = vcombine.low %v1185, %v1193
      %v1275 = vcombine.high %v1185, %v1193
      %v1277 = vunpack.c.l.s4 1983009808
      %v1278 = vunpack.c.0.s8 %v1277
      %v1279 = vlaneseq
      %v1280 = vshrl.u32 %v1279, 7
      %v1281 = vsub.s32 %v1278, %v1280
      %v1282 = vrot.slane %v1274, %v1281
      %v1284 = vunpack.c.l.s4 1983009808
      %v1285 = vunpack.c.0.s8 %v1284
      %v1286 = vlaneseq
      %v1287 = vshrl.u32 %v1286, 7
      %v1288 = vsub.s32 %v1285, %v1287
      %v1289 = vrot.slane %v1275, %v1288
      %v1290 = vcombine.low %v1189, %v1197
      %v1291 = vcombine.high %v1189, %v1197
      %v1293 = vunpack.c.l.s4 1983009808
      %v1294 = vunpack.c.0.s8 %v1293
      %v1295 = vlaneseq
      %v1296 = vshrl.u32 %v1295, 7
      %v1297 = vsub.s32 %v1294, %v1296
      %v1298 = vrot.slane %v1290, %v1297
      %v1300 = vunpack.c.l.s4 1983009808
      %v1301 = vunpack.c.0.s8 %v1300
      %v1302 = vlaneseq
      %v1303 = vshrl.u32 %v1302, 7
      %v1304 = vsub.s32 %v1301, %v1303
      %v1305 = vrot.slane %v1291, %v1304
      %v1306 = vcombine.low %v1282, %v1298
      %v1307 = vcombine.high %v1282, %v1298
      %v1309 = vunpack.c.l.s4 1934713408
      %v1310 = vunpack.c.0.s8 %v1309
      %v1311 = vlaneseq
      %v1312 = vshrl.u32 %v1311, 7
      %v1313 = vsub.s32 %v1310, %v1312
      %v1314 = vrot.slane %v1306, %v1313
      %v1316 = vunpack.c.l.s4 1934713408
      %v1317 = vunpack.c.0.s8 %v1316
      %v1318 = vlaneseq
      %v1319 = vshrl.u32 %v1318, 7
      %v1320 = vsub.s32 %v1317, %v1319
      %v1321 = vrot.slane %v1307, %v1320
      %v1322 = vcombine.low %v1289, %v1305
      %v1323 = vcombine.high %v1289, %v1305
      %v1325 = vunpack.c.l.s4 1934713408
      %v1326 = vunpack.c.0.s8 %v1325
      %v1327 = vlaneseq
      %v1328 = vshrl.u32 %v1327, 7
      %v1329 = vsub.s32 %v1326, %v1328
      %v1330 = vrot.slane %v1322, %v1329
      %v1332 = vunpack.c.l.s4 1934713408
      %v1333 = vunpack.c.0.s8 %v1332
      %v1334 = vlaneseq
      %v1335 = vshrl.u32 %v1334, 7
      %v1336 = vsub.s32 %v1333, %v1335
      %v1337 = vrot.slane %v1323, %v1336
      %v1338 = vcombine.high %v1314, 0.0
      %v1339 = vcombine.high %v1321, 0.0
      %v1340 = vcombine.high %v1330, 0.0
      %v1341 = vcombine.high %v1337, 0.0
      %1343 = vrot.lane.b32.xlu0 %v1270, 16
      %v1344 = vpop.permute.xlu0 %1343
      %1347 = vrot.lane.b32.xlu0 %v1253, 32
      %v1348 = vpop.permute.xlu0 %1347
      %1351 = vrot.lane.b32.xlu0 %v1271, 48
      %v1352 = vpop.permute.xlu0 %1351
      %1355 = vrot.lane.b32.xlu0 %v1262, 64
      %v1356 = vpop.permute.xlu0 %1355
      %1359 = vrot.lane.b32.xlu0 %v1272, 80
      %v1360 = vpop.permute.xlu0 %1359
      %1363 = vrot.lane.b32.xlu0 %v1269, 96
      %v1364 = vpop.permute.xlu0 %1363
      %1367 = vrot.lane.b32.xlu0 %v1273, 112
      %v1368 = vpop.permute.xlu0 %1367
      %1371 = vrot.lane.b32.xlu0 %v1338, 16
      %v1372 = vpop.permute.xlu0 %1371
      %1375 = vrot.lane.b32.xlu0 %v1321, 32
      %v1376 = vpop.permute.xlu0 %1375
      %1379 = vrot.lane.b32.xlu0 %v1339, 48
      %v1380 = vpop.permute.xlu0 %1379
      %1383 = vrot.lane.b32.xlu0 %v1330, 64
      %v1384 = vpop.permute.xlu0 %1383
      %1387 = vrot.lane.b32.xlu0 %v1340, 80
      %v1388 = vpop.permute.xlu0 %1387
      %1391 = vrot.lane.b32.xlu0 %v1337, 96
      %v1392 = vpop.permute.xlu0 %1391
      %1395 = vrot.lane.b32.xlu0 %v1341, 112
      %v1396 = vpop.permute.xlu0 %1395
      %v1398 = vsel %vm454, %v1246, %v1344
      %v1399 = vsel %vm456, %v1398, %v1348
      %v1400 = vsel %vm458, %v1399, %v1352
      %v1401 = vsel %vm460, %v1400, %v1356
      %v1402 = vsel %vm462, %v1401, %v1360
      %v1403 = vsel %vm464, %v1402, %v1364
      %v1404 = vsel %vm466, %v1403, %v1368
      %v1405 = vsel %vm454, %v1314, %v1372
      %v1406 = vsel %vm456, %v1405, %v1376
      %v1407 = vsel %vm458, %v1406, %v1380
      %v1408 = vsel %vm460, %v1407, %v1384
      %v1409 = vsel %vm462, %v1408, %v1388
      %v1410 = vsel %vm464, %v1409, %v1392
      %v1411 = vsel %vm466, %v1410, %v1396
      %1412 = vrot.lane.b32.xlu0 %v950, 126
      %v1413 = vpop.permute.xlu0 %1412
      %1414 = vrot.lane.b32.xlu0 %v952, 126
      %v1415 = vpop.permute.xlu0 %1414
      %1416 = vrot.lane.b32.xlu0 %v955, 126
      %v1417 = vpop.permute.xlu0 %1416
      %1418 = vrot.lane.b32.xlu0 %v957, 126
      %v1419 = vpop.permute.xlu0 %1418
      %1420 = vrot.lane.b32.xlu0 %v960, 126
      %v1421 = vpop.permute.xlu0 %1420
      %1422 = vrot.lane.b32.xlu0 %v962, 126
      %v1423 = vpop.permute.xlu0 %1422
      %1424 = vrot.lane.b32.xlu0 %v965, 126
      %v1425 = vpop.permute.xlu0 %1424
      %1426 = vrot.lane.b32.xlu0 %v967, 126
      %v1427 = vpop.permute.xlu0 %1426
      %v1436 = vcombine.low %v1413, %v1421
      %v1437 = vcombine.high %v1413, %v1421
      %v1439 = vunpack.c.l.s4 1983009808
      %v1440 = vunpack.c.0.s8 %v1439
      %v1441 = vlaneseq
      %v1442 = vshrl.u32 %v1441, 7
      %v1443 = vsub.s32 %v1440, %v1442
      %v1444 = vrot.slane %v1436, %v1443
      %v1446 = vunpack.c.l.s4 1983009808
      %v1447 = vunpack.c.0.s8 %v1446
      %v1448 = vlaneseq
      %v1449 = vshrl.u32 %v1448, 7
      %v1450 = vsub.s32 %v1447, %v1449
      %v1451 = vrot.slane %v1437, %v1450
      %v1452 = vcombine.low %v1417, %v1425
      %v1453 = vcombine.high %v1417, %v1425
      %v1455 = vunpack.c.l.s4 1983009808
      %v1456 = vunpack.c.0.s8 %v1455
      %v1457 = vlaneseq
      %v1458 = vshrl.u32 %v1457, 7
      %v1459 = vsub.s32 %v1456, %v1458
      %v1460 = vrot.slane %v1452, %v1459
      %v1462 = vunpack.c.l.s4 1983009808
      %v1463 = vunpack.c.0.s8 %v1462
      %v1464 = vlaneseq
      %v1465 = vshrl.u32 %v1464, 7
      %v1466 = vsub.s32 %v1463, %v1465
      %v1467 = vrot.slane %v1453, %v1466
      %v1468 = vcombine.low %v1444, %v1460
      %v1469 = vcombine.high %v1444, %v1460
      %v1471 = vunpack.c.l.s4 1934713408
      %v1472 = vunpack.c.0.s8 %v1471
      %v1473 = vlaneseq
      %v1474 = vshrl.u32 %v1473, 7
      %v1475 = vsub.s32 %v1472, %v1474
      %v1476 = vrot.slane %v1468, %v1475
      %v1478 = vunpack.c.l.s4 1934713408
      %v1479 = vunpack.c.0.s8 %v1478
      %v1480 = vlaneseq
      %v1481 = vshrl.u32 %v1480, 7
      %v1482 = vsub.s32 %v1479, %v1481
      %v1483 = vrot.slane %v1469, %v1482
      %v1484 = vcombine.low %v1451, %v1467
      %v1485 = vcombine.high %v1451, %v1467
      %v1487 = vunpack.c.l.s4 1934713408
      %v1488 = vunpack.c.0.s8 %v1487
      %v1489 = vlaneseq
      %v1490 = vshrl.u32 %v1489, 7
      %v1491 = vsub.s32 %v1488, %v1490
      %v1492 = vrot.slane %v1484, %v1491
      %v1494 = vunpack.c.l.s4 1934713408
      %v1495 = vunpack.c.0.s8 %v1494
      %v1496 = vlaneseq
      %v1497 = vshrl.u32 %v1496, 7
      %v1498 = vsub.s32 %v1495, %v1497
      %v1499 = vrot.slane %v1485, %v1498
      %v1500 = vcombine.high %v1476, 0.0
      %v1501 = vcombine.high %v1483, 0.0
      %v1502 = vcombine.high %v1492, 0.0
      %v1503 = vcombine.high %v1499, 0.0
      %v1504 = vcombine.low %v1415, %v1423
      %v1505 = vcombine.high %v1415, %v1423
      %v1507 = vunpack.c.l.s4 1983009808
      %v1508 = vunpack.c.0.s8 %v1507
      %v1509 = vlaneseq
      %v1510 = vshrl.u32 %v1509, 7
      %v1511 = vsub.s32 %v1508, %v1510
      %v1512 = vrot.slane %v1504, %v1511
      %v1514 = vunpack.c.l.s4 1983009808
      %v1515 = vunpack.c.0.s8 %v1514
      %v1516 = vlaneseq
      %v1517 = vshrl.u32 %v1516, 7
      %v1518 = vsub.s32 %v1515, %v1517
      %v1519 = vrot.slane %v1505, %v1518
      %v1520 = vcombine.low %v1419, %v1427
      %v1521 = vcombine.high %v1419, %v1427
      %v1523 = vunpack.c.l.s4 1983009808
      %v1524 = vunpack.c.0.s8 %v1523
      %v1525 = vlaneseq
      %v1526 = vshrl.u32 %v1525, 7
      %v1527 = vsub.s32 %v1524, %v1526
      %v1528 = vrot.slane %v1520, %v1527
      %v1530 = vunpack.c.l.s4 1983009808
      %v1531 = vunpack.c.0.s8 %v1530
      %v1532 = vlaneseq
      %v1533 = vshrl.u32 %v1532, 7
      %v1534 = vsub.s32 %v1531, %v1533
      %v1535 = vrot.slane %v1521, %v1534
      %v1536 = vcombine.low %v1512, %v1528
      %v1537 = vcombine.high %v1512, %v1528
      %v1539 = vunpack.c.l.s4 1934713408
      %v1540 = vunpack.c.0.s8 %v1539
      %v1541 = vlaneseq
      %v1542 = vshrl.u32 %v1541, 7
      %v1543 = vsub.s32 %v1540, %v1542
      %v1544 = vrot.slane %v1536, %v1543
      %v1546 = vunpack.c.l.s4 1934713408
      %v1547 = vunpack.c.0.s8 %v1546
      %v1548 = vlaneseq
      %v1549 = vshrl.u32 %v1548, 7
      %v1550 = vsub.s32 %v1547, %v1549
      %v1551 = vrot.slane %v1537, %v1550
      %v1552 = vcombine.low %v1519, %v1535
      %v1553 = vcombine.high %v1519, %v1535
      %v1555 = vunpack.c.l.s4 1934713408
      %v1556 = vunpack.c.0.s8 %v1555
      %v1557 = vlaneseq
      %v1558 = vshrl.u32 %v1557, 7
      %v1559 = vsub.s32 %v1556, %v1558
      %v1560 = vrot.slane %v1552, %v1559
      %v1562 = vunpack.c.l.s4 1934713408
      %v1563 = vunpack.c.0.s8 %v1562
      %v1564 = vlaneseq
      %v1565 = vshrl.u32 %v1564, 7
      %v1566 = vsub.s32 %v1563, %v1565
      %v1567 = vrot.slane %v1553, %v1566
      %v1568 = vcombine.high %v1544, 0.0
      %v1569 = vcombine.high %v1551, 0.0
      %v1570 = vcombine.high %v1560, 0.0
      %v1571 = vcombine.high %v1567, 0.0
      %1573 = vrot.lane.b32.xlu0 %v1500, 16
      %v1574 = vpop.permute.xlu0 %1573
      %1577 = vrot.lane.b32.xlu0 %v1483, 32
      %v1578 = vpop.permute.xlu0 %1577
      %1581 = vrot.lane.b32.xlu0 %v1501, 48
      %v1582 = vpop.permute.xlu0 %1581
      %1585 = vrot.lane.b32.xlu0 %v1492, 64
      %v1586 = vpop.permute.xlu0 %1585
      %1589 = vrot.lane.b32.xlu0 %v1502, 80
      %v1590 = vpop.permute.xlu0 %1589
      %1593 = vrot.lane.b32.xlu0 %v1499, 96
      %v1594 = vpop.permute.xlu0 %1593
      %1597 = vrot.lane.b32.xlu0 %v1503, 112
      %v1598 = vpop.permute.xlu0 %1597
      %1601 = vrot.lane.b32.xlu0 %v1568, 16
      %v1602 = vpop.permute.xlu0 %1601
      %1605 = vrot.lane.b32.xlu0 %v1551, 32
      %v1606 = vpop.permute.xlu0 %1605
      %1609 = vrot.lane.b32.xlu0 %v1569, 48
      %v1610 = vpop.permute.xlu0 %1609
      %1613 = vrot.lane.b32.xlu0 %v1560, 64
      %v1614 = vpop.permute.xlu0 %1613
      %1617 = vrot.lane.b32.xlu0 %v1570, 80
      %v1618 = vpop.permute.xlu0 %1617
      %1621 = vrot.lane.b32.xlu0 %v1567, 96
      %v1622 = vpop.permute.xlu0 %1621
      %1625 = vrot.lane.b32.xlu0 %v1571, 112
      %v1626 = vpop.permute.xlu0 %1625
      %v1628 = vsel %vm454, %v1476, %v1574
      %v1629 = vsel %vm456, %v1628, %v1578
      %v1630 = vsel %vm458, %v1629, %v1582
      %v1631 = vsel %vm460, %v1630, %v1586
      %v1632 = vsel %vm462, %v1631, %v1590
      %v1633 = vsel %vm464, %v1632, %v1594
      %v1634 = vsel %vm466, %v1633, %v1598
      %v1635 = vsel %vm454, %v1544, %v1602
      %v1636 = vsel %vm456, %v1635, %v1606
      %v1637 = vsel %vm458, %v1636, %v1610
      %v1638 = vsel %vm460, %v1637, %v1614
      %v1639 = vsel %vm462, %v1638, %v1618
      %v1640 = vsel %vm464, %v1639, %v1622
      %v1641 = vsel %vm466, %v1640, %v1626
      %vm1642 = vcmask 1045504
      %v1643 = vrot.slane %v241, 2
      %v1644 = vrot.slane %v242, 2
      %v1645 = vsel %vm1642, %v1643, %v1644
      %v1646 = vrot.slane %v243, 2
      %v1647 = vsel %vm1642, %v1644, %v1646
      %v1648 = vrot.slane %v244, 2
      %v1649 = vrot.slane %v245, 2
      %v1650 = vsel %vm1642, %v1648, %v1649
      %v1651 = vrot.slane %v246, 2
      %v1652 = vsel %vm1642, %v1649, %v1651
      %v1653 = vrot.slane %v247, 2
      %v1654 = vrot.slane %v248, 2
      %v1655 = vsel %vm1642, %v1653, %v1654
      %v1656 = vrot.slane %v249, 2
      %v1657 = vsel %vm1642, %v1654, %v1656
      %v1658 = vrot.slane %v250, 2
      %v1659 = vrot.slane %v251, 2
      %v1660 = vsel %vm1642, %v1658, %v1659
      %v1661 = vrot.slane %v252, 2
      %v1662 = vsel %vm1642, %v1659, %v1661
      %v1671 = vcombine.low %v1645, %v1655
      %v1672 = vcombine.high %v1645, %v1655
      %v1674 = vunpack.c.l.s4 1983009808
      %v1675 = vunpack.c.0.s8 %v1674
      %v1676 = vlaneseq
      %v1677 = vshrl.u32 %v1676, 7
      %v1678 = vsub.s32 %v1675, %v1677
      %v1679 = vrot.slane %v1671, %v1678
      %v1681 = vunpack.c.l.s4 1983009808
      %v1682 = vunpack.c.0.s8 %v1681
      %v1683 = vlaneseq
      %v1684 = vshrl.u32 %v1683, 7
      %v1685 = vsub.s32 %v1682, %v1684
      %v1686 = vrot.slane %v1672, %v1685
      %v1687 = vcombine.low %v1650, %v1660
      %v1688 = vcombine.high %v1650, %v1660
      %v1690 = vunpack.c.l.s4 1983009808
      %v1691 = vunpack.c.0.s8 %v1690
      %v1692 = vlaneseq
      %v1693 = vshrl.u32 %v1692, 7
      %v1694 = vsub.s32 %v1691, %v1693
      %v1695 = vrot.slane %v1687, %v1694
      %v1697 = vunpack.c.l.s4 1983009808
      %v1698 = vunpack.c.0.s8 %v1697
      %v1699 = vlaneseq
      %v1700 = vshrl.u32 %v1699, 7
      %v1701 = vsub.s32 %v1698, %v1700
      %v1702 = vrot.slane %v1688, %v1701
      %v1703 = vcombine.low %v1679, %v1695
      %v1704 = vcombine.high %v1679, %v1695
      %v1706 = vunpack.c.l.s4 1934713408
      %v1707 = vunpack.c.0.s8 %v1706
      %v1708 = vlaneseq
      %v1709 = vshrl.u32 %v1708, 7
      %v1710 = vsub.s32 %v1707, %v1709
      %v1711 = vrot.slane %v1703, %v1710
      %v1713 = vunpack.c.l.s4 1934713408
      %v1714 = vunpack.c.0.s8 %v1713
      %v1715 = vlaneseq
      %v1716 = vshrl.u32 %v1715, 7
      %v1717 = vsub.s32 %v1714, %v1716
      %v1718 = vrot.slane %v1704, %v1717
      %v1719 = vcombine.low %v1686, %v1702
      %v1720 = vcombine.high %v1686, %v1702
      %v1722 = vunpack.c.l.s4 1934713408
      %v1723 = vunpack.c.0.s8 %v1722
      %v1724 = vlaneseq
      %v1725 = vshrl.u32 %v1724, 7
      %v1726 = vsub.s32 %v1723, %v1725
      %v1727 = vrot.slane %v1719, %v1726
      %v1729 = vunpack.c.l.s4 1934713408
      %v1730 = vunpack.c.0.s8 %v1729
      %v1731 = vlaneseq
      %v1732 = vshrl.u32 %v1731, 7
      %v1733 = vsub.s32 %v1730, %v1732
      %v1734 = vrot.slane %v1720, %v1733
      %v1735 = vcombine.high %v1711, 0.0
      %v1736 = vcombine.high %v1718, 0.0
      %v1737 = vcombine.high %v1727, 0.0
      %v1738 = vcombine.high %v1734, 0.0
      %v1739 = vcombine.low %v1647, %v1657
      %v1740 = vcombine.high %v1647, %v1657
      %v1742 = vunpack.c.l.s4 1983009808
      %v1743 = vunpack.c.0.s8 %v1742
      %v1744 = vlaneseq
      %v1745 = vshrl.u32 %v1744, 7
      %v1746 = vsub.s32 %v1743, %v1745
      %v1747 = vrot.slane %v1739, %v1746
      %v1749 = vunpack.c.l.s4 1983009808
      %v1750 = vunpack.c.0.s8 %v1749
      %v1751 = vlaneseq
      %v1752 = vshrl.u32 %v1751, 7
      %v1753 = vsub.s32 %v1750, %v1752
      %v1754 = vrot.slane %v1740, %v1753
      %v1755 = vcombine.low %v1652, %v1662
      %v1756 = vcombine.high %v1652, %v1662
      %v1758 = vunpack.c.l.s4 1983009808
      %v1759 = vunpack.c.0.s8 %v1758
      %v1760 = vlaneseq
      %v1761 = vshrl.u32 %v1760, 7
      %v1762 = vsub.s32 %v1759, %v1761
      %v1763 = vrot.slane %v1755, %v1762
      %v1765 = vunpack.c.l.s4 1983009808
      %v1766 = vunpack.c.0.s8 %v1765
      %v1767 = vlaneseq
      %v1768 = vshrl.u32 %v1767, 7
      %v1769 = vsub.s32 %v1766, %v1768
      %v1770 = vrot.slane %v1756, %v1769
      %v1771 = vcombine.low %v1747, %v1763
      %v1772 = vcombine.high %v1747, %v1763
      %v1774 = vunpack.c.l.s4 1934713408
      %v1775 = vunpack.c.0.s8 %v1774
      %v1776 = vlaneseq
      %v1777 = vshrl.u32 %v1776, 7
      %v1778 = vsub.s32 %v1775, %v1777
      %v1779 = vrot.slane %v1771, %v1778
      %v1781 = vunpack.c.l.s4 1934713408
      %v1782 = vunpack.c.0.s8 %v1781
      %v1783 = vlaneseq
      %v1784 = vshrl.u32 %v1783, 7
      %v1785 = vsub.s32 %v1782, %v1784
      %v1786 = vrot.slane %v1772, %v1785
      %v1787 = vcombine.low %v1754, %v1770
      %v1788 = vcombine.high %v1754, %v1770
      %v1790 = vunpack.c.l.s4 1934713408
      %v1791 = vunpack.c.0.s8 %v1790
      %v1792 = vlaneseq
      %v1793 = vshrl.u32 %v1792, 7
      %v1794 = vsub.s32 %v1791, %v1793
      %v1795 = vrot.slane %v1787, %v1794
      %v1797 = vunpack.c.l.s4 1934713408
      %v1798 = vunpack.c.0.s8 %v1797
      %v1799 = vlaneseq
      %v1800 = vshrl.u32 %v1799, 7
      %v1801 = vsub.s32 %v1798, %v1800
      %v1802 = vrot.slane %v1788, %v1801
      %v1803 = vcombine.high %v1779, 0.0
      %v1804 = vcombine.high %v1786, 0.0
      %v1805 = vcombine.high %v1795, 0.0
      %v1806 = vcombine.high %v1802, 0.0
      %1808 = vrot.lane.b32.xlu0 %v1735, 16
      %v1809 = vpop.permute.xlu0 %1808
      %1812 = vrot.lane.b32.xlu0 %v1718, 32
      %v1813 = vpop.permute.xlu0 %1812
      %1816 = vrot.lane.b32.xlu0 %v1736, 48
      %v1817 = vpop.permute.xlu0 %1816
      %1820 = vrot.lane.b32.xlu0 %v1727, 64
      %v1821 = vpop.permute.xlu0 %1820
      %1824 = vrot.lane.b32.xlu0 %v1737, 80
      %v1825 = vpop.permute.xlu0 %1824
      %1828 = vrot.lane.b32.xlu0 %v1734, 96
      %v1829 = vpop.permute.xlu0 %1828
      %1832 = vrot.lane.b32.xlu0 %v1738, 112
      %v1833 = vpop.permute.xlu0 %1832
      %1836 = vrot.lane.b32.xlu0 %v1803, 16
      %v1837 = vpop.permute.xlu0 %1836
      %1840 = vrot.lane.b32.xlu0 %v1786, 32
      %v1841 = vpop.permute.xlu0 %1840
      %1844 = vrot.lane.b32.xlu0 %v1804, 48
      %v1845 = vpop.permute.xlu0 %1844
      %1848 = vrot.lane.b32.xlu0 %v1795, 64
      %v1849 = vpop.permute.xlu0 %1848
      %1852 = vrot.lane.b32.xlu0 %v1805, 80
      %v1853 = vpop.permute.xlu0 %1852
      %1856 = vrot.lane.b32.xlu0 %v1802, 96
      %v1857 = vpop.permute.xlu0 %1856
      %1860 = vrot.lane.b32.xlu0 %v1806, 112
      %v1861 = vpop.permute.xlu0 %1860
      %v1863 = vsel %vm454, %v1711, %v1809
      %v1864 = vsel %vm456, %v1863, %v1813
      %v1865 = vsel %vm458, %v1864, %v1817
      %v1866 = vsel %vm460, %v1865, %v1821
      %v1867 = vsel %vm462, %v1866, %v1825
      %v1868 = vsel %vm464, %v1867, %v1829
      %v1869 = vsel %vm466, %v1868, %v1833
      %v1870 = vsel %vm454, %v1779, %v1837
      %v1871 = vsel %vm456, %v1870, %v1841
      %v1872 = vsel %vm458, %v1871, %v1845
      %v1873 = vsel %vm460, %v1872, %v1849
      %v1874 = vsel %vm462, %v1873, %v1853
      %v1875 = vsel %vm464, %v1874, %v1857
      %v1876 = vsel %vm466, %v1875, %v1861
      %1877 = vrot.lane.b32.xlu0 %v1645, 127
      %v1878 = vpop.permute.xlu0 %1877
      %1879 = vrot.lane.b32.xlu0 %v1647, 127
      %v1880 = vpop.permute.xlu0 %1879
      %1881 = vrot.lane.b32.xlu0 %v1650, 127
      %v1882 = vpop.permute.xlu0 %1881
      %1883 = vrot.lane.b32.xlu0 %v1652, 127
      %v1884 = vpop.permute.xlu0 %1883
      %1885 = vrot.lane.b32.xlu0 %v1655, 127
      %v1886 = vpop.permute.xlu0 %1885
      %1887 = vrot.lane.b32.xlu0 %v1657, 127
      %v1888 = vpop.permute.xlu0 %1887
      %1889 = vrot.lane.b32.xlu0 %v1660, 127
      %v1890 = vpop.permute.xlu0 %1889
      %1891 = vrot.lane.b32.xlu0 %v1662, 127
      %v1892 = vpop.permute.xlu0 %1891
      %v1901 = vcombine.low %v1878, %v1886
      %v1902 = vcombine.high %v1878, %v1886
      %v1904 = vunpack.c.l.s4 1983009808
      %v1905 = vunpack.c.0.s8 %v1904
      %v1906 = vlaneseq
      %v1907 = vshrl.u32 %v1906, 7
      %v1908 = vsub.s32 %v1905, %v1907
      %v1909 = vrot.slane %v1901, %v1908
      %v1911 = vunpack.c.l.s4 1983009808
      %v1912 = vunpack.c.0.s8 %v1911
      %v1913 = vlaneseq
      %v1914 = vshrl.u32 %v1913, 7
      %v1915 = vsub.s32 %v1912, %v1914
      %v1916 = vrot.slane %v1902, %v1915
      %v1917 = vcombine.low %v1882, %v1890
      %v1918 = vcombine.high %v1882, %v1890
      %v1920 = vunpack.c.l.s4 1983009808
      %v1921 = vunpack.c.0.s8 %v1920
      %v1922 = vlaneseq
      %v1923 = vshrl.u32 %v1922, 7
      %v1924 = vsub.s32 %v1921, %v1923
      %v1925 = vrot.slane %v1917, %v1924
      %v1927 = vunpack.c.l.s4 1983009808
      %v1928 = vunpack.c.0.s8 %v1927
      %v1929 = vlaneseq
      %v1930 = vshrl.u32 %v1929, 7
      %v1931 = vsub.s32 %v1928, %v1930
      %v1932 = vrot.slane %v1918, %v1931
      %v1933 = vcombine.low %v1909, %v1925
      %v1934 = vcombine.high %v1909, %v1925
      %v1936 = vunpack.c.l.s4 1934713408
      %v1937 = vunpack.c.0.s8 %v1936
      %v1938 = vlaneseq
      %v1939 = vshrl.u32 %v1938, 7
      %v1940 = vsub.s32 %v1937, %v1939
      %v1941 = vrot.slane %v1933, %v1940
      %v1943 = vunpack.c.l.s4 1934713408
      %v1944 = vunpack.c.0.s8 %v1943
      %v1945 = vlaneseq
      %v1946 = vshrl.u32 %v1945, 7
      %v1947 = vsub.s32 %v1944, %v1946
      %v1948 = vrot.slane %v1934, %v1947
      %v1949 = vcombine.low %v1916, %v1932
      %v1950 = vcombine.high %v1916, %v1932
      %v1952 = vunpack.c.l.s4 1934713408
      %v1953 = vunpack.c.0.s8 %v1952
      %v1954 = vlaneseq
      %v1955 = vshrl.u32 %v1954, 7
      %v1956 = vsub.s32 %v1953, %v1955
      %v1957 = vrot.slane %v1949, %v1956
      %v1959 = vunpack.c.l.s4 1934713408
      %v1960 = vunpack.c.0.s8 %v1959
      %v1961 = vlaneseq
      %v1962 = vshrl.u32 %v1961, 7
      %v1963 = vsub.s32 %v1960, %v1962
      %v1964 = vrot.slane %v1950, %v1963
      %v1965 = vcombine.high %v1941, 0.0
      %v1966 = vcombine.high %v1948, 0.0
      %v1967 = vcombine.high %v1957, 0.0
      %v1968 = vcombine.high %v1964, 0.0
      %v1969 = vcombine.low %v1880, %v1888
      %v1970 = vcombine.high %v1880, %v1888
      %v1972 = vunpack.c.l.s4 1983009808
      %v1973 = vunpack.c.0.s8 %v1972
      %v1974 = vlaneseq
      %v1975 = vshrl.u32 %v1974, 7
      %v1976 = vsub.s32 %v1973, %v1975
      %v1977 = vrot.slane %v1969, %v1976
      %v1979 = vunpack.c.l.s4 1983009808
      %v1980 = vunpack.c.0.s8 %v1979
      %v1981 = vlaneseq
      %v1982 = vshrl.u32 %v1981, 7
      %v1983 = vsub.s32 %v1980, %v1982
      %v1984 = vrot.slane %v1970, %v1983
      %v1985 = vcombine.low %v1884, %v1892
      %v1986 = vcombine.high %v1884, %v1892
      %v1988 = vunpack.c.l.s4 1983009808
      %v1989 = vunpack.c.0.s8 %v1988
      %v1990 = vlaneseq
      %v1991 = vshrl.u32 %v1990, 7
      %v1992 = vsub.s32 %v1989, %v1991
      %v1993 = vrot.slane %v1985, %v1992
      %v1995 = vunpack.c.l.s4 1983009808
      %v1996 = vunpack.c.0.s8 %v1995
      %v1997 = vlaneseq
      %v1998 = vshrl.u32 %v1997, 7
      %v1999 = vsub.s32 %v1996, %v1998
      %v2000 = vrot.slane %v1986, %v1999
      %v2001 = vcombine.low %v1977, %v1993
      %v2002 = vcombine.high %v1977, %v1993
      %v2004 = vunpack.c.l.s4 1934713408
      %v2005 = vunpack.c.0.s8 %v2004
      %v2006 = vlaneseq
      %v2007 = vshrl.u32 %v2006, 7
      %v2008 = vsub.s32 %v2005, %v2007
      %v2009 = vrot.slane %v2001, %v2008
      %v2011 = vunpack.c.l.s4 1934713408
      %v2012 = vunpack.c.0.s8 %v2011
      %v2013 = vlaneseq
      %v2014 = vshrl.u32 %v2013, 7
      %v2015 = vsub.s32 %v2012, %v2014
      %v2016 = vrot.slane %v2002, %v2015
      %v2017 = vcombine.low %v1984, %v2000
      %v2018 = vcombine.high %v1984, %v2000
      %v2020 = vunpack.c.l.s4 1934713408
      %v2021 = vunpack.c.0.s8 %v2020
      %v2022 = vlaneseq
      %v2023 = vshrl.u32 %v2022, 7
      %v2024 = vsub.s32 %v2021, %v2023
      %v2025 = vrot.slane %v2017, %v2024
      %v2027 = vunpack.c.l.s4 1934713408
      %v2028 = vunpack.c.0.s8 %v2027
      %v2029 = vlaneseq
      %v2030 = vshrl.u32 %v2029, 7
      %v2031 = vsub.s32 %v2028, %v2030
      %v2032 = vrot.slane %v2018, %v2031
      %v2033 = vcombine.high %v2009, 0.0
      %v2034 = vcombine.high %v2016, 0.0
      %v2035 = vcombine.high %v2025, 0.0
      %v2036 = vcombine.high %v2032, 0.0
      %2038 = vrot.lane.b32.xlu0 %v1965, 16
      %v2039 = vpop.permute.xlu0 %2038
      %2042 = vrot.lane.b32.xlu0 %v1948, 32
      %v2043 = vpop.permute.xlu0 %2042
      %2046 = vrot.lane.b32.xlu0 %v1966, 48
      %v2047 = vpop.permute.xlu0 %2046
      %2050 = vrot.lane.b32.xlu0 %v1957, 64
      %v2051 = vpop.permute.xlu0 %2050
      %2054 = vrot.lane.b32.xlu0 %v1967, 80
      %v2055 = vpop.permute.xlu0 %2054
      %2058 = vrot.lane.b32.xlu0 %v1964, 96
      %v2059 = vpop.permute.xlu0 %2058
      %2062 = vrot.lane.b32.xlu0 %v1968, 112
      %v2063 = vpop.permute.xlu0 %2062
      %2066 = vrot.lane.b32.xlu0 %v2033, 16
      %v2067 = vpop.permute.xlu0 %2066
      %2070 = vrot.lane.b32.xlu0 %v2016, 32
      %v2071 = vpop.permute.xlu0 %2070
      %2074 = vrot.lane.b32.xlu0 %v2034, 48
      %v2075 = vpop.permute.xlu0 %2074
      %2078 = vrot.lane.b32.xlu0 %v2025, 64
      %v2079 = vpop.permute.xlu0 %2078
      %2082 = vrot.lane.b32.xlu0 %v2035, 80
      %v2083 = vpop.permute.xlu0 %2082
      %2086 = vrot.lane.b32.xlu0 %v2032, 96
      %v2087 = vpop.permute.xlu0 %2086
      %2090 = vrot.lane.b32.xlu0 %v2036, 112
      %v2091 = vpop.permute.xlu0 %2090
      %v2093 = vsel %vm454, %v1941, %v2039
      %v2094 = vsel %vm456, %v2093, %v2043
      %v2095 = vsel %vm458, %v2094, %v2047
      %v2096 = vsel %vm460, %v2095, %v2051
      %v2097 = vsel %vm462, %v2096, %v2055
      %v2098 = vsel %vm464, %v2097, %v2059
      %v2099 = vsel %vm466, %v2098, %v2063
      %v2100 = vsel %vm454, %v2009, %v2067
      %v2101 = vsel %vm456, %v2100, %v2071
      %v2102 = vsel %vm458, %v2101, %v2075
      %v2103 = vsel %vm460, %v2102, %v2079
      %v2104 = vsel %vm462, %v2103, %v2083
      %v2105 = vsel %vm464, %v2104, %v2087
      %v2106 = vsel %vm466, %v2105, %v2091
      %2107 = vrot.lane.b32.xlu0 %v1645, 126
      %v2108 = vpop.permute.xlu0 %2107
      %2109 = vrot.lane.b32.xlu0 %v1647, 126
      %v2110 = vpop.permute.xlu0 %2109
      %2111 = vrot.lane.b32.xlu0 %v1650, 126
      %v2112 = vpop.permute.xlu0 %2111
      %2113 = vrot.lane.b32.xlu0 %v1652, 126
      %v2114 = vpop.permute.xlu0 %2113
      %2115 = vrot.lane.b32.xlu0 %v1655, 126
      %v2116 = vpop.permute.xlu0 %2115
      %2117 = vrot.lane.b32.xlu0 %v1657, 126
      %v2118 = vpop.permute.xlu0 %2117
      %2119 = vrot.lane.b32.xlu0 %v1660, 126
      %v2120 = vpop.permute.xlu0 %2119
      %2121 = vrot.lane.b32.xlu0 %v1662, 126
      %v2122 = vpop.permute.xlu0 %2121
      %v2131 = vcombine.low %v2108, %v2116
      %v2132 = vcombine.high %v2108, %v2116
      %v2134 = vunpack.c.l.s4 1983009808
      %v2135 = vunpack.c.0.s8 %v2134
      %v2136 = vlaneseq
      %v2137 = vshrl.u32 %v2136, 7
      %v2138 = vsub.s32 %v2135, %v2137
      %v2139 = vrot.slane %v2131, %v2138
      %v2141 = vunpack.c.l.s4 1983009808
      %v2142 = vunpack.c.0.s8 %v2141
      %v2143 = vlaneseq
      %v2144 = vshrl.u32 %v2143, 7
      %v2145 = vsub.s32 %v2142, %v2144
      %v2146 = vrot.slane %v2132, %v2145
      %v2147 = vcombine.low %v2112, %v2120
      %v2148 = vcombine.high %v2112, %v2120
      %v2150 = vunpack.c.l.s4 1983009808
      %v2151 = vunpack.c.0.s8 %v2150
      %v2152 = vlaneseq
      %v2153 = vshrl.u32 %v2152, 7
      %v2154 = vsub.s32 %v2151, %v2153
      %v2155 = vrot.slane %v2147, %v2154
      %v2157 = vunpack.c.l.s4 1983009808
      %v2158 = vunpack.c.0.s8 %v2157
      %v2159 = vlaneseq
      %v2160 = vshrl.u32 %v2159, 7
      %v2161 = vsub.s32 %v2158, %v2160
      %v2162 = vrot.slane %v2148, %v2161
      %v2163 = vcombine.low %v2139, %v2155
      %v2164 = vcombine.high %v2139, %v2155
      %v2166 = vunpack.c.l.s4 1934713408
      %v2167 = vunpack.c.0.s8 %v2166
      %v2168 = vlaneseq
      %v2169 = vshrl.u32 %v2168, 7
      %v2170 = vsub.s32 %v2167, %v2169
      %v2171 = vrot.slane %v2163, %v2170
      %v2173 = vunpack.c.l.s4 1934713408
      %v2174 = vunpack.c.0.s8 %v2173
      %v2175 = vlaneseq
      %v2176 = vshrl.u32 %v2175, 7
      %v2177 = vsub.s32 %v2174, %v2176
      %v2178 = vrot.slane %v2164, %v2177
      %v2179 = vcombine.low %v2146, %v2162
      %v2180 = vcombine.high %v2146, %v2162
      %v2182 = vunpack.c.l.s4 1934713408
      %v2183 = vunpack.c.0.s8 %v2182
      %v2184 = vlaneseq
      %v2185 = vshrl.u32 %v2184, 7
      %v2186 = vsub.s32 %v2183, %v2185
      %v2187 = vrot.slane %v2179, %v2186
      %v2189 = vunpack.c.l.s4 1934713408
      %v2190 = vunpack.c.0.s8 %v2189
      %v2191 = vlaneseq
      %v2192 = vshrl.u32 %v2191, 7
      %v2193 = vsub.s32 %v2190, %v2192
      %v2194 = vrot.slane %v2180, %v2193
      %v2195 = vcombine.high %v2171, 0.0
      %v2196 = vcombine.high %v2178, 0.0
      %v2197 = vcombine.high %v2187, 0.0
      %v2198 = vcombine.high %v2194, 0.0
      %v2199 = vcombine.low %v2110, %v2118
      %v2200 = vcombine.high %v2110, %v2118
      %v2202 = vunpack.c.l.s4 1983009808
      %v2203 = vunpack.c.0.s8 %v2202
      %v2204 = vlaneseq
      %v2205 = vshrl.u32 %v2204, 7
      %v2206 = vsub.s32 %v2203, %v2205
      %v2207 = vrot.slane %v2199, %v2206
      %v2209 = vunpack.c.l.s4 1983009808
      %v2210 = vunpack.c.0.s8 %v2209
      %v2211 = vlaneseq
      %v2212 = vshrl.u32 %v2211, 7
      %v2213 = vsub.s32 %v2210, %v2212
      %v2214 = vrot.slane %v2200, %v2213
      %v2215 = vcombine.low %v2114, %v2122
      %v2216 = vcombine.high %v2114, %v2122
      %v2218 = vunpack.c.l.s4 1983009808
      %v2219 = vunpack.c.0.s8 %v2218
      %v2220 = vlaneseq
      %v2221 = vshrl.u32 %v2220, 7
      %v2222 = vsub.s32 %v2219, %v2221
      %v2223 = vrot.slane %v2215, %v2222
      %v2225 = vunpack.c.l.s4 1983009808
      %v2226 = vunpack.c.0.s8 %v2225
      %v2227 = vlaneseq
      %v2228 = vshrl.u32 %v2227, 7
      %v2229 = vsub.s32 %v2226, %v2228
      %v2230 = vrot.slane %v2216, %v2229
      %v2231 = vcombine.low %v2207, %v2223
      %v2232 = vcombine.high %v2207, %v2223
      %v2234 = vunpack.c.l.s4 1934713408
      %v2235 = vunpack.c.0.s8 %v2234
      %v2236 = vlaneseq
      %v2237 = vshrl.u32 %v2236, 7
      %v2238 = vsub.s32 %v2235, %v2237
      %v2239 = vrot.slane %v2231, %v2238
      %v2241 = vunpack.c.l.s4 1934713408
      %v2242 = vunpack.c.0.s8 %v2241
      %v2243 = vlaneseq
      %v2244 = vshrl.u32 %v2243, 7
      %v2245 = vsub.s32 %v2242, %v2244
      %v2246 = vrot.slane %v2232, %v2245
      %v2247 = vcombine.low %v2214, %v2230
      %v2248 = vcombine.high %v2214, %v2230
      %v2250 = vunpack.c.l.s4 1934713408
      %v2251 = vunpack.c.0.s8 %v2250
      %v2252 = vlaneseq
      %v2253 = vshrl.u32 %v2252, 7
      %v2254 = vsub.s32 %v2251, %v2253
      %v2255 = vrot.slane %v2247, %v2254
      %v2257 = vunpack.c.l.s4 1934713408
      %v2258 = vunpack.c.0.s8 %v2257
      %v2259 = vlaneseq
      %v2260 = vshrl.u32 %v2259, 7
      %v2261 = vsub.s32 %v2258, %v2260
      %v2262 = vrot.slane %v2248, %v2261
      %v2263 = vcombine.high %v2239, 0.0
      %v2264 = vcombine.high %v2246, 0.0
      %v2265 = vcombine.high %v2255, 0.0
      %v2266 = vcombine.high %v2262, 0.0
      %2268 = vrot.lane.b32.xlu0 %v2195, 16
      %v2269 = vpop.permute.xlu0 %2268
      %2272 = vrot.lane.b32.xlu0 %v2178, 32
      %v2273 = vpop.permute.xlu0 %2272
      %2276 = vrot.lane.b32.xlu0 %v2196, 48
      %v2277 = vpop.permute.xlu0 %2276
      %2280 = vrot.lane.b32.xlu0 %v2187, 64
      %v2281 = vpop.permute.xlu0 %2280
      %2284 = vrot.lane.b32.xlu0 %v2197, 80
      %v2285 = vpop.permute.xlu0 %2284
      %2288 = vrot.lane.b32.xlu0 %v2194, 96
      %v2289 = vpop.permute.xlu0 %2288
      %2292 = vrot.lane.b32.xlu0 %v2198, 112
      %v2293 = vpop.permute.xlu0 %2292
      %2296 = vrot.lane.b32.xlu0 %v2263, 16
      %v2297 = vpop.permute.xlu0 %2296
      %2300 = vrot.lane.b32.xlu0 %v2246, 32
      %v2301 = vpop.permute.xlu0 %2300
      %2304 = vrot.lane.b32.xlu0 %v2264, 48
      %v2305 = vpop.permute.xlu0 %2304
      %2308 = vrot.lane.b32.xlu0 %v2255, 64
      %v2309 = vpop.permute.xlu0 %2308
      %2312 = vrot.lane.b32.xlu0 %v2265, 80
      %v2313 = vpop.permute.xlu0 %2312
      %2316 = vrot.lane.b32.xlu0 %v2262, 96
      %v2317 = vpop.permute.xlu0 %2316
      %2320 = vrot.lane.b32.xlu0 %v2266, 112
      %v2321 = vpop.permute.xlu0 %2320
      %v2323 = vsel %vm454, %v2171, %v2269
      %v2324 = vsel %vm456, %v2323, %v2273
      %v2325 = vsel %vm458, %v2324, %v2277
      %v2326 = vsel %vm460, %v2325, %v2281
      %v2327 = vsel %vm462, %v2326, %v2285
      %v2328 = vsel %vm464, %v2327, %v2289
      %v2329 = vsel %vm466, %v2328, %v2293
      %v2330 = vsel %vm454, %v2239, %v2297
      %v2331 = vsel %vm456, %v2330, %v2301
      %v2332 = vsel %vm458, %v2331, %v2305
      %v2333 = vsel %vm460, %v2332, %v2309
      %v2334 = vsel %vm462, %v2333, %v2313
      %v2335 = vsel %vm464, %v2334, %v2317
      %v2336 = vsel %vm466, %v2335, %v2321
      %v2339 = vrot.slane %v705, 4
      %v2340 = vrot.slane %v712, 4
      %v2345 = vrot.slane %v1174, 4
      %v2346 = vrot.slane %v1181, 4
      %v2351 = vrot.slane %v1634, 4
      %v2352 = vrot.slane %v1641, 4
      %v2357 = vrot.slane %v2099, 4
      %v2358 = vrot.slane %v2106, 4
      %vm2361 = vcmask 1043456
      %v2362 = vsel %vm2361, %v467, %v2339
      %v2363 = vsel %vm2361, %v474, %v2340
      %v2364 = vsel %vm2361, %v935, %v2345
      %v2365 = vsel %vm2361, %v942, %v2346
      %v2366 = vsel %vm2361, %v1404, %v2351
      %v2367 = vsel %vm2361, %v1411, %v2352
      %v2368 = vsel %vm2361, %v1869, %v2357
      %v2369 = vsel %vm2361, %v1876, %v2358
      %v2370 = vld [vmem:[%s2] sm:$0xff]
      %v2371 = vld [vmem:[%s2 + $0x8] sm:$0xff]
      %v2372 = vld [vmem:[%s2 + $0x10] sm:$0xff]
      %v2373 = vld [vmem:[%s2 + $0x18] sm:$0x7]
      %v2374 = vld [vmem:[%s3] sm:$0xff]
      %v2375 = vld [vmem:[%s3 + $0x8] sm:$0xff]
      %v2376 = vld [vmem:[%s3 + $0x10] sm:$0xff]
      %v2377 = vld [vmem:[%s3 + $0x18] sm:$0x7]
      %2379 = vset.pattern.permute.xlu0 0
      %2380 = vperm.xlu0 %2379, %v2374
      %v2381 = vpop.permute.xlu0 %2380
      %2384 = vset.pattern.permute.xlu0 0
      %2385 = vperm.xlu0 %2384, %v2375
      %v2386 = vpop.permute.xlu0 %2385
      %2389 = vset.pattern.permute.xlu0 0
      %2390 = vperm.xlu0 %2389, %v2376
      %v2391 = vpop.permute.xlu0 %2390
      %2394 = vset.pattern.permute.xlu0 0
      %2395 = vperm.xlu0 %2394, %v2377
      %v2396 = vpop.permute.xlu0 %2395
      %vm2398 = vcmask 293888
      %v2400 = vsel %vm2398, %v2370, 0
      %v2403 = vsel %vm2398, %v2371, 0
      %v2406 = vsel %vm2398, %v2372, 0
      %v2409 = vsel %vm2398, %v2373, 0
      %v2412 = vsel %vm2361, %v2329, 0
      %v2415 = vsel %vm2361, %v2336, 0
      %2417 = vmatprep.subr.mxu0 %v2363
      %2418 = vmatpush1.msra.mxu0 %v2362
      %2419 = vmatprep.subr.mxu0 %v2365
      %2420 = vmatpush1.msra.mxu0 %v2364
      %2421 = vmatprep.subr.mxu0 %v2367
      %2422 = vmatpush1.msra.mxu0 %v2366
      %2423 = vmatprep.subr.mxu0 %v2369
      %2424 = vmatpush1.msra.mxu0 %v2368
      %2425 = vmatprep.subr.mxu0 %v2415
      %2426 = vmatpush1.msra.mxu0 %v2412
      %2427 = vmatprep.subr.mxu0 0.0
      %2428 = vmatpush1.msra.mxu0 0.0
      %2429 = vmatprep.subr.mxu0 0.0
      %2430 = vmatpush1.msra.mxu0 0.0
      %2431 = vmatprep.subr.mxu0 0.0
      %2432 = vmatpush1.msra.mxu0 0.0
      %2433 = vmatprep.subr.mxu0 0.0
      %2434 = vmatpush1.msra.mxu0 0.0
      %2435 = vmatprep.subr.mxu0 0.0
      %2436 = vmatpush1.msra.mxu0 0.0
      %2437 = vmatprep.subr.mxu0 0.0
      %2438 = vmatpush1.msra.mxu0 0.0
      %2439 = vmatprep.subr.mxu0 0.0
      %2440 = vmatpush1.msra.mxu0 0.0
      %2441 = vmatprep.subr.mxu0 0.0
      %2442 = vmatpush1.msra.mxu0 0.0
      %2443 = vmatprep.subr.mxu0 0.0
      %2444 = vmatpush1.msra.mxu0 0.0
      %2445 = vmatprep.subr.mxu0 0.0
      %2446 = vmatpush1.msra.mxu0 0.0
      %2447 = vmatprep.subr.mxu0 0.0
      %2448 = vmatpush1.msra.mxu0 0.0
      %2449 = vmatprep.subr.mxu0 0.0
      %2450 = vmatpush1.msra.mxu0 0.0
      %2451 = vmatprep.subr.mxu0 0.0
      %2452 = vmatpush1.msra.mxu0 0.0
      %2453 = vmatprep.subr.mxu0 0.0
      %2454 = vmatpush1.msra.mxu0 0.0
      %2455 = vmatprep.subr.mxu0 0.0
      %2456 = vmatpush1.msra.mxu0 0.0
      %2457 = vmatprep.subr.mxu0 0.0
      %2458 = vmatpush1.msra.mxu0 0.0
      %2459 = vmatprep.subr.mxu0 0.0
      %2460 = vmatpush1.msra.mxu0 0.0
      %2461 = vmatprep.subr.mxu0 0.0
      %2462 = vmatpush1.msra.mxu0 0.0
      %2463 = vmatprep.subr.mxu0 0.0
      %2464 = vmatpush1.msra.mxu0 0.0
      %2465 = vmatprep.subr.mxu0 0.0
      %2466 = vmatpush1.msra.mxu0 0.0
      %2467 = vmatprep.subr.mxu0 0.0
      %2468 = vmatpush1.msra.mxu0 0.0
      %2469 = vmatprep.subr.mxu0 0.0
      %2470 = vmatpush1.msra.mxu0 0.0
      %2471 = vmatprep.subr.mxu0 0.0
      %2472 = vmatpush1.msra.mxu0 0.0
      %2473 = vmatprep.subr.mxu0 0.0
      %2474 = vmatpush1.msra.mxu0 0.0
      %2475 = vmatprep.subr.mxu0 0.0
      %2476 = vmatpush1.msra.mxu0 0.0
      %2477 = vmatprep.subr.mxu0 0.0
      %2478 = vmatpush1.msra.mxu0 0.0
      %2479 = vmatprep.subr.mxu0 0.0
      %2480 = vmatpush1.msra.mxu0 0.0
      %2481 = vmatprep.mubr.f32.mxu0 0.0
      %2482 = vmatmul.mubr.f32.gmra.mrb[0].mxu0 %v2400
      %v2483 = vpop.f32.mrb[0].mxu0
      %v2484 = vadd.f32 %v2381, %v2483
      %v2485 = vpop.f32.mrb[0].mxu0
      %v2486 = vadd.f32 %v2381, %v2485
      %2487 = vmatprep.mubr.f32.mxu0 0.0
      %2488 = vmatmul.mubr.f32.gmra.mrb[0].mxu0 %v2403
      %v2489 = vpop.f32.mrb[0].mxu0
      %v2490 = vadd.f32 %v2386, %v2489
      %v2491 = vpop.f32.mrb[0].mxu0
      %v2492 = vadd.f32 %v2386, %v2491
      %2493 = vmatprep.mubr.f32.mxu0 0.0
      %2494 = vmatmul.mubr.f32.gmra.mrb[0].mxu0 %v2406
      %v2495 = vpop.f32.mrb[0].mxu0
      %v2496 = vadd.f32 %v2391, %v2495
      %v2497 = vpop.f32.mrb[0].mxu0
      %v2498 = vadd.f32 %v2391, %v2497
      %2499 = vmatprep.mubr.f32.mxu0 0.0
      %2500 = vmatmul.mubr.f32.gmra.mrb[0].mxu0 %v2409
      %v2501 = vpop.f32.mrb[0].mxu0
      %v2502 = vadd.f32 %v2396, %v2501
      %v2503 = vpop.f32.mrb[0].mxu0
      %v2504 = vadd.f32 %v2396, %v2503
      %2505 = vdwg.mxu0
      %v2506 = vcombine.low %v253, %v259
      %v2507 = vcombine.high %v253, %v259
      %v2509 = vunpack.c.l.s4 1983009808
      %v2510 = vunpack.c.0.s8 %v2509
      %v2511 = vlaneseq
      %v2512 = vshrl.u32 %v2511, 7
      %v2513 = vsub.s32 %v2510, %v2512
      %v2514 = vrot.slane %v2506, %v2513
      %v2516 = vunpack.c.l.s4 1983009808
      %v2517 = vunpack.c.0.s8 %v2516
      %v2518 = vlaneseq
      %v2519 = vshrl.u32 %v2518, 7
      %v2520 = vsub.s32 %v2517, %v2519
      %v2521 = vrot.slane %v2507, %v2520
      %v2522 = vld [vmem:[%s230 + $0x18] sm:$0xff]
      %v2523 = vcombine.high %v256, 0.0
      %v2525 = vunpack.c.l.s4 1983009808
      %v2526 = vunpack.c.0.s8 %v2525
      %v2527 = vlaneseq
      %v2528 = vshrl.u32 %v2527, 7
      %v2529 = vsub.s32 %v2526, %v2528
      %v2530 = vrot.slane %v2522, %v2529
      %v2532 = vunpack.c.l.s4 1983009808
      %v2533 = vunpack.c.0.s8 %v2532
      %v2534 = vlaneseq
      %v2535 = vshrl.u32 %v2534, 7
      %v2536 = vsub.s32 %v2533, %v2535
      %v2537 = vrot.slane %v2523, %v2536
      %v2538 = vcombine.low %v2514, %v2530
      %v2539 = vcombine.high %v2514, %v2530
      %v2541 = vunpack.c.l.s4 1934713408
      %v2542 = vunpack.c.0.s8 %v2541
      %v2543 = vlaneseq
      %v2544 = vshrl.u32 %v2543, 7
      %v2545 = vsub.s32 %v2542, %v2544
      %v2546 = vrot.slane %v2538, %v2545
      %v2548 = vunpack.c.l.s4 1934713408
      %v2549 = vunpack.c.0.s8 %v2548
      %v2550 = vlaneseq
      %v2551 = vshrl.u32 %v2550, 7
      %v2552 = vsub.s32 %v2549, %v2551
      %v2553 = vrot.slane %v2539, %v2552
      %v2554 = vcombine.low %v2521, %v2537
      %v2555 = vcombine.high %v2521, %v2537
      %v2557 = vunpack.c.l.s4 1934713408
      %v2558 = vunpack.c.0.s8 %v2557
      %v2559 = vlaneseq
      %v2560 = vshrl.u32 %v2559, 7
      %v2561 = vsub.s32 %v2558, %v2560
      %v2562 = vrot.slane %v2554, %v2561
      %v2564 = vunpack.c.l.s4 1934713408
      %v2565 = vunpack.c.0.s8 %v2564
      %v2566 = vlaneseq
      %v2567 = vshrl.u32 %v2566, 7
      %v2568 = vsub.s32 %v2565, %v2567
      %v2569 = vrot.slane %v2555, %v2568
      %v2570 = vcombine.high %v2546, 0.0
      %v2571 = vcombine.high %v2553, 0.0
      %v2572 = vcombine.high %v2562, 0.0
      %v2573 = vcombine.high %v2569, 0.0
      %v2574 = vcombine.low %v254, %v260
      %v2575 = vcombine.high %v254, %v260
      %v2577 = vunpack.c.l.s4 1983009808
      %v2578 = vunpack.c.0.s8 %v2577
      %v2579 = vlaneseq
      %v2580 = vshrl.u32 %v2579, 7
      %v2581 = vsub.s32 %v2578, %v2580
      %v2582 = vrot.slane %v2574, %v2581
      %v2584 = vunpack.c.l.s4 1983009808
      %v2585 = vunpack.c.0.s8 %v2584
      %v2586 = vlaneseq
      %v2587 = vshrl.u32 %v2586, 7
      %v2588 = vsub.s32 %v2585, %v2587
      %v2589 = vrot.slane %v2575, %v2588
      %v2590 = vld [vmem:[%s230 + $0x20] sm:$0xff]
      %v2591 = vcombine.high %v257, 0.0
      %v2593 = vunpack.c.l.s4 1983009808
      %v2594 = vunpack.c.0.s8 %v2593
      %v2595 = vlaneseq
      %v2596 = vshrl.u32 %v2595, 7
      %v2597 = vsub.s32 %v2594, %v2596
      %v2598 = vrot.slane %v2590, %v2597
      %v2600 = vunpack.c.l.s4 1983009808
      %v2601 = vunpack.c.0.s8 %v2600
      %v2602 = vlaneseq
      %v2603 = vshrl.u32 %v2602, 7
      %v2604 = vsub.s32 %v2601, %v2603
      %v2605 = vrot.slane %v2591, %v2604
      %v2606 = vcombine.low %v2582, %v2598
      %v2607 = vcombine.high %v2582, %v2598
      %v2609 = vunpack.c.l.s4 1934713408
      %v2610 = vunpack.c.0.s8 %v2609
      %v2611 = vlaneseq
      %v2612 = vshrl.u32 %v2611, 7
      %v2613 = vsub.s32 %v2610, %v2612
      %v2614 = vrot.slane %v2606, %v2613
      %v2616 = vunpack.c.l.s4 1934713408
      %v2617 = vunpack.c.0.s8 %v2616
      %v2618 = vlaneseq
      %v2619 = vshrl.u32 %v2618, 7
      %v2620 = vsub.s32 %v2617, %v2619
      %v2621 = vrot.slane %v2607, %v2620
      %v2622 = vcombine.low %v2589, %v2605
      %v2623 = vcombine.high %v2589, %v2605
      %v2625 = vunpack.c.l.s4 1934713408
      %v2626 = vunpack.c.0.s8 %v2625
      %v2627 = vlaneseq
      %v2628 = vshrl.u32 %v2627, 7
      %v2629 = vsub.s32 %v2626, %v2628
      %v2630 = vrot.slane %v2622, %v2629
      %v2632 = vunpack.c.l.s4 1934713408
      %v2633 = vunpack.c.0.s8 %v2632
      %v2634 = vlaneseq
      %v2635 = vshrl.u32 %v2634, 7
      %v2636 = vsub.s32 %v2633, %v2635
      %v2637 = vrot.slane %v2623, %v2636
      %v2638 = vcombine.high %v2614, 0.0
      %v2639 = vcombine.high %v2621, 0.0
      %v2640 = vcombine.high %v2630, 0.0
      %v2641 = vcombine.high %v2637, 0.0
      %2643 = vrot.lane.b32.xlu0 %v2570, 16
      %v2644 = vpop.permute.xlu0 %2643
      %2647 = vrot.lane.b32.xlu0 %v2553, 32
      %v2648 = vpop.permute.xlu0 %2647
      %2651 = vrot.lane.b32.xlu0 %v2571, 48
      %v2652 = vpop.permute.xlu0 %2651
      %2655 = vrot.lane.b32.xlu0 %v2562, 64
      %v2656 = vpop.permute.xlu0 %2655
      %2659 = vrot.lane.b32.xlu0 %v2572, 80
      %v2660 = vpop.permute.xlu0 %2659
      %2663 = vrot.lane.b32.xlu0 %v2569, 96
      %v2664 = vpop.permute.xlu0 %2663
      %2667 = vrot.lane.b32.xlu0 %v2573, 112
      %v2668 = vpop.permute.xlu0 %2667
      %2671 = vrot.lane.b32.xlu0 %v2638, 16
      %v2672 = vpop.permute.xlu0 %2671
      %2675 = vrot.lane.b32.xlu0 %v2621, 32
      %v2676 = vpop.permute.xlu0 %2675
      %2679 = vrot.lane.b32.xlu0 %v2639, 48
      %v2680 = vpop.permute.xlu0 %2679
      %2683 = vrot.lane.b32.xlu0 %v2630, 64
      %v2684 = vpop.permute.xlu0 %2683
      %2687 = vrot.lane.b32.xlu0 %v2640, 80
      %v2688 = vpop.permute.xlu0 %2687
      %2691 = vrot.lane.b32.xlu0 %v2637, 96
      %v2692 = vpop.permute.xlu0 %2691
      %2695 = vrot.lane.b32.xlu0 %v2641, 112
      %v2696 = vpop.permute.xlu0 %2695
      %v2698 = vsel %vm454, %v2546, %v2644
      %v2699 = vsel %vm456, %v2698, %v2648
      %v2700 = vsel %vm458, %v2699, %v2652
      %v2701 = vsel %vm460, %v2700, %v2656
      %v2702 = vsel %vm462, %v2701, %v2660
      %v2703 = vsel %vm464, %v2702, %v2664
      %v2704 = vsel %vm466, %v2703, %v2668
      %v2705 = vsel %vm454, %v2614, %v2672
      %v2706 = vsel %vm456, %v2705, %v2676
      %v2707 = vsel %vm458, %v2706, %v2680
      %v2708 = vsel %vm460, %v2707, %v2684
      %v2709 = vsel %vm462, %v2708, %v2688
      %v2710 = vsel %vm464, %v2709, %v2692
      %v2711 = vsel %vm466, %v2710, %v2696
      %v2712 = vmul.f32 %v2704, %v2484
      %v2713 = vmul.f32 %v2711, %v2486
      %v2714 = vadd.f32 %v2712, 0.0
      %v2715 = vadd.f32 %v2713, 0.0
      %2722 = vrot.lane.b32.xlu0 %v253, 127
      %v2723 = vpop.permute.xlu0 %2722
      %2724 = vrot.lane.b32.xlu0 %v254, 127
      %v2725 = vpop.permute.xlu0 %2724
      %2726 = vrot.lane.b32.xlu0 %v256, 127
      %v2727 = vpop.permute.xlu0 %2726
      %2728 = vrot.lane.b32.xlu0 %v257, 127
      %v2729 = vpop.permute.xlu0 %2728
      %2730 = vrot.lane.b32.xlu0 %v259, 127
      %v2731 = vpop.permute.xlu0 %2730
      %2732 = vrot.lane.b32.xlu0 %v260, 127
      %v2733 = vpop.permute.xlu0 %2732
      %v2740 = vcombine.low %v2723, %v2731
      %v2741 = vcombine.high %v2723, %v2731
      %v2743 = vunpack.c.l.s4 1983009808
      %v2744 = vunpack.c.0.s8 %v2743
      %v2745 = vlaneseq
      %v2746 = vshrl.u32 %v2745, 7
      %v2747 = vsub.s32 %v2744, %v2746
      %v2748 = vrot.slane %v2740, %v2747
      %v2750 = vunpack.c.l.s4 1983009808
      %v2751 = vunpack.c.0.s8 %v2750
      %v2752 = vlaneseq
      %v2753 = vshrl.u32 %v2752, 7
      %v2754 = vsub.s32 %v2751, %v2753
      %v2755 = vrot.slane %v2741, %v2754
      %v2756 = vcombine.high %v2727, 0.0
      %v2758 = vunpack.c.l.s4 1983009808
      %v2759 = vunpack.c.0.s8 %v2758
      %v2760 = vlaneseq
      %v2761 = vshrl.u32 %v2760, 7
      %v2762 = vsub.s32 %v2759, %v2761
      %v2763 = vrot.slane %v2727, %v2762
      %v2765 = vunpack.c.l.s4 1983009808
      %v2766 = vunpack.c.0.s8 %v2765
      %v2767 = vlaneseq
      %v2768 = vshrl.u32 %v2767, 7
      %v2769 = vsub.s32 %v2766, %v2768
      %v2770 = vrot.slane %v2756, %v2769
      %v2771 = vcombine.low %v2748, %v2763
      %v2772 = vcombine.high %v2748, %v2763
      %v2774 = vunpack.c.l.s4 1934713408
      %v2775 = vunpack.c.0.s8 %v2774
      %v2776 = vlaneseq
      %v2777 = vshrl.u32 %v2776, 7
      %v2778 = vsub.s32 %v2775, %v2777
      %v2779 = vrot.slane %v2771, %v2778
      %v2781 = vunpack.c.l.s4 1934713408
      %v2782 = vunpack.c.0.s8 %v2781
      %v2783 = vlaneseq
      %v2784 = vshrl.u32 %v2783, 7
      %v2785 = vsub.s32 %v2782, %v2784
      %v2786 = vrot.slane %v2772, %v2785
      %v2787 = vcombine.low %v2755, %v2770
      %v2788 = vcombine.high %v2755, %v2770
      %v2790 = vunpack.c.l.s4 1934713408
      %v2791 = vunpack.c.0.s8 %v2790
      %v2792 = vlaneseq
      %v2793 = vshrl.u32 %v2792, 7
      %v2794 = vsub.s32 %v2791, %v2793
      %v2795 = vrot.slane %v2787, %v2794
      %v2797 = vunpack.c.l.s4 1934713408
      %v2798 = vunpack.c.0.s8 %v2797
      %v2799 = vlaneseq
      %v2800 = vshrl.u32 %v2799, 7
      %v2801 = vsub.s32 %v2798, %v2800
      %v2802 = vrot.slane %v2788, %v2801
      %v2803 = vcombine.high %v2779, 0.0
      %v2804 = vcombine.high %v2786, 0.0
      %v2805 = vcombine.high %v2795, 0.0
      %v2806 = vcombine.high %v2802, 0.0
      %v2807 = vcombine.low %v2725, %v2733
      %v2808 = vcombine.high %v2725, %v2733
      %v2810 = vunpack.c.l.s4 1983009808
      %v2811 = vunpack.c.0.s8 %v2810
      %v2812 = vlaneseq
      %v2813 = vshrl.u32 %v2812, 7
      %v2814 = vsub.s32 %v2811, %v2813
      %v2815 = vrot.slane %v2807, %v2814
      %v2817 = vunpack.c.l.s4 1983009808
      %v2818 = vunpack.c.0.s8 %v2817
      %v2819 = vlaneseq
      %v2820 = vshrl.u32 %v2819, 7
      %v2821 = vsub.s32 %v2818, %v2820
      %v2822 = vrot.slane %v2808, %v2821
      %v2823 = vcombine.high %v2729, 0.0
      %v2825 = vunpack.c.l.s4 1983009808
      %v2826 = vunpack.c.0.s8 %v2825
      %v2827 = vlaneseq
      %v2828 = vshrl.u32 %v2827, 7
      %v2829 = vsub.s32 %v2826, %v2828
      %v2830 = vrot.slane %v2729, %v2829
      %v2832 = vunpack.c.l.s4 1983009808
      %v2833 = vunpack.c.0.s8 %v2832
      %v2834 = vlaneseq
      %v2835 = vshrl.u32 %v2834, 7
      %v2836 = vsub.s32 %v2833, %v2835
      %v2837 = vrot.slane %v2823, %v2836
      %v2838 = vcombine.low %v2815, %v2830
      %v2839 = vcombine.high %v2815, %v2830
      %v2841 = vunpack.c.l.s4 1934713408
      %v2842 = vunpack.c.0.s8 %v2841
      %v2843 = vlaneseq
      %v2844 = vshrl.u32 %v2843, 7
      %v2845 = vsub.s32 %v2842, %v2844
      %v2846 = vrot.slane %v2838, %v2845
      %v2848 = vunpack.c.l.s4 1934713408
      %v2849 = vunpack.c.0.s8 %v2848
      %v2850 = vlaneseq
      %v2851 = vshrl.u32 %v2850, 7
      %v2852 = vsub.s32 %v2849, %v2851
      %v2853 = vrot.slane %v2839, %v2852
      %v2854 = vcombine.low %v2822, %v2837
      %v2855 = vcombine.high %v2822, %v2837
      %v2857 = vunpack.c.l.s4 1934713408
      %v2858 = vunpack.c.0.s8 %v2857
      %v2859 = vlaneseq
      %v2860 = vshrl.u32 %v2859, 7
      %v2861 = vsub.s32 %v2858, %v2860
      %v2862 = vrot.slane %v2854, %v2861
      %v2864 = vunpack.c.l.s4 1934713408
      %v2865 = vunpack.c.0.s8 %v2864
      %v2866 = vlaneseq
      %v2867 = vshrl.u32 %v2866, 7
      %v2868 = vsub.s32 %v2865, %v2867
      %v2869 = vrot.slane %v2855, %v2868
      %v2870 = vcombine.high %v2846, 0.0
      %v2871 = vcombine.high %v2853, 0.0
      %v2872 = vcombine.high %v2862, 0.0
      %v2873 = vcombine.high %v2869, 0.0
      %2875 = vrot.lane.b32.xlu0 %v2803, 16
      %v2876 = vpop.permute.xlu0 %2875
      %2879 = vrot.lane.b32.xlu0 %v2786, 32
      %v2880 = vpop.permute.xlu0 %2879
      %2883 = vrot.lane.b32.xlu0 %v2804, 48
      %v2884 = vpop.permute.xlu0 %2883
      %2887 = vrot.lane.b32.xlu0 %v2795, 64
      %v2888 = vpop.permute.xlu0 %2887
      %2891 = vrot.lane.b32.xlu0 %v2805, 80
      %v2892 = vpop.permute.xlu0 %2891
      %2895 = vrot.lane.b32.xlu0 %v2802, 96
      %v2896 = vpop.permute.xlu0 %2895
      %2899 = vrot.lane.b32.xlu0 %v2806, 112
      %v2900 = vpop.permute.xlu0 %2899
      %2903 = vrot.lane.b32.xlu0 %v2870, 16
      %v2904 = vpop.permute.xlu0 %2903
      %2907 = vrot.lane.b32.xlu0 %v2853, 32
      %v2908 = vpop.permute.xlu0 %2907
      %2911 = vrot.lane.b32.xlu0 %v2871, 48
      %v2912 = vpop.permute.xlu0 %2911
      %2915 = vrot.lane.b32.xlu0 %v2862, 64
      %v2916 = vpop.permute.xlu0 %2915
      %2919 = vrot.lane.b32.xlu0 %v2872, 80
      %v2920 = vpop.permute.xlu0 %2919
      %2923 = vrot.lane.b32.xlu0 %v2869, 96
      %v2924 = vpop.permute.xlu0 %2923
      %2927 = vrot.lane.b32.xlu0 %v2873, 112
      %v2928 = vpop.permute.xlu0 %2927
      %v2930 = vsel %vm454, %v2779, %v2876
      %v2931 = vsel %vm456, %v2930, %v2880
      %v2932 = vsel %vm458, %v2931, %v2884
      %v2933 = vsel %vm460, %v2932, %v2888
      %v2934 = vsel %vm462, %v2933, %v2892
      %v2935 = vsel %vm464, %v2934, %v2896
      %v2936 = vsel %vm466, %v2935, %v2900
      %v2937 = vsel %vm454, %v2846, %v2904
      %v2938 = vsel %vm456, %v2937, %v2908
      %v2939 = vsel %vm458, %v2938, %v2912
      %v2940 = vsel %vm460, %v2939, %v2916
      %v2941 = vsel %vm462, %v2940, %v2920
      %v2942 = vsel %vm464, %v2941, %v2924
      %v2943 = vsel %vm466, %v2942, %v2928
      %v2946 = vrot.slane %v2484, 3
      %v2947 = vrot.slane %v2486, 3
      %v2950 = vmul.f32 %v2936, %v2946
      %v2951 = vmul.f32 %v2943, %v2947
      %v2952 = vadd.f32 %v2714, %v2950
      %v2953 = vadd.f32 %v2715, %v2951
      %2954 = vrot.lane.b32.xlu0 %v253, 126
      %v2955 = vpop.permute.xlu0 %2954
      %2956 = vrot.lane.b32.xlu0 %v254, 126
      %v2957 = vpop.permute.xlu0 %2956
      %2958 = vrot.lane.b32.xlu0 %v256, 126
      %v2959 = vpop.permute.xlu0 %2958
      %2960 = vrot.lane.b32.xlu0 %v257, 126
      %v2961 = vpop.permute.xlu0 %2960
      %2962 = vrot.lane.b32.xlu0 %v259, 126
      %v2963 = vpop.permute.xlu0 %2962
      %2964 = vrot.lane.b32.xlu0 %v260, 126
      %v2965 = vpop.permute.xlu0 %2964
      %v2972 = vcombine.low %v2955, %v2963
      %v2973 = vcombine.high %v2955, %v2963
      %v2975 = vunpack.c.l.s4 1983009808
      %v2976 = vunpack.c.0.s8 %v2975
      %v2977 = vlaneseq
      %v2978 = vshrl.u32 %v2977, 7
      %v2979 = vsub.s32 %v2976, %v2978
      %v2980 = vrot.slane %v2972, %v2979
      %v2982 = vunpack.c.l.s4 1983009808
      %v2983 = vunpack.c.0.s8 %v2982
      %v2984 = vlaneseq
      %v2985 = vshrl.u32 %v2984, 7
      %v2986 = vsub.s32 %v2983, %v2985
      %v2987 = vrot.slane %v2973, %v2986
      %v2988 = vcombine.high %v2959, 0.0
      %v2990 = vunpack.c.l.s4 1983009808
      %v2991 = vunpack.c.0.s8 %v2990
      %v2992 = vlaneseq
      %v2993 = vshrl.u32 %v2992, 7
      %v2994 = vsub.s32 %v2991, %v2993
      %v2995 = vrot.slane %v2959, %v2994
      %v2997 = vunpack.c.l.s4 1983009808
      %v2998 = vunpack.c.0.s8 %v2997
      %v2999 = vlaneseq
      %v3000 = vshrl.u32 %v2999, 7
      %v3001 = vsub.s32 %v2998, %v3000
      %v3002 = vrot.slane %v2988, %v3001
      %v3003 = vcombine.low %v2980, %v2995
      %v3004 = vcombine.high %v2980, %v2995
      %v3006 = vunpack.c.l.s4 1934713408
      %v3007 = vunpack.c.0.s8 %v3006
      %v3008 = vlaneseq
      %v3009 = vshrl.u32 %v3008, 7
      %v3010 = vsub.s32 %v3007, %v3009
      %v3011 = vrot.slane %v3003, %v3010
      %v3013 = vunpack.c.l.s4 1934713408
      %v3014 = vunpack.c.0.s8 %v3013
      %v3015 = vlaneseq
      %v3016 = vshrl.u32 %v3015, 7
      %v3017 = vsub.s32 %v3014, %v3016
      %v3018 = vrot.slane %v3004, %v3017
      %v3019 = vcombine.low %v2987, %v3002
      %v3020 = vcombine.high %v2987, %v3002
      %v3022 = vunpack.c.l.s4 1934713408
      %v3023 = vunpack.c.0.s8 %v3022
      %v3024 = vlaneseq
      %v3025 = vshrl.u32 %v3024, 7
      %v3026 = vsub.s32 %v3023, %v3025
      %v3027 = vrot.slane %v3019, %v3026
      %v3029 = vunpack.c.l.s4 1934713408
      %v3030 = vunpack.c.0.s8 %v3029
      %v3031 = vlaneseq
      %v3032 = vshrl.u32 %v3031, 7
      %v3033 = vsub.s32 %v3030, %v3032
      %v3034 = vrot.slane %v3020, %v3033
      %v3035 = vcombine.high %v3011, 0.0
      %v3036 = vcombine.high %v3018, 0.0
      %v3037 = vcombine.high %v3027, 0.0
      %v3038 = vcombine.high %v3034, 0.0
      %v3039 = vcombine.low %v2957, %v2965
      %v3040 = vcombine.high %v2957, %v2965
      %v3042 = vunpack.c.l.s4 1983009808
      %v3043 = vunpack.c.0.s8 %v3042
      %v3044 = vlaneseq
      %v3045 = vshrl.u32 %v3044, 7
      %v3046 = vsub.s32 %v3043, %v3045
      %v3047 = vrot.slane %v3039, %v3046
      %v3049 = vunpack.c.l.s4 1983009808
      %v3050 = vunpack.c.0.s8 %v3049
      %v3051 = vlaneseq
      %v3052 = vshrl.u32 %v3051, 7
      %v3053 = vsub.s32 %v3050, %v3052
      %v3054 = vrot.slane %v3040, %v3053
      %v3055 = vcombine.high %v2961, 0.0
      %v3057 = vunpack.c.l.s4 1983009808
      %v3058 = vunpack.c.0.s8 %v3057
      %v3059 = vlaneseq
      %v3060 = vshrl.u32 %v3059, 7
      %v3061 = vsub.s32 %v3058, %v3060
      %v3062 = vrot.slane %v2961, %v3061
      %v3064 = vunpack.c.l.s4 1983009808
      %v3065 = vunpack.c.0.s8 %v3064
      %v3066 = vlaneseq
      %v3067 = vshrl.u32 %v3066, 7
      %v3068 = vsub.s32 %v3065, %v3067
      %v3069 = vrot.slane %v3055, %v3068
      %v3070 = vcombine.low %v3047, %v3062
      %v3071 = vcombine.high %v3047, %v3062
      %v3073 = vunpack.c.l.s4 1934713408
      %v3074 = vunpack.c.0.s8 %v3073
      %v3075 = vlaneseq
      %v3076 = vshrl.u32 %v3075, 7
      %v3077 = vsub.s32 %v3074, %v3076
      %v3078 = vrot.slane %v3070, %v3077
      %v3080 = vunpack.c.l.s4 1934713408
      %v3081 = vunpack.c.0.s8 %v3080
      %v3082 = vlaneseq
      %v3083 = vshrl.u32 %v3082, 7
      %v3084 = vsub.s32 %v3081, %v3083
      %v3085 = vrot.slane %v3071, %v3084
      %v3086 = vcombine.low %v3054, %v3069
      %v3087 = vcombine.high %v3054, %v3069
      %v3089 = vunpack.c.l.s4 1934713408
      %v3090 = vunpack.c.0.s8 %v3089
      %v3091 = vlaneseq
      %v3092 = vshrl.u32 %v3091, 7
      %v3093 = vsub.s32 %v3090, %v3092
      %v3094 = vrot.slane %v3086, %v3093
      %v3096 = vunpack.c.l.s4 1934713408
      %v3097 = vunpack.c.0.s8 %v3096
      %v3098 = vlaneseq
      %v3099 = vshrl.u32 %v3098, 7
      %v3100 = vsub.s32 %v3097, %v3099
      %v3101 = vrot.slane %v3087, %v3100
      %v3102 = vcombine.high %v3078, 0.0
      %v3103 = vcombine.high %v3085, 0.0
      %v3104 = vcombine.high %v3094, 0.0
      %v3105 = vcombine.high %v3101, 0.0
      %3107 = vrot.lane.b32.xlu0 %v3035, 16
      %v3108 = vpop.permute.xlu0 %3107
      %3111 = vrot.lane.b32.xlu0 %v3018, 32
      %v3112 = vpop.permute.xlu0 %3111
      %3115 = vrot.lane.b32.xlu0 %v3036, 48
      %v3116 = vpop.permute.xlu0 %3115
      %3119 = vrot.lane.b32.xlu0 %v3027, 64
      %v3120 = vpop.permute.xlu0 %3119
      %3123 = vrot.lane.b32.xlu0 %v3037, 80
      %v3124 = vpop.permute.xlu0 %3123
      %3127 = vrot.lane.b32.xlu0 %v3034, 96
      %v3128 = vpop.permute.xlu0 %3127
      %3131 = vrot.lane.b32.xlu0 %v3038, 112
      %v3132 = vpop.permute.xlu0 %3131
      %3135 = vrot.lane.b32.xlu0 %v3102, 16
      %v3136 = vpop.permute.xlu0 %3135
      %3139 = vrot.lane.b32.xlu0 %v3085, 32
      %v3140 = vpop.permute.xlu0 %3139
      %3143 = vrot.lane.b32.xlu0 %v3103, 48
      %v3144 = vpop.permute.xlu0 %3143
      %3147 = vrot.lane.b32.xlu0 %v3094, 64
      %v3148 = vpop.permute.xlu0 %3147
      %3151 = vrot.lane.b32.xlu0 %v3104, 80
      %v3152 = vpop.permute.xlu0 %3151
      %3155 = vrot.lane.b32.xlu0 %v3101, 96
      %v3156 = vpop.permute.xlu0 %3155
      %3159 = vrot.lane.b32.xlu0 %v3105, 112
      %v3160 = vpop.permute.xlu0 %3159
      %v3162 = vsel %vm454, %v3011, %v3108
      %v3163 = vsel %vm456, %v3162, %v3112
      %v3164 = vsel %vm458, %v3163, %v3116
      %v3165 = vsel %vm460, %v3164, %v3120
      %v3166 = vsel %vm462, %v3165, %v3124
      %v3167 = vsel %vm464, %v3166, %v3128
      %v3168 = vsel %vm466, %v3167, %v3132
      %v3169 = vsel %vm454, %v3078, %v3136
      %v3170 = vsel %vm456, %v3169, %v3140
      %v3171 = vsel %vm458, %v3170, %v3144
      %v3172 = vsel %vm460, %v3171, %v3148
      %v3173 = vsel %vm462, %v3172, %v3152
      %v3174 = vsel %vm464, %v3173, %v3156
      %v3175 = vsel %vm466, %v3174, %v3160
      %vm3178 = vcmask 1041408
      %v3179 = vrot.slane %v2484, 6
      %v3180 = vrot.slane %v2490, 6
      %v3181 = vsel %vm3178, %v3179, %v3180
      %v3182 = vrot.slane %v2486, 6
      %v3183 = vrot.slane %v2492, 6
      %v3184 = vsel %vm3178, %v3182, %v3183
      %v3187 = vmul.f32 %v3168, %v3181
      %v3188 = vmul.f32 %v3175, %v3184
      %v3189 = vadd.f32 %v2952, %v3187
      %v3190 = vadd.f32 %v2953, %v3188
      %v3194 = vrot.slane %v253, 1
      %v3195 = vrot.slane %v254, 1
      %v3196 = vsel %vm947, %v3194, %v3195
      %v3197 = vrot.slane %v255, 1
      %v3198 = vsel %vm947, %v3195, %v3197
      %v3199 = vrot.slane %v256, 1
      %v3200 = vrot.slane %v257, 1
      %v3201 = vsel %vm947, %v3199, %v3200
      %v3202 = vrot.slane %v258, 1
      %v3203 = vsel %vm947, %v3200, %v3202
      %v3204 = vrot.slane %v259, 1
      %v3205 = vrot.slane %v260, 1
      %v3206 = vsel %vm947, %v3204, %v3205
      %v3207 = vrot.slane %v261, 1
      %v3208 = vsel %vm947, %v3205, %v3207
      %v3215 = vcombine.low %v3196, %v3206
      %v3216 = vcombine.high %v3196, %v3206
      %v3218 = vunpack.c.l.s4 1983009808
      %v3219 = vunpack.c.0.s8 %v3218
      %v3220 = vlaneseq
      %v3221 = vshrl.u32 %v3220, 7
      %v3222 = vsub.s32 %v3219, %v3221
      %v3223 = vrot.slane %v3215, %v3222
      %v3225 = vunpack.c.l.s4 1983009808
      %v3226 = vunpack.c.0.s8 %v3225
      %v3227 = vlaneseq
      %v3228 = vshrl.u32 %v3227, 7
      %v3229 = vsub.s32 %v3226, %v3228
      %v3230 = vrot.slane %v3216, %v3229
      %v3231 = vcombine.high %v3201, 0.0
      %v3233 = vunpack.c.l.s4 1983009808
      %v3234 = vunpack.c.0.s8 %v3233
      %v3235 = vlaneseq
      %v3236 = vshrl.u32 %v3235, 7
      %v3237 = vsub.s32 %v3234, %v3236
      %v3238 = vrot.slane %v3201, %v3237
      %v3240 = vunpack.c.l.s4 1983009808
      %v3241 = vunpack.c.0.s8 %v3240
      %v3242 = vlaneseq
      %v3243 = vshrl.u32 %v3242, 7
      %v3244 = vsub.s32 %v3241, %v3243
      %v3245 = vrot.slane %v3231, %v3244
      %v3246 = vcombine.low %v3223, %v3238
      %v3247 = vcombine.high %v3223, %v3238
      %v3249 = vunpack.c.l.s4 1934713408
      %v3250 = vunpack.c.0.s8 %v3249
      %v3251 = vlaneseq
      %v3252 = vshrl.u32 %v3251, 7
      %v3253 = vsub.s32 %v3250, %v3252
      %v3254 = vrot.slane %v3246, %v3253
      %v3256 = vunpack.c.l.s4 1934713408
      %v3257 = vunpack.c.0.s8 %v3256
      %v3258 = vlaneseq
      %v3259 = vshrl.u32 %v3258, 7
      %v3260 = vsub.s32 %v3257, %v3259
      %v3261 = vrot.slane %v3247, %v3260
      %v3262 = vcombine.low %v3230, %v3245
      %v3263 = vcombine.high %v3230, %v3245
      %v3265 = vunpack.c.l.s4 1934713408
      %v3266 = vunpack.c.0.s8 %v3265
      %v3267 = vlaneseq
      %v3268 = vshrl.u32 %v3267, 7
      %v3269 = vsub.s32 %v3266, %v3268
      %v3270 = vrot.slane %v3262, %v3269
      %v3272 = vunpack.c.l.s4 1934713408
      %v3273 = vunpack.c.0.s8 %v3272
      %v3274 = vlaneseq
      %v3275 = vshrl.u32 %v3274, 7
      %v3276 = vsub.s32 %v3273, %v3275
      %v3277 = vrot.slane %v3263, %v3276
      %v3278 = vcombine.high %v3254, 0.0
      %v3279 = vcombine.high %v3261, 0.0
      %v3280 = vcombine.high %v3270, 0.0
      %v3281 = vcombine.high %v3277, 0.0
      %v3282 = vcombine.low %v3198, %v3208
      %v3283 = vcombine.high %v3198, %v3208
      %v3285 = vunpack.c.l.s4 1983009808
      %v3286 = vunpack.c.0.s8 %v3285
      %v3287 = vlaneseq
      %v3288 = vshrl.u32 %v3287, 7
      %v3289 = vsub.s32 %v3286, %v3288
      %v3290 = vrot.slane %v3282, %v3289
      %v3292 = vunpack.c.l.s4 1983009808
      %v3293 = vunpack.c.0.s8 %v3292
      %v3294 = vlaneseq
      %v3295 = vshrl.u32 %v3294, 7
      %v3296 = vsub.s32 %v3293, %v3295
      %v3297 = vrot.slane %v3283, %v3296
      %v3298 = vcombine.high %v3203, 0.0
      %v3300 = vunpack.c.l.s4 1983009808
      %v3301 = vunpack.c.0.s8 %v3300
      %v3302 = vlaneseq
      %v3303 = vshrl.u32 %v3302, 7
      %v3304 = vsub.s32 %v3301, %v3303
      %v3305 = vrot.slane %v3203, %v3304
      %v3307 = vunpack.c.l.s4 1983009808
      %v3308 = vunpack.c.0.s8 %v3307
      %v3309 = vlaneseq
      %v3310 = vshrl.u32 %v3309, 7
      %v3311 = vsub.s32 %v3308, %v3310
      %v3312 = vrot.slane %v3298, %v3311
      %v3313 = vcombine.low %v3290, %v3305
      %v3314 = vcombine.high %v3290, %v3305
      %v3316 = vunpack.c.l.s4 1934713408
      %v3317 = vunpack.c.0.s8 %v3316
      %v3318 = vlaneseq
      %v3319 = vshrl.u32 %v3318, 7
      %v3320 = vsub.s32 %v3317, %v3319
      %v3321 = vrot.slane %v3313, %v3320
      %v3323 = vunpack.c.l.s4 1934713408
      %v3324 = vunpack.c.0.s8 %v3323
      %v3325 = vlaneseq
      %v3326 = vshrl.u32 %v3325, 7
      %v3327 = vsub.s32 %v3324, %v3326
      %v3328 = vrot.slane %v3314, %v3327
      %v3329 = vcombine.low %v3297, %v3312
      %v3330 = vcombine.high %v3297, %v3312
      %v3332 = vunpack.c.l.s4 1934713408
      %v3333 = vunpack.c.0.s8 %v3332
      %v3334 = vlaneseq
      %v3335 = vshrl.u32 %v3334, 7
      %v3336 = vsub.s32 %v3333, %v3335
      %v3337 = vrot.slane %v3329, %v3336
      %v3339 = vunpack.c.l.s4 1934713408
      %v3340 = vunpack.c.0.s8 %v3339
      %v3341 = vlaneseq
      %v3342 = vshrl.u32 %v3341, 7
      %v3343 = vsub.s32 %v3340, %v3342
      %v3344 = vrot.slane %v3330, %v3343
      %v3345 = vcombine.high %v3321, 0.0
      %v3346 = vcombine.high %v3328, 0.0
      %v3347 = vcombine.high %v3337, 0.0
      %v3348 = vcombine.high %v3344, 0.0
      %3350 = vrot.lane.b32.xlu0 %v3278, 16
      %v3351 = vpop.permute.xlu0 %3350
      %3354 = vrot.lane.b32.xlu0 %v3261, 32
      %v3355 = vpop.permute.xlu0 %3354
      %3358 = vrot.lane.b32.xlu0 %v3279, 48
      %v3359 = vpop.permute.xlu0 %3358
      %3362 = vrot.lane.b32.xlu0 %v3270, 64
      %v3363 = vpop.permute.xlu0 %3362
      %3366 = vrot.lane.b32.xlu0 %v3280, 80
      %v3367 = vpop.permute.xlu0 %3366
      %3370 = vrot.lane.b32.xlu0 %v3277, 96
      %v3371 = vpop.permute.xlu0 %3370
      %3374 = vrot.lane.b32.xlu0 %v3281, 112
      %v3375 = vpop.permute.xlu0 %3374
      %3378 = vrot.lane.b32.xlu0 %v3345, 16
      %v3379 = vpop.permute.xlu0 %3378
      %3382 = vrot.lane.b32.xlu0 %v3328, 32
      %v3383 = vpop.permute.xlu0 %3382
      %3386 = vrot.lane.b32.xlu0 %v3346, 48
      %v3387 = vpop.permute.xlu0 %3386
      %3390 = vrot.lane.b32.xlu0 %v3337, 64
      %v3391 = vpop.permute.xlu0 %3390
      %3394 = vrot.lane.b32.xlu0 %v3347, 80
      %v3395 = vpop.permute.xlu0 %3394
      %3398 = vrot.lane.b32.xlu0 %v3344, 96
      %v3399 = vpop.permute.xlu0 %3398
      %3402 = vrot.lane.b32.xlu0 %v3348, 112
      %v3403 = vpop.permute.xlu0 %3402
      %v3405 = vsel %vm454, %v3254, %v3351
      %v3406 = vsel %vm456, %v3405, %v3355
      %v3407 = vsel %vm458, %v3406, %v3359
      %v3408 = vsel %vm460, %v3407, %v3363
      %v3409 = vsel %vm462, %v3408, %v3367
      %v3410 = vsel %vm464, %v3409, %v3371
      %v3411 = vsel %vm466, %v3410, %v3375
      %v3412 = vsel %vm454, %v3321, %v3379
      %v3413 = vsel %vm456, %v3412, %v3383
      %v3414 = vsel %vm458, %v3413, %v3387
      %v3415 = vsel %vm460, %v3414, %v3391
      %v3416 = vsel %vm462, %v3415, %v3395
      %v3417 = vsel %vm464, %v3416, %v3399
      %v3418 = vsel %vm466, %v3417, %v3403
      %v3419 = vrot.slane %v2490, 1
      %v3420 = vrot.slane %v2492, 1
      %v3423 = vmul.f32 %v3411, %v3419
      %v3424 = vmul.f32 %v3418, %v3420
      %v3425 = vadd.f32 %v3189, %v3423
      %v3426 = vadd.f32 %v3190, %v3424
      %3427 = vrot.lane.b32.xlu0 %v3196, 127
      %v3428 = vpop.permute.xlu0 %3427
      %3429 = vrot.lane.b32.xlu0 %v3198, 127
      %v3430 = vpop.permute.xlu0 %3429
      %3431 = vrot.lane.b32.xlu0 %v3201, 127
      %v3432 = vpop.permute.xlu0 %3431
      %3433 = vrot.lane.b32.xlu0 %v3203, 127
      %v3434 = vpop.permute.xlu0 %3433
      %3435 = vrot.lane.b32.xlu0 %v3206, 127
      %v3436 = vpop.permute.xlu0 %3435
      %3437 = vrot.lane.b32.xlu0 %v3208, 127
      %v3438 = vpop.permute.xlu0 %3437
      %v3445 = vcombine.low %v3428, %v3436
      %v3446 = vcombine.high %v3428, %v3436
      %v3448 = vunpack.c.l.s4 1983009808
      %v3449 = vunpack.c.0.s8 %v3448
      %v3450 = vlaneseq
      %v3451 = vshrl.u32 %v3450, 7
      %v3452 = vsub.s32 %v3449, %v3451
      %v3453 = vrot.slane %v3445, %v3452
      %v3455 = vunpack.c.l.s4 1983009808
      %v3456 = vunpack.c.0.s8 %v3455
      %v3457 = vlaneseq
      %v3458 = vshrl.u32 %v3457, 7
      %v3459 = vsub.s32 %v3456, %v3458
      %v3460 = vrot.slane %v3446, %v3459
      %v3461 = vcombine.high %v3432, 0.0
      %v3463 = vunpack.c.l.s4 1983009808
      %v3464 = vunpack.c.0.s8 %v3463
      %v3465 = vlaneseq
      %v3466 = vshrl.u32 %v3465, 7
      %v3467 = vsub.s32 %v3464, %v3466
      %v3468 = vrot.slane %v3432, %v3467
      %v3470 = vunpack.c.l.s4 1983009808
      %v3471 = vunpack.c.0.s8 %v3470
      %v3472 = vlaneseq
      %v3473 = vshrl.u32 %v3472, 7
      %v3474 = vsub.s32 %v3471, %v3473
      %v3475 = vrot.slane %v3461, %v3474
      %v3476 = vcombine.low %v3453, %v3468
      %v3477 = vcombine.high %v3453, %v3468
      %v3479 = vunpack.c.l.s4 1934713408
      %v3480 = vunpack.c.0.s8 %v3479
      %v3481 = vlaneseq
      %v3482 = vshrl.u32 %v3481, 7
      %v3483 = vsub.s32 %v3480, %v3482
      %v3484 = vrot.slane %v3476, %v3483
      %v3486 = vunpack.c.l.s4 1934713408
      %v3487 = vunpack.c.0.s8 %v3486
      %v3488 = vlaneseq
      %v3489 = vshrl.u32 %v3488, 7
      %v3490 = vsub.s32 %v3487, %v3489
      %v3491 = vrot.slane %v3477, %v3490
      %v3492 = vcombine.low %v3460, %v3475
      %v3493 = vcombine.high %v3460, %v3475
      %v3495 = vunpack.c.l.s4 1934713408
      %v3496 = vunpack.c.0.s8 %v3495
      %v3497 = vlaneseq
      %v3498 = vshrl.u32 %v3497, 7
      %v3499 = vsub.s32 %v3496, %v3498
      %v3500 = vrot.slane %v3492, %v3499
      %v3502 = vunpack.c.l.s4 1934713408
      %v3503 = vunpack.c.0.s8 %v3502
      %v3504 = vlaneseq
      %v3505 = vshrl.u32 %v3504, 7
      %v3506 = vsub.s32 %v3503, %v3505
      %v3507 = vrot.slane %v3493, %v3506
      %v3508 = vcombine.high %v3484, 0.0
      %v3509 = vcombine.high %v3491, 0.0
      %v3510 = vcombine.high %v3500, 0.0
      %v3511 = vcombine.high %v3507, 0.0
      %v3512 = vcombine.low %v3430, %v3438
      %v3513 = vcombine.high %v3430, %v3438
      %v3515 = vunpack.c.l.s4 1983009808
      %v3516 = vunpack.c.0.s8 %v3515
      %v3517 = vlaneseq
      %v3518 = vshrl.u32 %v3517, 7
      %v3519 = vsub.s32 %v3516, %v3518
      %v3520 = vrot.slane %v3512, %v3519
      %v3522 = vunpack.c.l.s4 1983009808
      %v3523 = vunpack.c.0.s8 %v3522
      %v3524 = vlaneseq
      %v3525 = vshrl.u32 %v3524, 7
      %v3526 = vsub.s32 %v3523, %v3525
      %v3527 = vrot.slane %v3513, %v3526
      %v3528 = vcombine.high %v3434, 0.0
      %v3530 = vunpack.c.l.s4 1983009808
      %v3531 = vunpack.c.0.s8 %v3530
      %v3532 = vlaneseq
      %v3533 = vshrl.u32 %v3532, 7
      %v3534 = vsub.s32 %v3531, %v3533
      %v3535 = vrot.slane %v3434, %v3534
      %v3537 = vunpack.c.l.s4 1983009808
      %v3538 = vunpack.c.0.s8 %v3537
      %v3539 = vlaneseq
      %v3540 = vshrl.u32 %v3539, 7
      %v3541 = vsub.s32 %v3538, %v3540
      %v3542 = vrot.slane %v3528, %v3541
      %v3543 = vcombine.low %v3520, %v3535
      %v3544 = vcombine.high %v3520, %v3535
      %v3546 = vunpack.c.l.s4 1934713408
      %v3547 = vunpack.c.0.s8 %v3546
      %v3548 = vlaneseq
      %v3549 = vshrl.u32 %v3548, 7
      %v3550 = vsub.s32 %v3547, %v3549
      %v3551 = vrot.slane %v3543, %v3550
      %v3553 = vunpack.c.l.s4 1934713408
      %v3554 = vunpack.c.0.s8 %v3553
      %v3555 = vlaneseq
      %v3556 = vshrl.u32 %v3555, 7
      %v3557 = vsub.s32 %v3554, %v3556
      %v3558 = vrot.slane %v3544, %v3557
      %v3559 = vcombine.low %v3527, %v3542
      %v3560 = vcombine.high %v3527, %v3542
      %v3562 = vunpack.c.l.s4 1934713408
      %v3563 = vunpack.c.0.s8 %v3562
      %v3564 = vlaneseq
      %v3565 = vshrl.u32 %v3564, 7
      %v3566 = vsub.s32 %v3563, %v3565
      %v3567 = vrot.slane %v3559, %v3566
      %v3569 = vunpack.c.l.s4 1934713408
      %v3570 = vunpack.c.0.s8 %v3569
      %v3571 = vlaneseq
      %v3572 = vshrl.u32 %v3571, 7
      %v3573 = vsub.s32 %v3570, %v3572
      %v3574 = vrot.slane %v3560, %v3573
      %v3575 = vcombine.high %v3551, 0.0
      %v3576 = vcombine.high %v3558, 0.0
      %v3577 = vcombine.high %v3567, 0.0
      %v3578 = vcombine.high %v3574, 0.0
      %3580 = vrot.lane.b32.xlu0 %v3508, 16
      %v3581 = vpop.permute.xlu0 %3580
      %3584 = vrot.lane.b32.xlu0 %v3491, 32
      %v3585 = vpop.permute.xlu0 %3584
      %3588 = vrot.lane.b32.xlu0 %v3509, 48
      %v3589 = vpop.permute.xlu0 %3588
      %3592 = vrot.lane.b32.xlu0 %v3500, 64
      %v3593 = vpop.permute.xlu0 %3592
      %3596 = vrot.lane.b32.xlu0 %v3510, 80
      %v3597 = vpop.permute.xlu0 %3596
      %3600 = vrot.lane.b32.xlu0 %v3507, 96
      %v3601 = vpop.permute.xlu0 %3600
      %3604 = vrot.lane.b32.xlu0 %v3511, 112
      %v3605 = vpop.permute.xlu0 %3604
      %3608 = vrot.lane.b32.xlu0 %v3575, 16
      %v3609 = vpop.permute.xlu0 %3608
      %3612 = vrot.lane.b32.xlu0 %v3558, 32
      %v3613 = vpop.permute.xlu0 %3612
      %3616 = vrot.lane.b32.xlu0 %v3576, 48
      %v3617 = vpop.permute.xlu0 %3616
      %3620 = vrot.lane.b32.xlu0 %v3567, 64
      %v3621 = vpop.permute.xlu0 %3620
      %3624 = vrot.lane.b32.xlu0 %v3577, 80
      %v3625 = vpop.permute.xlu0 %3624
      %3628 = vrot.lane.b32.xlu0 %v3574, 96
      %v3629 = vpop.permute.xlu0 %3628
      %3632 = vrot.lane.b32.xlu0 %v3578, 112
      %v3633 = vpop.permute.xlu0 %3632
      %v3635 = vsel %vm454, %v3484, %v3581
      %v3636 = vsel %vm456, %v3635, %v3585
      %v3637 = vsel %vm458, %v3636, %v3589
      %v3638 = vsel %vm460, %v3637, %v3593
      %v3639 = vsel %vm462, %v3638, %v3597
      %v3640 = vsel %vm464, %v3639, %v3601
      %v3641 = vsel %vm466, %v3640, %v3605
      %v3642 = vsel %vm454, %v3551, %v3609
      %v3643 = vsel %vm456, %v3642, %v3613
      %v3644 = vsel %vm458, %v3643, %v3617
      %v3645 = vsel %vm460, %v3644, %v3621
      %v3646 = vsel %vm462, %v3645, %v3625
      %v3647 = vsel %vm464, %v3646, %v3629
      %v3648 = vsel %vm466, %v3647, %v3633
      %v3649 = vrot.slane %v2490, 4
      %v3650 = vrot.slane %v2492, 4
      %v3653 = vmul.f32 %v3641, %v3649
      %v3654 = vmul.f32 %v3648, %v3650
      %v3655 = vadd.f32 %v3425, %v3653
      %v3656 = vadd.f32 %v3426, %v3654
      %3657 = vrot.lane.b32.xlu0 %v3196, 126
      %v3658 = vpop.permute.xlu0 %3657
      %3659 = vrot.lane.b32.xlu0 %v3198, 126
      %v3660 = vpop.permute.xlu0 %3659
      %3661 = vrot.lane.b32.xlu0 %v3201, 126
      %v3662 = vpop.permute.xlu0 %3661
      %3663 = vrot.lane.b32.xlu0 %v3203, 126
      %v3664 = vpop.permute.xlu0 %3663
      %3665 = vrot.lane.b32.xlu0 %v3206, 126
      %v3666 = vpop.permute.xlu0 %3665
      %3667 = vrot.lane.b32.xlu0 %v3208, 126
      %v3668 = vpop.permute.xlu0 %3667
      %v3675 = vcombine.low %v3658, %v3666
      %v3676 = vcombine.high %v3658, %v3666
      %v3678 = vunpack.c.l.s4 1983009808
      %v3679 = vunpack.c.0.s8 %v3678
      %v3680 = vlaneseq
      %v3681 = vshrl.u32 %v3680, 7
      %v3682 = vsub.s32 %v3679, %v3681
      %v3683 = vrot.slane %v3675, %v3682
      %v3685 = vunpack.c.l.s4 1983009808
      %v3686 = vunpack.c.0.s8 %v3685
      %v3687 = vlaneseq
      %v3688 = vshrl.u32 %v3687, 7
      %v3689 = vsub.s32 %v3686, %v3688
      %v3690 = vrot.slane %v3676, %v3689
      %v3691 = vcombine.high %v3662, 0.0
      %v3693 = vunpack.c.l.s4 1983009808
      %v3694 = vunpack.c.0.s8 %v3693
      %v3695 = vlaneseq
      %v3696 = vshrl.u32 %v3695, 7
      %v3697 = vsub.s32 %v3694, %v3696
      %v3698 = vrot.slane %v3662, %v3697
      %v3700 = vunpack.c.l.s4 1983009808
      %v3701 = vunpack.c.0.s8 %v3700
      %v3702 = vlaneseq
      %v3703 = vshrl.u32 %v3702, 7
      %v3704 = vsub.s32 %v3701, %v3703
      %v3705 = vrot.slane %v3691, %v3704
      %v3706 = vcombine.low %v3683, %v3698
      %v3707 = vcombine.high %v3683, %v3698
      %v3709 = vunpack.c.l.s4 1934713408
      %v3710 = vunpack.c.0.s8 %v3709
      %v3711 = vlaneseq
      %v3712 = vshrl.u32 %v3711, 7
      %v3713 = vsub.s32 %v3710, %v3712
      %v3714 = vrot.slane %v3706, %v3713
      %v3716 = vunpack.c.l.s4 1934713408
      %v3717 = vunpack.c.0.s8 %v3716
      %v3718 = vlaneseq
      %v3719 = vshrl.u32 %v3718, 7
      %v3720 = vsub.s32 %v3717, %v3719
      %v3721 = vrot.slane %v3707, %v3720
      %v3722 = vcombine.low %v3690, %v3705
      %v3723 = vcombine.high %v3690, %v3705
      %v3725 = vunpack.c.l.s4 1934713408
      %v3726 = vunpack.c.0.s8 %v3725
      %v3727 = vlaneseq
      %v3728 = vshrl.u32 %v3727, 7
      %v3729 = vsub.s32 %v3726, %v3728
      %v3730 = vrot.slane %v3722, %v3729
      %v3732 = vunpack.c.l.s4 1934713408
      %v3733 = vunpack.c.0.s8 %v3732
      %v3734 = vlaneseq
      %v3735 = vshrl.u32 %v3734, 7
      %v3736 = vsub.s32 %v3733, %v3735
      %v3737 = vrot.slane %v3723, %v3736
      %v3738 = vcombine.high %v3714, 0.0
      %v3739 = vcombine.high %v3721, 0.0
      %v3740 = vcombine.high %v3730, 0.0
      %v3741 = vcombine.high %v3737, 0.0
      %v3742 = vcombine.low %v3660, %v3668
      %v3743 = vcombine.high %v3660, %v3668
      %v3745 = vunpack.c.l.s4 1983009808
      %v3746 = vunpack.c.0.s8 %v3745
      %v3747 = vlaneseq
      %v3748 = vshrl.u32 %v3747, 7
      %v3749 = vsub.s32 %v3746, %v3748
      %v3750 = vrot.slane %v3742, %v3749
      %v3752 = vunpack.c.l.s4 1983009808
      %v3753 = vunpack.c.0.s8 %v3752
      %v3754 = vlaneseq
      %v3755 = vshrl.u32 %v3754, 7
      %v3756 = vsub.s32 %v3753, %v3755
      %v3757 = vrot.slane %v3743, %v3756
      %v3758 = vcombine.high %v3664, 0.0
      %v3760 = vunpack.c.l.s4 1983009808
      %v3761 = vunpack.c.0.s8 %v3760
      %v3762 = vlaneseq
      %v3763 = vshrl.u32 %v3762, 7
      %v3764 = vsub.s32 %v3761, %v3763
      %v3765 = vrot.slane %v3664, %v3764
      %v3767 = vunpack.c.l.s4 1983009808
      %v3768 = vunpack.c.0.s8 %v3767
      %v3769 = vlaneseq
      %v3770 = vshrl.u32 %v3769, 7
      %v3771 = vsub.s32 %v3768, %v3770
      %v3772 = vrot.slane %v3758, %v3771
      %v3773 = vcombine.low %v3750, %v3765
      %v3774 = vcombine.high %v3750, %v3765
      %v3776 = vunpack.c.l.s4 1934713408
      %v3777 = vunpack.c.0.s8 %v3776
      %v3778 = vlaneseq
      %v3779 = vshrl.u32 %v3778, 7
      %v3780 = vsub.s32 %v3777, %v3779
      %v3781 = vrot.slane %v3773, %v3780
      %v3783 = vunpack.c.l.s4 1934713408
      %v3784 = vunpack.c.0.s8 %v3783
      %v3785 = vlaneseq
      %v3786 = vshrl.u32 %v3785, 7
      %v3787 = vsub.s32 %v3784, %v3786
      %v3788 = vrot.slane %v3774, %v3787
      %v3789 = vcombine.low %v3757, %v3772
      %v3790 = vcombine.high %v3757, %v3772
      %v3792 = vunpack.c.l.s4 1934713408
      %v3793 = vunpack.c.0.s8 %v3792
      %v3794 = vlaneseq
      %v3795 = vshrl.u32 %v3794, 7
      %v3796 = vsub.s32 %v3793, %v3795
      %v3797 = vrot.slane %v3789, %v3796
      %v3799 = vunpack.c.l.s4 1934713408
      %v3800 = vunpack.c.0.s8 %v3799
      %v3801 = vlaneseq
      %v3802 = vshrl.u32 %v3801, 7
      %v3803 = vsub.s32 %v3800, %v3802
      %v3804 = vrot.slane %v3790, %v3803
      %v3805 = vcombine.high %v3781, 0.0
      %v3806 = vcombine.high %v3788, 0.0
      %v3807 = vcombine.high %v3797, 0.0
      %v3808 = vcombine.high %v3804, 0.0
      %3810 = vrot.lane.b32.xlu0 %v3738, 16
      %v3811 = vpop.permute.xlu0 %3810
      %3814 = vrot.lane.b32.xlu0 %v3721, 32
      %v3815 = vpop.permute.xlu0 %3814
      %3818 = vrot.lane.b32.xlu0 %v3739, 48
      %v3819 = vpop.permute.xlu0 %3818
      %3822 = vrot.lane.b32.xlu0 %v3730, 64
      %v3823 = vpop.permute.xlu0 %3822
      %3826 = vrot.lane.b32.xlu0 %v3740, 80
      %v3827 = vpop.permute.xlu0 %3826
      %3830 = vrot.lane.b32.xlu0 %v3737, 96
      %v3831 = vpop.permute.xlu0 %3830
      %3834 = vrot.lane.b32.xlu0 %v3741, 112
      %v3835 = vpop.permute.xlu0 %3834
      %3838 = vrot.lane.b32.xlu0 %v3805, 16
      %v3839 = vpop.permute.xlu0 %3838
      %3842 = vrot.lane.b32.xlu0 %v3788, 32
      %v3843 = vpop.permute.xlu0 %3842
      %3846 = vrot.lane.b32.xlu0 %v3806, 48
      %v3847 = vpop.permute.xlu0 %3846
      %3850 = vrot.lane.b32.xlu0 %v3797, 64
      %v3851 = vpop.permute.xlu0 %3850
      %3854 = vrot.lane.b32.xlu0 %v3807, 80
      %v3855 = vpop.permute.xlu0 %3854
      %3858 = vrot.lane.b32.xlu0 %v3804, 96
      %v3859 = vpop.permute.xlu0 %3858
      %3862 = vrot.lane.b32.xlu0 %v3808, 112
      %v3863 = vpop.permute.xlu0 %3862
      %v3865 = vsel %vm454, %v3714, %v3811
      %v3866 = vsel %vm456, %v3865, %v3815
      %v3867 = vsel %vm458, %v3866, %v3819
      %v3868 = vsel %vm460, %v3867, %v3823
      %v3869 = vsel %vm462, %v3868, %v3827
      %v3870 = vsel %vm464, %v3869, %v3831
      %v3871 = vsel %vm466, %v3870, %v3835
      %v3872 = vsel %vm454, %v3781, %v3839
      %v3873 = vsel %vm456, %v3872, %v3843
      %v3874 = vsel %vm458, %v3873, %v3847
      %v3875 = vsel %vm460, %v3874, %v3851
      %v3876 = vsel %vm462, %v3875, %v3855
      %v3877 = vsel %vm464, %v3876, %v3859
      %v3878 = vsel %vm466, %v3877, %v3863
      %vm3881 = vcmask 1040384
      %v3882 = vrot.slane %v2490, 7
      %v3883 = vrot.slane %v2496, 7
      %v3884 = vsel %vm3881, %v3882, %v3883
      %v3885 = vrot.slane %v2492, 7
      %v3886 = vrot.slane %v2498, 7
      %v3887 = vsel %vm3881, %v3885, %v3886
      %v3890 = vmul.f32 %v3871, %v3884
      %v3891 = vmul.f32 %v3878, %v3887
      %v3892 = vadd.f32 %v3655, %v3890
      %v3893 = vadd.f32 %v3656, %v3891
      %v3894 = vrot.slane %v253, 2
      %v3895 = vrot.slane %v254, 2
      %v3896 = vsel %vm1642, %v3894, %v3895
      %v3897 = vrot.slane %v255, 2
      %v3898 = vsel %vm1642, %v3895, %v3897
      %v3899 = vrot.slane %v256, 2
      %v3900 = vrot.slane %v257, 2
      %v3901 = vsel %vm1642, %v3899, %v3900
      %v3902 = vrot.slane %v258, 2
      %v3903 = vsel %vm1642, %v3900, %v3902
      %v3904 = vrot.slane %v259, 2
      %v3905 = vrot.slane %v260, 2
      %v3906 = vsel %vm1642, %v3904, %v3905
      %v3907 = vrot.slane %v261, 2
      %v3908 = vsel %vm1642, %v3905, %v3907
      %v3915 = vcombine.low %v3896, %v3906
      %v3916 = vcombine.high %v3896, %v3906
      %v3918 = vunpack.c.l.s4 1983009808
      %v3919 = vunpack.c.0.s8 %v3918
      %v3920 = vlaneseq
      %v3921 = vshrl.u32 %v3920, 7
      %v3922 = vsub.s32 %v3919, %v3921
      %v3923 = vrot.slane %v3915, %v3922
      %v3925 = vunpack.c.l.s4 1983009808
      %v3926 = vunpack.c.0.s8 %v3925
      %v3927 = vlaneseq
      %v3928 = vshrl.u32 %v3927, 7
      %v3929 = vsub.s32 %v3926, %v3928
      %v3930 = vrot.slane %v3916, %v3929
      %v3931 = vcombine.high %v3901, 0.0
      %v3933 = vunpack.c.l.s4 1983009808
      %v3934 = vunpack.c.0.s8 %v3933
      %v3935 = vlaneseq
      %v3936 = vshrl.u32 %v3935, 7
      %v3937 = vsub.s32 %v3934, %v3936
      %v3938 = vrot.slane %v3901, %v3937
      %v3940 = vunpack.c.l.s4 1983009808
      %v3941 = vunpack.c.0.s8 %v3940
      %v3942 = vlaneseq
      %v3943 = vshrl.u32 %v3942, 7
      %v3944 = vsub.s32 %v3941, %v3943
      %v3945 = vrot.slane %v3931, %v3944
      %v3946 = vcombine.low %v3923, %v3938
      %v3947 = vcombine.high %v3923, %v3938
      %v3949 = vunpack.c.l.s4 1934713408
      %v3950 = vunpack.c.0.s8 %v3949
      %v3951 = vlaneseq
      %v3952 = vshrl.u32 %v3951, 7
      %v3953 = vsub.s32 %v3950, %v3952
      %v3954 = vrot.slane %v3946, %v3953
      %v3956 = vunpack.c.l.s4 1934713408
      %v3957 = vunpack.c.0.s8 %v3956
      %v3958 = vlaneseq
      %v3959 = vshrl.u32 %v3958, 7
      %v3960 = vsub.s32 %v3957, %v3959
      %v3961 = vrot.slane %v3947, %v3960
      %v3962 = vcombine.low %v3930, %v3945
      %v3963 = vcombine.high %v3930, %v3945
      %v3965 = vunpack.c.l.s4 1934713408
      %v3966 = vunpack.c.0.s8 %v3965
      %v3967 = vlaneseq
      %v3968 = vshrl.u32 %v3967, 7
      %v3969 = vsub.s32 %v3966, %v3968
      %v3970 = vrot.slane %v3962, %v3969
      %v3972 = vunpack.c.l.s4 1934713408
      %v3973 = vunpack.c.0.s8 %v3972
      %v3974 = vlaneseq
      %v3975 = vshrl.u32 %v3974, 7
      %v3976 = vsub.s32 %v3973, %v3975
      %v3977 = vrot.slane %v3963, %v3976
      %v3978 = vcombine.high %v3954, 0.0
      %v3979 = vcombine.high %v3961, 0.0
      %v3980 = vcombine.high %v3970, 0.0
      %v3981 = vcombine.high %v3977, 0.0
      %v3982 = vcombine.low %v3898, %v3908
      %v3983 = vcombine.high %v3898, %v3908
      %v3985 = vunpack.c.l.s4 1983009808
      %v3986 = vunpack.c.0.s8 %v3985
      %v3987 = vlaneseq
      %v3988 = vshrl.u32 %v3987, 7
      %v3989 = vsub.s32 %v3986, %v3988
      %v3990 = vrot.slane %v3982, %v3989
      %v3992 = vunpack.c.l.s4 1983009808
      %v3993 = vunpack.c.0.s8 %v3992
      %v3994 = vlaneseq
      %v3995 = vshrl.u32 %v3994, 7
      %v3996 = vsub.s32 %v3993, %v3995
      %v3997 = vrot.slane %v3983, %v3996
      %v3998 = vcombine.high %v3903, 0.0
      %v4000 = vunpack.c.l.s4 1983009808
      %v4001 = vunpack.c.0.s8 %v4000
      %v4002 = vlaneseq
      %v4003 = vshrl.u32 %v4002, 7
      %v4004 = vsub.s32 %v4001, %v4003
      %v4005 = vrot.slane %v3903, %v4004
      %v4007 = vunpack.c.l.s4 1983009808
      %v4008 = vunpack.c.0.s8 %v4007
      %v4009 = vlaneseq
      %v4010 = vshrl.u32 %v4009, 7
      %v4011 = vsub.s32 %v4008, %v4010
      %v4012 = vrot.slane %v3998, %v4011
      %v4013 = vcombine.low %v3990, %v4005
      %v4014 = vcombine.high %v3990, %v4005
      %v4016 = vunpack.c.l.s4 1934713408
      %v4017 = vunpack.c.0.s8 %v4016
      %v4018 = vlaneseq
      %v4019 = vshrl.u32 %v4018, 7
      %v4020 = vsub.s32 %v4017, %v4019
      %v4021 = vrot.slane %v4013, %v4020
      %v4023 = vunpack.c.l.s4 1934713408
      %v4024 = vunpack.c.0.s8 %v4023
      %v4025 = vlaneseq
      %v4026 = vshrl.u32 %v4025, 7
      %v4027 = vsub.s32 %v4024, %v4026
      %v4028 = vrot.slane %v4014, %v4027
      %v4029 = vcombine.low %v3997, %v4012
      %v4030 = vcombine.high %v3997, %v4012
      %v4032 = vunpack.c.l.s4 1934713408
      %v4033 = vunpack.c.0.s8 %v4032
      %v4034 = vlaneseq
      %v4035 = vshrl.u32 %v4034, 7
      %v4036 = vsub.s32 %v4033, %v4035
      %v4037 = vrot.slane %v4029, %v4036
      %v4039 = vunpack.c.l.s4 1934713408
      %v4040 = vunpack.c.0.s8 %v4039
      %v4041 = vlaneseq
      %v4042 = vshrl.u32 %v4041, 7
      %v4043 = vsub.s32 %v4040, %v4042
      %v4044 = vrot.slane %v4030, %v4043
      %v4045 = vcombine.high %v4021, 0.0
      %v4046 = vcombine.high %v4028, 0.0
      %v4047 = vcombine.high %v4037, 0.0
      %v4048 = vcombine.high %v4044, 0.0
      %4050 = vrot.lane.b32.xlu0 %v3978, 16
      %v4051 = vpop.permute.xlu0 %4050
      %4054 = vrot.lane.b32.xlu0 %v3961, 32
      %v4055 = vpop.permute.xlu0 %4054
      %4058 = vrot.lane.b32.xlu0 %v3979, 48
      %v4059 = vpop.permute.xlu0 %4058
      %4062 = vrot.lane.b32.xlu0 %v3970, 64
      %v4063 = vpop.permute.xlu0 %4062
      %4066 = vrot.lane.b32.xlu0 %v3980, 80
      %v4067 = vpop.permute.xlu0 %4066
      %4070 = vrot.lane.b32.xlu0 %v3977, 96
      %v4071 = vpop.permute.xlu0 %4070
      %4074 = vrot.lane.b32.xlu0 %v3981, 112
      %v4075 = vpop.permute.xlu0 %4074
      %4078 = vrot.lane.b32.xlu0 %v4045, 16
      %v4079 = vpop.permute.xlu0 %4078
      %4082 = vrot.lane.b32.xlu0 %v4028, 32
      %v4083 = vpop.permute.xlu0 %4082
      %4086 = vrot.lane.b32.xlu0 %v4046, 48
      %v4087 = vpop.permute.xlu0 %4086
      %4090 = vrot.lane.b32.xlu0 %v4037, 64
      %v4091 = vpop.permute.xlu0 %4090
      %4094 = vrot.lane.b32.xlu0 %v4047, 80
      %v4095 = vpop.permute.xlu0 %4094
      %4098 = vrot.lane.b32.xlu0 %v4044, 96
      %v4099 = vpop.permute.xlu0 %4098
      %4102 = vrot.lane.b32.xlu0 %v4048, 112
      %v4103 = vpop.permute.xlu0 %4102
      %v4105 = vsel %vm454, %v3954, %v4051
      %v4106 = vsel %vm456, %v4105, %v4055
      %v4107 = vsel %vm458, %v4106, %v4059
      %v4108 = vsel %vm460, %v4107, %v4063
      %v4109 = vsel %vm462, %v4108, %v4067
      %v4110 = vsel %vm464, %v4109, %v4071
      %v4111 = vsel %vm466, %v4110, %v4075
      %v4112 = vsel %vm454, %v4021, %v4079
      %v4113 = vsel %vm456, %v4112, %v4083
      %v4114 = vsel %vm458, %v4113, %v4087
      %v4115 = vsel %vm460, %v4114, %v4091
      %v4116 = vsel %vm462, %v4115, %v4095
      %v4117 = vsel %vm464, %v4116, %v4099
      %v4118 = vsel %vm466, %v4117, %v4103
      %v4119 = vrot.slane %v2496, 2
      %v4120 = vrot.slane %v2498, 2
      %v4123 = vmul.f32 %v4111, %v4119
      %v4124 = vmul.f32 %v4118, %v4120
      %v4125 = vadd.f32 %v3892, %v4123
      %v4126 = vadd.f32 %v3893, %v4124
      %4127 = vrot.lane.b32.xlu0 %v3896, 127
      %v4128 = vpop.permute.xlu0 %4127
      %4129 = vrot.lane.b32.xlu0 %v3898, 127
      %v4130 = vpop.permute.xlu0 %4129
      %4131 = vrot.lane.b32.xlu0 %v3901, 127
      %v4132 = vpop.permute.xlu0 %4131
      %4133 = vrot.lane.b32.xlu0 %v3903, 127
      %v4134 = vpop.permute.xlu0 %4133
      %4135 = vrot.lane.b32.xlu0 %v3906, 127
      %v4136 = vpop.permute.xlu0 %4135
      %4137 = vrot.lane.b32.xlu0 %v3908, 127
      %v4138 = vpop.permute.xlu0 %4137
      %v4145 = vcombine.low %v4128, %v4136
      %v4146 = vcombine.high %v4128, %v4136
      %v4148 = vunpack.c.l.s4 1983009808
      %v4149 = vunpack.c.0.s8 %v4148
      %v4150 = vlaneseq
      %v4151 = vshrl.u32 %v4150, 7
      %v4152 = vsub.s32 %v4149, %v4151
      %v4153 = vrot.slane %v4145, %v4152
      %v4155 = vunpack.c.l.s4 1983009808
      %v4156 = vunpack.c.0.s8 %v4155
      %v4157 = vlaneseq
      %v4158 = vshrl.u32 %v4157, 7
      %v4159 = vsub.s32 %v4156, %v4158
      %v4160 = vrot.slane %v4146, %v4159
      %v4161 = vcombine.high %v4132, 0.0
      %v4163 = vunpack.c.l.s4 1983009808
      %v4164 = vunpack.c.0.s8 %v4163
      %v4165 = vlaneseq
      %v4166 = vshrl.u32 %v4165, 7
      %v4167 = vsub.s32 %v4164, %v4166
      %v4168 = vrot.slane %v4132, %v4167
      %v4170 = vunpack.c.l.s4 1983009808
      %v4171 = vunpack.c.0.s8 %v4170
      %v4172 = vlaneseq
      %v4173 = vshrl.u32 %v4172, 7
      %v4174 = vsub.s32 %v4171, %v4173
      %v4175 = vrot.slane %v4161, %v4174
      %v4176 = vcombine.low %v4153, %v4168
      %v4177 = vcombine.high %v4153, %v4168
      %v4179 = vunpack.c.l.s4 1934713408
      %v4180 = vunpack.c.0.s8 %v4179
      %v4181 = vlaneseq
      %v4182 = vshrl.u32 %v4181, 7
      %v4183 = vsub.s32 %v4180, %v4182
      %v4184 = vrot.slane %v4176, %v4183
      %v4186 = vunpack.c.l.s4 1934713408
      %v4187 = vunpack.c.0.s8 %v4186
      %v4188 = vlaneseq
      %v4189 = vshrl.u32 %v4188, 7
      %v4190 = vsub.s32 %v4187, %v4189
      %v4191 = vrot.slane %v4177, %v4190
      %v4192 = vcombine.low %v4160, %v4175
      %v4193 = vcombine.high %v4160, %v4175
      %v4195 = vunpack.c.l.s4 1934713408
      %v4196 = vunpack.c.0.s8 %v4195
      %v4197 = vlaneseq
      %v4198 = vshrl.u32 %v4197, 7
      %v4199 = vsub.s32 %v4196, %v4198
      %v4200 = vrot.slane %v4192, %v4199
      %v4202 = vunpack.c.l.s4 1934713408
      %v4203 = vunpack.c.0.s8 %v4202
      %v4204 = vlaneseq
      %v4205 = vshrl.u32 %v4204, 7
      %v4206 = vsub.s32 %v4203, %v4205
      %v4207 = vrot.slane %v4193, %v4206
      %v4208 = vcombine.high %v4184, 0.0
      %v4209 = vcombine.high %v4191, 0.0
      %v4210 = vcombine.high %v4200, 0.0
      %v4211 = vcombine.high %v4207, 0.0
      %v4212 = vcombine.low %v4130, %v4138
      %v4213 = vcombine.high %v4130, %v4138
      %v4215 = vunpack.c.l.s4 1983009808
      %v4216 = vunpack.c.0.s8 %v4215
      %v4217 = vlaneseq
      %v4218 = vshrl.u32 %v4217, 7
      %v4219 = vsub.s32 %v4216, %v4218
      %v4220 = vrot.slane %v4212, %v4219
      %v4222 = vunpack.c.l.s4 1983009808
      %v4223 = vunpack.c.0.s8 %v4222
      %v4224 = vlaneseq
      %v4225 = vshrl.u32 %v4224, 7
      %v4226 = vsub.s32 %v4223, %v4225
      %v4227 = vrot.slane %v4213, %v4226
      %v4228 = vcombine.high %v4134, 0.0
      %v4230 = vunpack.c.l.s4 1983009808
      %v4231 = vunpack.c.0.s8 %v4230
      %v4232 = vlaneseq
      %v4233 = vshrl.u32 %v4232, 7
      %v4234 = vsub.s32 %v4231, %v4233
      %v4235 = vrot.slane %v4134, %v4234
      %v4237 = vunpack.c.l.s4 1983009808
      %v4238 = vunpack.c.0.s8 %v4237
      %v4239 = vlaneseq
      %v4240 = vshrl.u32 %v4239, 7
      %v4241 = vsub.s32 %v4238, %v4240
      %v4242 = vrot.slane %v4228, %v4241
      %v4243 = vcombine.low %v4220, %v4235
      %v4244 = vcombine.high %v4220, %v4235
      %v4246 = vunpack.c.l.s4 1934713408
      %v4247 = vunpack.c.0.s8 %v4246
      %v4248 = vlaneseq
      %v4249 = vshrl.u32 %v4248, 7
      %v4250 = vsub.s32 %v4247, %v4249
      %v4251 = vrot.slane %v4243, %v4250
      %v4253 = vunpack.c.l.s4 1934713408
      %v4254 = vunpack.c.0.s8 %v4253
      %v4255 = vlaneseq
      %v4256 = vshrl.u32 %v4255, 7
      %v4257 = vsub.s32 %v4254, %v4256
      %v4258 = vrot.slane %v4244, %v4257
      %v4259 = vcombine.low %v4227, %v4242
      %v4260 = vcombine.high %v4227, %v4242
      %v4262 = vunpack.c.l.s4 1934713408
      %v4263 = vunpack.c.0.s8 %v4262
      %v4264 = vlaneseq
      %v4265 = vshrl.u32 %v4264, 7
      %v4266 = vsub.s32 %v4263, %v4265
      %v4267 = vrot.slane %v4259, %v4266
      %v4269 = vunpack.c.l.s4 1934713408
      %v4270 = vunpack.c.0.s8 %v4269
      %v4271 = vlaneseq
      %v4272 = vshrl.u32 %v4271, 7
      %v4273 = vsub.s32 %v4270, %v4272
      %v4274 = vrot.slane %v4260, %v4273
      %v4275 = vcombine.high %v4251, 0.0
      %v4276 = vcombine.high %v4258, 0.0
      %v4277 = vcombine.high %v4267, 0.0
      %v4278 = vcombine.high %v4274, 0.0
      %4280 = vrot.lane.b32.xlu0 %v4208, 16
      %v4281 = vpop.permute.xlu0 %4280
      %4284 = vrot.lane.b32.xlu0 %v4191, 32
      %v4285 = vpop.permute.xlu0 %4284
      %4288 = vrot.lane.b32.xlu0 %v4209, 48
      %v4289 = vpop.permute.xlu0 %4288
      %4292 = vrot.lane.b32.xlu0 %v4200, 64
      %v4293 = vpop.permute.xlu0 %4292
      %4296 = vrot.lane.b32.xlu0 %v4210, 80
      %v4297 = vpop.permute.xlu0 %4296
      %4300 = vrot.lane.b32.xlu0 %v4207, 96
      %v4301 = vpop.permute.xlu0 %4300
      %4304 = vrot.lane.b32.xlu0 %v4211, 112
      %v4305 = vpop.permute.xlu0 %4304
      %4308 = vrot.lane.b32.xlu0 %v4275, 16
      %v4309 = vpop.permute.xlu0 %4308
      %4312 = vrot.lane.b32.xlu0 %v4258, 32
      %v4313 = vpop.permute.xlu0 %4312
      %4316 = vrot.lane.b32.xlu0 %v4276, 48
      %v4317 = vpop.permute.xlu0 %4316
      %4320 = vrot.lane.b32.xlu0 %v4267, 64
      %v4321 = vpop.permute.xlu0 %4320
      %4324 = vrot.lane.b32.xlu0 %v4277, 80
      %v4325 = vpop.permute.xlu0 %4324
      %4328 = vrot.lane.b32.xlu0 %v4274, 96
      %v4329 = vpop.permute.xlu0 %4328
      %4332 = vrot.lane.b32.xlu0 %v4278, 112
      %v4333 = vpop.permute.xlu0 %4332
      %v4335 = vsel %vm454, %v4184, %v4281
      %v4336 = vsel %vm456, %v4335, %v4285
      %v4337 = vsel %vm458, %v4336, %v4289
      %v4338 = vsel %vm460, %v4337, %v4293
      %v4339 = vsel %vm462, %v4338, %v4297
      %v4340 = vsel %vm464, %v4339, %v4301
      %v4341 = vsel %vm466, %v4340, %v4305
      %v4342 = vsel %vm454, %v4251, %v4309
      %v4343 = vsel %vm456, %v4342, %v4313
      %v4344 = vsel %vm458, %v4343, %v4317
      %v4345 = vsel %vm460, %v4344, %v4321
      %v4346 = vsel %vm462, %v4345, %v4325
      %v4347 = vsel %vm464, %v4346, %v4329
      %v4348 = vsel %vm466, %v4347, %v4333
      %v4349 = vrot.slane %v2496, 5
      %v4350 = vrot.slane %v2498, 5
      %v4353 = vmul.f32 %v4341, %v4349
      %v4354 = vmul.f32 %v4348, %v4350
      %v4355 = vadd.f32 %v4125, %v4353
      %v4356 = vadd.f32 %v4126, %v4354
      %4357 = vrot.lane.b32.xlu0 %v3896, 126
      %v4358 = vpop.permute.xlu0 %4357
      %4359 = vrot.lane.b32.xlu0 %v3898, 126
      %v4360 = vpop.permute.xlu0 %4359
      %4361 = vrot.lane.b32.xlu0 %v3901, 126
      %v4362 = vpop.permute.xlu0 %4361
      %4363 = vrot.lane.b32.xlu0 %v3903, 126
      %v4364 = vpop.permute.xlu0 %4363
      %4365 = vrot.lane.b32.xlu0 %v3906, 126
      %v4366 = vpop.permute.xlu0 %4365
      %4367 = vrot.lane.b32.xlu0 %v3908, 126
      %v4368 = vpop.permute.xlu0 %4367
      %v4375 = vcombine.low %v4358, %v4366
      %v4376 = vcombine.high %v4358, %v4366
      %v4378 = vunpack.c.l.s4 1983009808
      %v4379 = vunpack.c.0.s8 %v4378
      %v4380 = vlaneseq
      %v4381 = vshrl.u32 %v4380, 7
      %v4382 = vsub.s32 %v4379, %v4381
      %v4383 = vrot.slane %v4375, %v4382
      %v4385 = vunpack.c.l.s4 1983009808
      %v4386 = vunpack.c.0.s8 %v4385
      %v4387 = vlaneseq
      %v4388 = vshrl.u32 %v4387, 7
      %v4389 = vsub.s32 %v4386, %v4388
      %v4390 = vrot.slane %v4376, %v4389
      %v4391 = vcombine.high %v4362, 0.0
      %v4393 = vunpack.c.l.s4 1983009808
      %v4394 = vunpack.c.0.s8 %v4393
      %v4395 = vlaneseq
      %v4396 = vshrl.u32 %v4395, 7
      %v4397 = vsub.s32 %v4394, %v4396
      %v4398 = vrot.slane %v4362, %v4397
      %v4400 = vunpack.c.l.s4 1983009808
      %v4401 = vunpack.c.0.s8 %v4400
      %v4402 = vlaneseq
      %v4403 = vshrl.u32 %v4402, 7
      %v4404 = vsub.s32 %v4401, %v4403
      %v4405 = vrot.slane %v4391, %v4404
      %v4406 = vcombine.low %v4383, %v4398
      %v4407 = vcombine.high %v4383, %v4398
      %v4409 = vunpack.c.l.s4 1934713408
      %v4410 = vunpack.c.0.s8 %v4409
      %v4411 = vlaneseq
      %v4412 = vshrl.u32 %v4411, 7
      %v4413 = vsub.s32 %v4410, %v4412
      %v4414 = vrot.slane %v4406, %v4413
      %v4416 = vunpack.c.l.s4 1934713408
      %v4417 = vunpack.c.0.s8 %v4416
      %v4418 = vlaneseq
      %v4419 = vshrl.u32 %v4418, 7
      %v4420 = vsub.s32 %v4417, %v4419
      %v4421 = vrot.slane %v4407, %v4420
      %v4422 = vcombine.low %v4390, %v4405
      %v4423 = vcombine.high %v4390, %v4405
      %v4425 = vunpack.c.l.s4 1934713408
      %v4426 = vunpack.c.0.s8 %v4425
      %v4427 = vlaneseq
      %v4428 = vshrl.u32 %v4427, 7
      %v4429 = vsub.s32 %v4426, %v4428
      %v4430 = vrot.slane %v4422, %v4429
      %v4432 = vunpack.c.l.s4 1934713408
      %v4433 = vunpack.c.0.s8 %v4432
      %v4434 = vlaneseq
      %v4435 = vshrl.u32 %v4434, 7
      %v4436 = vsub.s32 %v4433, %v4435
      %v4437 = vrot.slane %v4423, %v4436
      %v4438 = vcombine.high %v4414, 0.0
      %v4439 = vcombine.high %v4421, 0.0
      %v4440 = vcombine.high %v4430, 0.0
      %v4441 = vcombine.high %v4437, 0.0
      %v4442 = vcombine.low %v4360, %v4368
      %v4443 = vcombine.high %v4360, %v4368
      %v4445 = vunpack.c.l.s4 1983009808
      %v4446 = vunpack.c.0.s8 %v4445
      %v4447 = vlaneseq
      %v4448 = vshrl.u32 %v4447, 7
      %v4449 = vsub.s32 %v4446, %v4448
      %v4450 = vrot.slane %v4442, %v4449
      %v4452 = vunpack.c.l.s4 1983009808
      %v4453 = vunpack.c.0.s8 %v4452
      %v4454 = vlaneseq
      %v4455 = vshrl.u32 %v4454, 7
      %v4456 = vsub.s32 %v4453, %v4455
      %v4457 = vrot.slane %v4443, %v4456
      %v4458 = vcombine.high %v4364, 0.0
      %v4460 = vunpack.c.l.s4 1983009808
      %v4461 = vunpack.c.0.s8 %v4460
      %v4462 = vlaneseq
      %v4463 = vshrl.u32 %v4462, 7
      %v4464 = vsub.s32 %v4461, %v4463
      %v4465 = vrot.slane %v4364, %v4464
      %v4467 = vunpack.c.l.s4 1983009808
      %v4468 = vunpack.c.0.s8 %v4467
      %v4469 = vlaneseq
      %v4470 = vshrl.u32 %v4469, 7
      %v4471 = vsub.s32 %v4468, %v4470
      %v4472 = vrot.slane %v4458, %v4471
      %v4473 = vcombine.low %v4450, %v4465
      %v4474 = vcombine.high %v4450, %v4465
      %v4476 = vunpack.c.l.s4 1934713408
      %v4477 = vunpack.c.0.s8 %v4476
      %v4478 = vlaneseq
      %v4479 = vshrl.u32 %v4478, 7
      %v4480 = vsub.s32 %v4477, %v4479
      %v4481 = vrot.slane %v4473, %v4480
      %v4483 = vunpack.c.l.s4 1934713408
      %v4484 = vunpack.c.0.s8 %v4483
      %v4485 = vlaneseq
      %v4486 = vshrl.u32 %v4485, 7
      %v4487 = vsub.s32 %v4484, %v4486
      %v4488 = vrot.slane %v4474, %v4487
      %v4489 = vcombine.low %v4457, %v4472
      %v4490 = vcombine.high %v4457, %v4472
      %v4492 = vunpack.c.l.s4 1934713408
      %v4493 = vunpack.c.0.s8 %v4492
      %v4494 = vlaneseq
      %v4495 = vshrl.u32 %v4494, 7
      %v4496 = vsub.s32 %v4493, %v4495
      %v4497 = vrot.slane %v4489, %v4496
      %v4499 = vunpack.c.l.s4 1934713408
      %v4500 = vunpack.c.0.s8 %v4499
      %v4501 = vlaneseq
      %v4502 = vshrl.u32 %v4501, 7
      %v4503 = vsub.s32 %v4500, %v4502
      %v4504 = vrot.slane %v4490, %v4503
      %v4505 = vcombine.high %v4481, 0.0
      %v4506 = vcombine.high %v4488, 0.0
      %v4507 = vcombine.high %v4497, 0.0
      %v4508 = vcombine.high %v4504, 0.0
      %4510 = vrot.lane.b32.xlu0 %v4438, 16
      %v4511 = vpop.permute.xlu0 %4510
      %4514 = vrot.lane.b32.xlu0 %v4421, 32
      %v4515 = vpop.permute.xlu0 %4514
      %4518 = vrot.lane.b32.xlu0 %v4439, 48
      %v4519 = vpop.permute.xlu0 %4518
      %4522 = vrot.lane.b32.xlu0 %v4430, 64
      %v4523 = vpop.permute.xlu0 %4522
      %4526 = vrot.lane.b32.xlu0 %v4440, 80
      %v4527 = vpop.permute.xlu0 %4526
      %4530 = vrot.lane.b32.xlu0 %v4437, 96
      %v4531 = vpop.permute.xlu0 %4530
      %4534 = vrot.lane.b32.xlu0 %v4441, 112
      %v4535 = vpop.permute.xlu0 %4534
      %4538 = vrot.lane.b32.xlu0 %v4505, 16
      %v4539 = vpop.permute.xlu0 %4538
      %4542 = vrot.lane.b32.xlu0 %v4488, 32
      %v4543 = vpop.permute.xlu0 %4542
      %4546 = vrot.lane.b32.xlu0 %v4506, 48
      %v4547 = vpop.permute.xlu0 %4546
      %4550 = vrot.lane.b32.xlu0 %v4497, 64
      %v4551 = vpop.permute.xlu0 %4550
      %4554 = vrot.lane.b32.xlu0 %v4507, 80
      %v4555 = vpop.permute.xlu0 %4554
      %4558 = vrot.lane.b32.xlu0 %v4504, 96
      %v4559 = vpop.permute.xlu0 %4558
      %4562 = vrot.lane.b32.xlu0 %v4508, 112
      %v4563 = vpop.permute.xlu0 %4562
      %v4565 = vsel %vm454, %v4414, %v4511
      %v4566 = vsel %vm456, %v4565, %v4515
      %v4567 = vsel %vm458, %v4566, %v4519
      %v4568 = vsel %vm460, %v4567, %v4523
      %v4569 = vsel %vm462, %v4568, %v4527
      %v4570 = vsel %vm464, %v4569, %v4531
      %v4571 = vsel %vm466, %v4570, %v4535
      %v4572 = vsel %vm454, %v4481, %v4539
      %v4573 = vsel %vm456, %v4572, %v4543
      %v4574 = vsel %vm458, %v4573, %v4547
      %v4575 = vsel %vm460, %v4574, %v4551
      %v4576 = vsel %vm462, %v4575, %v4555
      %v4577 = vsel %vm464, %v4576, %v4559
      %v4578 = vsel %vm466, %v4577, %v4563
      %v4579 = vmul.f32 %v4571, %v2502
      %v4580 = vmul.f32 %v4578, %v2504
      %v4581 = vadd.f32 %v4355, %v4579
      %v4582 = vadd.f32 %v4356, %v4580
      %v4585 = vcombine.low %v4581, %v4582
      %4587 = vst [vmem:[%s239] sm:$0x77] %v4585
      %s4588 = smul.u32 2, %s20
      %p4589 = scmp.lt.s32.totalorder %s19, 1
      %s4590 = scalar_select %p4589, %s19, 1
      %p4591 = scmp.lt.s32.totalorder %s4588, 1
      %s4592 = scalar_select %p4591, %s4588, 1
      %s4593 = smul.addr %s4590, 2
      %s4594 = sadd.s32 %s4592, %s4593
      %s4595 = smul.addr %s4594, 4
      %s4596 = scalar_lea.vmem %s4, %s4595
      // Predicated region
      $region37: #{tpu_custom_call.1} parent=35 // pred_check
        %p4597 = pneg %p141
      $region38: #{tpu_custom_call.1} parent=35 // pred_check_branch
        %4599 = sbr.rel (%p4597) target = $region40
      $region39: #{tpu_custom_call.1} parent=35 // pred_region
        %s4600 = smul.u32 2, %s20
      $region40: #{tpu_custom_call.1} parent=35 // pred_fallthru
        _
    $region36: #{tpu_custom_call.1} parent=5 // pred_fallthru
      _
    %p4601 = scmp.le.s32.totalorder 2, %s10
    // Predicated region
    $region41: #{tpu_custom_call.1} parent=5 // pred_check
      %p4602 = pneg %p4601
    $region42: #{tpu_custom_call.1} parent=5 // pred_check_branch
      %4604 = sbr.rel (%p4602) target = $region44
    $region43: #{tpu_custom_call.1} parent=5 // pred_region
      %s4605 = ssub.s32 %s10, 2
      // Predicated region
      $region45: #{tpu_custom_call.1} parent=43 // pred_check
        %p4606 = pneg %p147
      $region46: #{tpu_custom_call.1} parent=43 // pred_check_branch
        %4608 = sbr.rel (%p4606) target = $region48
      $region47: #{tpu_custom_call.1} parent=43 // pred_region
        %s4609 = smul.u32 2, %s22
        %p4610 = scmp.lt.s32.totalorder %s21, 1
        %s4611 = scalar_select %p4610, %s21, 1
        %p4612 = scmp.lt.s32.totalorder %s4609, 1
        %s4613 = scalar_select %p4612, %s4609, 1
        %s4614 = smul.addr %s4611, 2
        %s4615 = sadd.s32 %s4613, %s4614
        %s4616 = smul.addr %s4615, 4
        %s4617 = scalar_lea.vmem %s4, %s4616
      $region48: #{tpu_custom_call.1} parent=43 // pred_fallthru
        _
    $region44: #{tpu_custom_call.1} parent=5 // pred_fallthru
      _
  $region6: #{tpu_custom_call.1} parent=0 // loop_footer
    %s14 = sadd.s32 1, %s10
  $region7: #{tpu_custom_call.1} parent=0 // loop_footer_branch
    %9 = sbr.rel target = $region3
  $region8: #{tpu_custom_call.1} parent=0 // loop_exit
    _

</llo_original>
